<compile_context>
chip_gen: v7x
topology: tpu7x:2x2x1
jax: 0.10.0
libtpu: 0.0.40
codegen_flags: <defaults>
</compile_context>

<pallas_src>
import functools

import jax
import jax.numpy as jnp
from jax.experimental import pallas as pl
from jax.experimental.pallas import tpu as pltpu

# bf16 MXU operands; accumulation / bias / ReLU / residual add stay f32.
COMPUTE_DTYPE = jnp.bfloat16
# Well above the 16/32 MiB scoped defaults, with headroom under v7x's 64 MiB.
VMEM_LIMIT_BYTES = 48 * 1024 * 1024


def _round_up(x, m):
    return (x + m - 1) // m * m


# ---------------------------------------------------------------------------
# Kernel 1: matmul + bias + ReLU (4x4 stride-2 convs via im2col)
# ---------------------------------------------------------------------------
def _mm_bias_relu_kernel(a_ref, w_ref, b_ref, o_ref):
    # Single-K-block path: no accumulator scratch, no init/finalize overhead.
    acc = jnp.dot(a_ref[...], w_ref[...], preferred_element_type=jnp.float32)
    o_ref[...] = jnp.maximum(acc + b_ref[...], 0.0).astype(o_ref.dtype)


def _mm_bias_relu_acc_kernel(a_ref, w_ref, b_ref, o_ref, acc_ref):
    # K-grid fallback (only used when K > 1024; not hit at these shapes).
    k = pl.program_id(2)

    @pl.when(k == 0)
    def _init():
        acc_ref[...] = jnp.zeros_like(acc_ref)

    acc_ref[...] += jnp.dot(a_ref[...], w_ref[...],
                            preferred_element_type=jnp.float32)

    @pl.when(k == pl.num_programs(2) - 1)
    def _fin():
        o_ref[...] = jnp.maximum(acc_ref[...] + b_ref[...], 0.0).astype(o_ref.dtype)


def _matmul_bias_relu(a, w, bias):
    """relu(a[M,K] @ w[K,N] + bias[N]) with lane-dense (128-multiple) output."""
    M, K = a.shape
    _, N = w.shape

    Np = _round_up(N, 128)                       # lane-dense output columns
    tn = 256 if Np % 256 == 0 else 128           # 256 matches v6e/v7x 2x256^2 MXU
    if M >= 512:
        tm = 256
    else:
        # >=2 M-tiles so the "parallel" axis can shard over v7x's 2 cores;
        # multiple of 8 and (here) dividing M so `a` needs no padding.
        tm = max(8, _round_up(pl.cdiv(M, 2), 8))
    Mp = _round_up(M, tm)

    a = a.astype(COMPUTE_DTYPE)
    w = w.astype(COMPUTE_DTYPE)
    if Mp != M:
        a = jnp.pad(a, ((0, Mp - M), (0, 0)))
    b2 = bias.reshape(1, N).astype(jnp.float32)
    if Np != N:
        w = jnp.pad(w, ((0, 0), (0, Np - N)))
        b2 = jnp.pad(b2, ((0, 0), (0, Np - N)))

    if K <= 1024:
        out = pl.pallas_call(
            _mm_bias_relu_kernel,
            out_shape=jax.ShapeDtypeStruct((Mp, Np), jnp.float32),
            grid=(Mp // tm, Np // tn),
            in_specs=[
                pl.BlockSpec((tm, K), lambda i, j: (i, 0)),
                pl.BlockSpec((K, tn), lambda i, j: (0, j)),   # weights resident
                pl.BlockSpec((1, tn), lambda i, j: (0, j)),
            ],
            out_specs=pl.BlockSpec((tm, tn), lambda i, j: (i, j)),
            compiler_params=pltpu.CompilerParams(
                dimension_semantics=("parallel", "parallel"),
                vmem_limit_bytes=VMEM_LIMIT_BYTES,
            ),
        )(a, w, b2)
    else:
        tk = 512
        Kp = _round_up(K, tk)
        if Kp != K:
            a = jnp.pad(a, ((0, 0), (0, Kp - K)))
            w = jnp.pad(w, ((0, Kp - K), (0, 0)))
        out = pl.pallas_call(
            _mm_bias_relu_acc_kernel,
            out_shape=jax.ShapeDtypeStruct((Mp, Np), jnp.float32),
            grid=(Mp // tm, Np // tn, Kp // tk),
            in_specs=[
                pl.BlockSpec((tm, tk), lambda i, j, k: (i, k)),
                pl.BlockSpec((tk, tn), lambda i, j, k: (k, j)),
                pl.BlockSpec((1, tn), lambda i, j, k: (0, j)),
            ],
            out_specs=pl.BlockSpec((tm, tn), lambda i, j, k: (i, j)),
            scratch_shapes=[pltpu.VMEM((tm, tn), jnp.float32)],
            compiler_params=pltpu.CompilerParams(
                dimension_semantics=("parallel", "parallel", "arbitrary"),
                vmem_limit_bytes=VMEM_LIMIT_BYTES,
            ),
        )(a, w, b2)
    return out[:M, :N]


def _im2col(x_nhwc, kh, kw, stride, pad):
    xp = jnp.pad(x_nhwc, ((0, 0), (pad, pad), (pad, pad), (0, 0)))
    B, Hp, Wp, C = xp.shape
    Ho = (Hp - kh) // stride + 1
    Wo = (Wp - kw) // stride + 1
    cols = []
    for i in range(kh):
        for j in range(kw):
            cols.append(xp[:, i:i + Ho * stride:stride, j:j + Wo * stride:stride, :])
    patches = jnp.concatenate(cols, axis=-1)             # (B, Ho, Wo, kh*kw*C)
    return patches.reshape(B * Ho * Wo, kh * kw * C), Ho, Wo


def _conv2d_strided_relu(x_nhwc, w_oihw, bias, stride, pad):
    # Only used for the two 4x4/stride-2 downsampling convs.
    # TODO(synk): for large images, move this in-kernel (16 stride-2 window
    # dots) to avoid the ~4x im2col HBM amplification; negligible at 16x16.
    B = x_nhwc.shape[0]
    Cout, Cin, kh, kw = w_oihw.shape
    patches, Ho, Wo = _im2col(x_nhwc, kh, kw, stride, pad)
    wk = jnp.transpose(w_oihw, (2, 3, 1, 0)).reshape(kh * kw * Cin, Cout)
    out = _matmul_bias_relu(patches, wk, bias)
    return out.reshape(B, Ho, Wo, Cout)


# ---------------------------------------------------------------------------
# Kernel 2: FUSED conv_3 (3x3+bias) + residual stack + final ReLU.
# Activation stays VMEM-resident across all layers in a zero-padded flat
# layout of (H+3)*(W+2) rows x Cp(=128-padded) channels.
# ---------------------------------------------------------------------------
def _fused_tail_kernel(xp_ref, w3c_ref, b3_ref, wr3_ref, wr1_ref, o_ref, *,
                       Wp, n_rows, num_layers):
    rows_in, Cp = xp_ref.shape
    W = Wp - 2
    xp = xp_ref[...]                                          # f32 (rows_in, Cp)

    # Mask of valid output rows (column index < W) + padding blocks used to
    # rebuild the zero-padded layout between layers without leaving VMEM.
    row_ids = jax.lax.broadcasted_iota(jnp.int32, (n_rows, 1), 0)
    valid = (row_ids % Wp) < W
    top_pad = jnp.zeros((Wp + 1, Cp), jnp.float32)
    bot_pad = jnp.zeros((rows_in - (Wp + 1) - n_rows, Cp), jnp.float32)

    def repad(y):
        # Re-zero junk columns and re-embed at padded-layout offset Wp+1.
        y = jnp.where(valid, y, 0.0)
        return jnp.concatenate([top_pad, y, bot_pad], axis=0)

    def patches_of(x):
        # VMEM-local im2col: one (n_rows, 9*Cp) slab -> single MXU contraction.
        return jnp.concatenate(
            [x[i * Wp + j:i * Wp + j + n_rows, :]
             for i in range(3) for j in range(3)],
            axis=-1).astype(COMPUTE_DTYPE)

    # conv_3: 3x3 same + bias, no activation.
    y = jnp.dot(patches_of(xp), w3c_ref[...], preferred_element_type=jnp.float32)
    xp = repad(y + b3_ref[...])

    # Residual stack: x + conv1x1(relu(conv3x3(relu(x)))), all VMEM-resident.
    for l in range(num_layers):
        h = jnp.maximum(xp, 0.0)
        h3 = jnp.dot(patches_of(h), wr3_ref[l],
                     preferred_element_type=jnp.float32)
        h3 = jnp.maximum(h3, 0.0).astype(COMPUTE_DTYPE)
        y1 = jnp.dot(h3, wr1_ref[l], preferred_element_type=jnp.float32)
        center = xp[Wp + 1:Wp + 1 + n_rows, :]                # residual input (f32)
        xp = repad(center + y1)

    # ResidualStack applies a final ReLU regardless of num_layers.
    o_ref[...] = jnp.maximum(xp[Wp + 1:Wp + 1 + n_rows, :], 0.0).astype(o_ref.dtype)


def _conv3_resstack_fused(x_nhwc, w3_oihw, b3, res_params):
    B, H, W, C = x_nhwc.shape
    Wp = W + 2
    rows_in = (H + 3) * Wp
    n_rows = H * Wp
    Cp = _round_up(C, 128)                                    # lane-dense channels
    Nh = res_params[0][0].shape[0] if res_params else 1
    Nhp = _round_up(Nh, 128)
    L = len(res_params)
    Lw = max(L, 1)

    # One ~1x HBM copy: spatial zero-pad ((1,2),(1,1)), channel-pad to Cp,
    # flatten (H,W) -> rows.
    xp = jnp.pad(x_nhwc.astype(jnp.float32),
                 ((0, 0), (1, 2), (1, 1), (0, Cp - C)))
    xp_flat = xp.reshape(B, rows_in, Cp)

    def pack3x3(w, cout_p):
        cout, cin = w.shape[0], w.shape[1]
        wt = jnp.transpose(w, (2, 3, 1, 0))                   # (3,3,cin,cout)
        wt = jnp.pad(wt, ((0, 0), (0, 0), (0, Cp - cin), (0, cout_p - cout)))
        return wt.reshape(9 * Cp, cout_p).astype(COMPUTE_DTYPE)

    w3c = pack3x3(w3_oihw, Cp)                                # (9*Cp, Cp)
    b3p = jnp.pad(b3, (0, Cp - C)).reshape(1, Cp).astype(jnp.float32)

    if L > 0:
        wr3 = jnp.stack([pack3x3(w3l, Nhp) for (w3l, _) in res_params])
        wr1 = jnp.stack([
            jnp.pad(jnp.transpose(w1l[:, :, 0, 0], (1, 0)),
                    ((0, Nhp - Nh), (0, Cp - C))).astype(COMPUTE_DTYPE)
            for (_, w1l) in res_params])
    else:
        wr3 = jnp.zeros((1, 9 * Cp, Nhp), COMPUTE_DTYPE)
        wr1 = jnp.zeros((1, Nhp, Cp), COMPUTE_DTYPE)

    out = pl.pallas_call(
        functools.partial(_fused_tail_kernel, Wp=Wp, n_rows=n_rows, num_layers=L),
        out_shape=jax.ShapeDtypeStruct((B, n_rows, Cp), jnp.float32),
        grid=(B,),
        in_specs=[
            pl.BlockSpec((None, rows_in, Cp), lambda b: (b, 0, 0)),
            pl.BlockSpec((9 * Cp, Cp), lambda b: (0, 0)),     # resident weights
            pl.BlockSpec((1, Cp), lambda b: (0, 0)),
            pl.BlockSpec((Lw, 9 * Cp, Nhp), lambda b: (0, 0, 0)),
            pl.BlockSpec((Lw, Nhp, Cp), lambda b: (0, 0, 0)),
        ],
        out_specs=pl.BlockSpec((None, n_rows, Cp), lambda b: (b, 0, 0)),
        compiler_params=pltpu.CompilerParams(
            dimension_semantics=("parallel",),
            vmem_limit_bytes=VMEM_LIMIT_BYTES,
        ),
    )(xp_flat, w3c, b3p, wr3, wr1)
    # rows are (h, padded-w); keep first W columns and first C channels.
    return out.reshape(B, H, Wp, Cp)[:, :, :W, :C]


# ---------------------------------------------------------------------------
# Parameter init (deterministic, kaiming-ish scaling)
# ---------------------------------------------------------------------------
def init_encoder_params(key, in_channels, num_hiddens, num_residual_layers,
                        num_residual_hiddens):
    def conv_w(k, cout, cin, kh, kw):
        fan_in = cin * kh * kw
        return jax.random.normal(k, (cout, cin, kh, kw), jnp.float32) / jnp.sqrt(fan_in)

    keys = jax.random.split(key, 3 + 2 * num_residual_layers)
    nh2 = num_hiddens // 2
    params = {
        "w1": conv_w(keys[0], nh2, in_channels, 4, 4),
        "b1": jnp.zeros((nh2,), jnp.float32),
        "w2": conv_w(keys[1], num_hiddens, nh2, 4, 4),
        "b2": jnp.zeros((num_hiddens,), jnp.float32),
        "w3": conv_w(keys[2], num_hiddens, num_hiddens, 3, 3),
        "b3": jnp.zeros((num_hiddens,), jnp.float32),
        "res": [],
    }
    for l in range(num_residual_layers):
        w3 = conv_w(keys[3 + 2 * l], num_residual_hiddens, num_hiddens, 3, 3)  # no bias
        w1 = conv_w(keys[4 + 2 * l], num_hiddens, num_residual_hiddens, 1, 1)  # no bias
        params["res"].append((w3, w1))
    return params


# ---------------------------------------------------------------------------
# Encoder forward (matches the PyTorch module semantics), fully jitted.
# ---------------------------------------------------------------------------
@jax.jit
def encoder_forward(params, x_nchw):
    x = jnp.transpose(x_nchw, (0, 2, 3, 1)).astype(jnp.float32)     # NCHW -> NHWC

    # conv_1 (4x4, s2, p1) + ReLU  and  conv_2 (4x4, s2, p1) + ReLU
    x = _conv2d_strided_relu(x, params["w1"], params["b1"], stride=2, pad=1)
    x = _conv2d_strided_relu(x, params["w2"], params["b2"], stride=2, pad=1)

    # conv_3 (3x3, s1, p1) + entire residual stack + final ReLU: one kernel.
    x = _conv3_resstack_fused(x, params["w3"], params["b3"], params["res"])

    return jnp.transpose(x, (0, 3, 1, 2))                           # NHWC -> NCHW


# ---------------------------------------------------------------------------
if __name__ == "__main__":
    in_channels = 4
    num_hiddens = 32
    num_residual_layers = 2
    num_residual_hiddens = 16

    key = jax.random.PRNGKey(0)
    k_param, k_x = jax.random.split(key)
    params = init_encoder_params(k_param, in_channels, num_hiddens,
                                 num_residual_layers, num_residual_hiddens)
    x = jax.random.normal(k_x, (2, in_channels, 16, 16), jnp.float32)   # NCHW

    out = jax.block_until_ready(encoder_forward(params, x))

    expected_shape = (2, num_hiddens, 4, 4)   # 16 -> 8 -> 4 spatial, C = num_hiddens
    assert out.shape == expected_shape, (out.shape, expected_shape)
    assert bool(jnp.all(jnp.isfinite(out)))
    assert bool(jnp.all(out >= 0.0))          # final op is ReLU
    print("KERNEL_OK")
</pallas_src>

<mosaic_0001>
module attributes {stable_mosaic.version = 11 : i64} {
  func.func @_mm_bias_relu_kernel(%arg0: i32, %arg1: i32, %arg2: memref<64x64xbf16, #tpu.memory_space<vmem>>, %arg3: memref<64x128xbf16, #tpu.memory_space<vmem>>, %arg4: memref<1x128xf32, #tpu.memory_space<vmem>>, %arg5: memref<64x128xf32, #tpu.memory_space<vmem>>) attributes {dimension_semantics = [#tpu.dimension_semantics<parallel>, #tpu.dimension_semantics<parallel>], iteration_bounds = array<i64: 2, 1>, scalar_prefetch = 0 : i64, scratch_operands = 0 : i64, tpu.core_type = #tpu.core_type<tc>, window_params = [{transform_indices = @transform_0, window_bounds = array<i64: 64, 64>}, {transform_indices = @transform_1, window_bounds = array<i64: 64, 128>}, {transform_indices = @transform_2, window_bounds = array<i64: 1, 128>}, {transform_indices = @transform_3, window_bounds = array<i64: 64, 128>}]} {
    %c0 = arith.constant 0 : index
    %c0_0 = arith.constant 0 : index
    %0 = vector.load %arg2[%c0, %c0_0] : memref<64x64xbf16, #tpu.memory_space<vmem>>, vector<64x64xbf16>
    %c0_1 = arith.constant 0 : index
    %c0_2 = arith.constant 0 : index
    %1 = vector.load %arg3[%c0_1, %c0_2] : memref<64x128xbf16, #tpu.memory_space<vmem>>, vector<64x128xbf16>
    %cst = arith.constant dense<0.000000e+00> : vector<64x128xf32>
    %2 = tpu.matmul %0, %1, %cst {dimension_numbers = #tpu.dot_dimension_numbers<[1], [0], [0], [1], [0, 0, 1, 1], [], []>} : vector<64x64xbf16>, vector<64x128xbf16>, vector<64x128xf32> -> vector<64x128xf32>
    %c0_3 = arith.constant 0 : index
    %c0_4 = arith.constant 0 : index
    %3 = vector.load %arg4[%c0_3, %c0_4] : memref<1x128xf32, #tpu.memory_space<vmem>>, vector<1x128xf32>
    %4 = vector.broadcast %3 : vector<1x128xf32> to vector<64x128xf32>
    %5 = arith.addf %2, %4 : vector<64x128xf32>
    %cst_5 = arith.constant 0.000000e+00 : f32
    %6 = vector.broadcast %cst_5 : f32 to vector<64x128xf32>
    %7 = arith.maximumf %5, %6 : vector<64x128xf32>
    %c0_6 = arith.constant 0 : index
    %c0_7 = arith.constant 0 : index
    %8 = vector.load %arg5[%c0_6, %c0_7] : memref<64x128xf32, #tpu.memory_space<vmem>>, vector<64x128xf32>
    tpu.vector_store %arg5[%c0_6, %c0_7], %7 {strides = array<i32>} : memref<64x128xf32, #tpu.memory_space<vmem>>, vector<64x128xf32>,
    return
  }
  func.func @transform_0(%arg0: i32, %arg1: i32) -> (i32, i32) {
    %c0_i32 = arith.constant 0 : i32
    %c0_i32_0 = arith.constant 0 : i32
    return %arg0, %c0_i32 : i32, i32
  }
  func.func @transform_1(%arg0: i32, %arg1: i32) -> (i32, i32) {
    %c0_i32 = arith.constant 0 : i32
    %c0_i32_0 = arith.constant 0 : i32
    return %c0_i32, %arg1 : i32, i32
  }
  func.func @transform_2(%arg0: i32, %arg1: i32) -> (i32, i32) {
    %c0_i32 = arith.constant 0 : i32
    %c0_i32_0 = arith.constant 0 : i32
    return %c0_i32, %arg1 : i32, i32
  }
  func.func @transform_3(%arg0: i32, %arg1: i32) -> (i32, i32) {
    %c0_i32 = arith.constant 0 : i32
    return %arg0, %arg1 : i32, i32
  }
}

module attributes {stable_mosaic.version = 11 : i64} {
  func.func @_mm_bias_relu_kernel(%arg0: i32, %arg1: i32, %arg2: memref<16x256xbf16, #tpu.memory_space<vmem>>, %arg3: memref<256x128xbf16, #tpu.memory_space<vmem>>, %arg4: memref<1x128xf32, #tpu.memory_space<vmem>>, %arg5: memref<16x128xf32, #tpu.memory_space<vmem>>) attributes {dimension_semantics = [#tpu.dimension_semantics<parallel>, #tpu.dimension_semantics<parallel>], iteration_bounds = array<i64: 2, 1>, scalar_prefetch = 0 : i64, scratch_operands = 0 : i64, tpu.core_type = #tpu.core_type<tc>, window_params = [{transform_indices = @transform_0, window_bounds = array<i64: 16, 256>}, {transform_indices = @transform_1, window_bounds = array<i64: 256, 128>}, {transform_indices = @transform_2, window_bounds = array<i64: 1, 128>}, {transform_indices = @transform_3, window_bounds = array<i64: 16, 128>}]} {
    %c0 = arith.constant 0 : index
    %c0_0 = arith.constant 0 : index
    %0 = vector.load %arg2[%c0, %c0_0] : memref<16x256xbf16, #tpu.memory_space<vmem>>, vector<16x256xbf16>
    %c0_1 = arith.constant 0 : index
    %c0_2 = arith.constant 0 : index
    %1 = vector.load %arg3[%c0_1, %c0_2] : memref<256x128xbf16, #tpu.memory_space<vmem>>, vector<256x128xbf16>
    %cst = arith.constant dense<0.000000e+00> : vector<16x128xf32>
    %2 = tpu.matmul %0, %1, %cst {dimension_numbers = #tpu.dot_dimension_numbers<[1], [0], [0], [1], [0, 0, 1, 1], [], []>} : vector<16x256xbf16>, vector<256x128xbf16>, vector<16x128xf32> -> vector<16x128xf32>
    %c0_3 = arith.constant 0 : index
    %c0_4 = arith.constant 0 : index
    %3 = vector.load %arg4[%c0_3, %c0_4] : memref<1x128xf32, #tpu.memory_space<vmem>>, vector<1x128xf32>
    %4 = vector.broadcast %3 : vector<1x128xf32> to vector<16x128xf32>
    %5 = arith.addf %2, %4 : vector<16x128xf32>
    %cst_5 = arith.constant 0.000000e+00 : f32
    %6 = vector.broadcast %cst_5 : f32 to vector<16x128xf32>
    %7 = arith.maximumf %5, %6 : vector<16x128xf32>
    %c0_6 = arith.constant 0 : index
    %c0_7 = arith.constant 0 : index
    %8 = vector.load %arg5[%c0_6, %c0_7] : memref<16x128xf32, #tpu.memory_space<vmem>>, vector<16x128xf32>
    tpu.vector_store %arg5[%c0_6, %c0_7], %7 {strides = array<i32>} : memref<16x128xf32, #tpu.memory_space<vmem>>, vector<16x128xf32>,
    return
  }
  func.func @transform_0(%arg0: i32, %arg1: i32) -> (i32, i32) {
    %c0_i32 = arith.constant 0 : i32
    %c0_i32_0 = arith.constant 0 : i32
    return %arg0, %c0_i32 : i32, i32
  }
  func.func @transform_1(%arg0: i32, %arg1: i32) -> (i32, i32) {
    %c0_i32 = arith.constant 0 : i32
    %c0_i32_0 = arith.constant 0 : i32
    return %c0_i32, %arg1 : i32, i32
  }
  func.func @transform_2(%arg0: i32, %arg1: i32) -> (i32, i32) {
    %c0_i32 = arith.constant 0 : i32
    %c0_i32_0 = arith.constant 0 : i32
    return %c0_i32, %arg1 : i32, i32
  }
  func.func @transform_3(%arg0: i32, %arg1: i32) -> (i32, i32) {
    %c0_i32 = arith.constant 0 : i32
    return %arg0, %arg1 : i32, i32
  }
}

module attributes {stable_mosaic.version = 11 : i64} {
  func.func @_fused_tail_kernel(%arg0: i32, %arg1: memref<1x42x128xf32, #tpu.memory_space<vmem>>, %arg2: memref<1152x128xbf16, #tpu.memory_space<vmem>>, %arg3: memref<1x128xf32, #tpu.memory_space<vmem>>, %arg4: memref<2x1152x128xbf16, #tpu.memory_space<vmem>>, %arg5: memref<2x128x128xbf16, #tpu.memory_space<vmem>>, %arg6: memref<1x24x128xf32, #tpu.memory_space<vmem>>) attributes {dimension_semantics = [#tpu.dimension_semantics<parallel>], iteration_bounds = array<i64: 2>, scalar_prefetch = 0 : i64, scratch_operands = 0 : i64, tpu.core_type = #tpu.core_type<tc>, window_params = [{transform_indices = @transform_0, window_bounds = array<i64: 1, 42, 128>}, {pipeline_mode = #tpu.pipeline_mode<synchronous>, transform_indices = @transform_1, window_bounds = array<i64: 1152, 128>}, {pipeline_mode = #tpu.pipeline_mode<synchronous>, transform_indices = @transform_2, window_bounds = array<i64: 1, 128>}, {pipeline_mode = #tpu.pipeline_mode<synchronous>, transform_indices = @transform_3, window_bounds = array<i64: 2, 1152, 128>}, {pipeline_mode = #tpu.pipeline_mode<synchronous>, transform_indices = @transform_4, window_bounds = array<i64: 2, 128, 128>}, {transform_indices = @transform_5, window_bounds = array<i64: 1, 24, 128>}]} {
    %c0 = arith.constant 0 : index
    %c0_0 = arith.constant 0 : index
    %c0_1 = arith.constant 0 : index
    %0 = vector.load %arg1[%c0, %c0_0, %c0_1] : memref<1x42x128xf32, #tpu.memory_space<vmem>>, vector<1x42x128xf32>
    %1 = vector.shape_cast %0 : vector<1x42x128xf32> to vector<42x128xf32>
    %2 = tpu.iota {dimensions = array<i32: 0>} : vector<24x1xi32>
    %c6_i32 = arith.constant 6 : i32
    %c0_i32 = arith.constant 0 : i32
    %3 = arith.cmpi eq, %c6_i32, %c0_i32 : i32
    %c1_i32 = arith.constant 1 : i32
    %4 = arith.select %3, %c1_i32, %c6_i32 : i32
    %5 = vector.broadcast %4 : i32 to vector<24x1xi32>
    %6 = arith.remsi %2, %5 : vector<24x1xi32>
    %c0_i32_2 = arith.constant 0 : i32
    %7 = vector.broadcast %c0_i32_2 : i32 to vector<24x1xi32>
    %8 = arith.cmpi ne, %6, %7 : vector<24x1xi32>
    %c0_i32_3 = arith.constant 0 : i32
    %9 = vector.broadcast %c0_i32_3 : i32 to vector<24x1xi32>
    %10 = arith.cmpi slt, %6, %9 : vector<24x1xi32>
    %c0_i32_4 = arith.constant 0 : i32
    %11 = arith.cmpi slt, %4, %c0_i32_4 : i32
    %12 = vector.broadcast %11 : i1 to vector<24x1xi1>
    %13 = vector.broadcast %12 : vector<24x1xi1> to vector<24x1xi1>
    %14 = arith.xori %10, %13 : vector<24x1xi1>
    %15 = arith.andi %14, %8 : vector<24x1xi1>
    %16 = vector.broadcast %4 : i32 to vector<24x1xi32>
    %17 = arith.addi %6, %16 : vector<24x1xi32>
    %18 = arith.select %15, %17, %6 : vector<24x1xi1>, vector<24x1xi32>
    %c4_i32 = arith.constant 4 : i32
    %19 = vector.broadcast %c4_i32 : i32 to vector<24x1xi32>
    %20 = arith.cmpi slt, %18, %19 : vector<24x1xi32>
    %cst = arith.constant 0.000000e+00 : f32
    %21 = vector.broadcast %cst : f32 to vector<7x128xf32>
    %cst_5 = arith.constant 0.000000e+00 : f32
    %22 = vector.broadcast %cst_5 : f32 to vector<11x128xf32>
    %23 = vector.extract_strided_slice %1 {offsets = [0, 0], sizes = [24, 128], strides = [1, 1]} : vector<42x128xf32> to vector<24x128xf32>
    %24 = vector.extract_strided_slice %1 {offsets = [1, 0], sizes = [24, 128], strides = [1, 1]} : vector<42x128xf32> to vector<24x128xf32>
    %25 = vector.extract_strided_slice %1 {offsets = [2, 0], sizes = [24, 128], strides = [1, 1]} : vector<42x128xf32> to vector<24x128xf32>
    %26 = vector.extract_strided_slice %1 {offsets = [6, 0], sizes = [24, 128], strides = [1, 1]} : vector<42x128xf32> to vector<24x128xf32>
    %27 = vector.extract_strided_slice %1 {offsets = [7, 0], sizes = [24, 128], strides = [1, 1]} : vector<42x128xf32> to vector<24x128xf32>
    %28 = vector.extract_strided_slice %1 {offsets = [8, 0], sizes = [24, 128], strides = [1, 1]} : vector<42x128xf32> to vector<24x128xf32>
    %29 = vector.extract_strided_slice %1 {offsets = [12, 0], sizes = [24, 128], strides = [1, 1]} : vector<42x128xf32> to vector<24x128xf32>
    %30 = vector.extract_strided_slice %1 {offsets = [13, 0], sizes = [24, 128], strides = [1, 1]} : vector<42x128xf32> to vector<24x128xf32>
    %31 = vector.extract_strided_slice %1 {offsets = [14, 0], sizes = [24, 128], strides = [1, 1]} : vector<42x128xf32> to vector<24x128xf32>
    %32 = tpu.concatenate %23, %24, %25, %26, %27, %28, %29, %30, %31 in 1 : vector<24x128xf32>, vector<24x128xf32>, vector<24x128xf32>, vector<24x128xf32>, vector<24x128xf32>, vector<24x128xf32>, vector<24x128xf32>, vector<24x128xf32>, vector<24x128xf32> -> vector<24x1152xf32>
    %33 = arith.truncf %32 : vector<24x1152xf32> to vector<24x1152xbf16>
    %c0_6 = arith.constant 0 : index
    %c0_7 = arith.constant 0 : index
    %34 = vector.load %arg2[%c0_6, %c0_7] : memref<1152x128xbf16, #tpu.memory_space<vmem>>, vector<1152x128xbf16>
    %cst_8 = arith.constant dense<0.000000e+00> : vector<24x128xf32>
    %35 = tpu.matmul %33, %34, %cst_8 {dimension_numbers = #tpu.dot_dimension_numbers<[1], [0], [0], [1], [0, 0, 1, 1], [], []>} : vector<24x1152xbf16>, vector<1152x128xbf16>, vector<24x128xf32> -> vector<24x128xf32>
    %c0_9 = arith.constant 0 : index
    %c0_10 = arith.constant 0 : index
    %36 = vector.load %arg3[%c0_9, %c0_10] : memref<1x128xf32, #tpu.memory_space<vmem>>, vector<1x128xf32>
    %37 = vector.broadcast %36 : vector<1x128xf32> to vector<24x128xf32>
    %38 = arith.addf %35, %37 : vector<24x128xf32>
    %cst_11 = arith.constant 0.000000e+00 : f32
    %39 = vector.shape_cast %20 : vector<24x1xi1> to vector<24x1xi1>
    %40 = vector.broadcast %39 : vector<24x1xi1> to vector<24x128xi1>
    %41 = vector.broadcast %cst_11 : f32 to vector<24x128xf32>
    %42 = arith.select %40, %38, %41 : vector<24x128xi1>, vector<24x128xf32>
    %43 = tpu.concatenate %21, %42, %22 in 0 : vector<7x128xf32>, vector<24x128xf32>, vector<11x128xf32> -> vector<42x128xf32>
    %cst_12 = arith.constant 0.000000e+00 : f32
    %44 = vector.broadcast %cst_12 : f32 to vector<42x128xf32>
    %45 = arith.maximumf %43, %44 : vector<42x128xf32>
    %46 = vector.extract_strided_slice %45 {offsets = [0, 0], sizes = [24, 128], strides = [1, 1]} : vector<42x128xf32> to vector<24x128xf32>
    %47 = vector.extract_strided_slice %45 {offsets = [1, 0], sizes = [24, 128], strides = [1, 1]} : vector<42x128xf32> to vector<24x128xf32>
    %48 = vector.extract_strided_slice %45 {offsets = [2, 0], sizes = [24, 128], strides = [1, 1]} : vector<42x128xf32> to vector<24x128xf32>
    %49 = vector.extract_strided_slice %45 {offsets = [6, 0], sizes = [24, 128], strides = [1, 1]} : vector<42x128xf32> to vector<24x128xf32>
    %50 = vector.extract_strided_slice %45 {offsets = [7, 0], sizes = [24, 128], strides = [1, 1]} : vector<42x128xf32> to vector<24x128xf32>
    %51 = vector.extract_strided_slice %45 {offsets = [8, 0], sizes = [24, 128], strides = [1, 1]} : vector<42x128xf32> to vector<24x128xf32>
    %52 = vector.extract_strided_slice %45 {offsets = [12, 0], sizes = [24, 128], strides = [1, 1]} : vector<42x128xf32> to vector<24x128xf32>
    %53 = vector.extract_strided_slice %45 {offsets = [13, 0], sizes = [24, 128], strides = [1, 1]} : vector<42x128xf32> to vector<24x128xf32>
    %54 = vector.extract_strided_slice %45 {offsets = [14, 0], sizes = [24, 128], strides = [1, 1]} : vector<42x128xf32> to vector<24x128xf32>
    %55 = tpu.concatenate %46, %47, %48, %49, %50, %51, %52, %53, %54 in 1 : vector<24x128xf32>, vector<24x128xf32>, vector<24x128xf32>, vector<24x128xf32>, vector<24x128xf32>, vector<24x128xf32>, vector<24x128xf32>, vector<24x128xf32>, vector<24x128xf32> -> vector<24x1152xf32>
    %56 = arith.truncf %55 : vector<24x1152xf32> to vector<24x1152xbf16>
    %c0_13 = arith.constant 0 : index
    %c0_14 = arith.constant 0 : index
    %c0_15 = arith.constant 0 : index
    %57 = vector.load %arg4[%c0_13, %c0_14, %c0_15] : memref<2x1152x128xbf16, #tpu.memory_space<vmem>>, vector<1x1152x128xbf16>
    %58 = vector.shape_cast %57 : vector<1x1152x128xbf16> to vector<1152x128xbf16>
    %cst_16 = arith.constant dense<0.000000e+00> : vector<24x128xf32>
    %59 = tpu.matmul %56, %58, %cst_16 {dimension_numbers = #tpu.dot_dimension_numbers<[1], [0], [0], [1], [0, 0, 1, 1], [], []>} : vector<24x1152xbf16>, vector<1152x128xbf16>, vector<24x128xf32> -> vector<24x128xf32>
    %cst_17 = arith.constant 0.000000e+00 : f32
    %60 = vector.broadcast %cst_17 : f32 to vector<24x128xf32>
    %61 = arith.maximumf %59, %60 : vector<24x128xf32>
    %62 = arith.truncf %61 : vector<24x128xf32> to vector<24x128xbf16>
    %c0_18 = arith.constant 0 : index
    %c0_19 = arith.constant 0 : index
    %c0_20 = arith.constant 0 : index
    %63 = vector.load %arg5[%c0_18, %c0_19, %c0_20] : memref<2x128x128xbf16, #tpu.memory_space<vmem>>, vector<1x128x128xbf16>
    %64 = vector.shape_cast %63 : vector<1x128x128xbf16> to vector<128x128xbf16>
    %cst_21 = arith.constant dense<0.000000e+00> : vector<24x128xf32>
    %65 = tpu.matmul %62, %64, %cst_21 {dimension_numbers = #tpu.dot_dimension_numbers<[1], [0], [0], [1], [0, 0, 1, 1], [], []>} : vector<24x128xbf16>, vector<128x128xbf16>, vector<24x128xf32> -> vector<24x128xf32>
    %66 = vector.extract_strided_slice %43 {offsets = [7, 0], sizes = [24, 128], strides = [1, 1]} : vector<42x128xf32> to vector<24x128xf32>
    %67 = arith.addf %66, %65 : vector<24x128xf32>
    %cst_22 = arith.constant 0.000000e+00 : f32
    %68 = vector.shape_cast %20 : vector<24x1xi1> to vector<24x1xi1>
    %69 = vector.broadcast %68 : vector<24x1xi1> to vector<24x128xi1>
    %70 = vector.broadcast %cst_22 : f32 to vector<24x128xf32>
    %71 = arith.select %69, %67, %70 : vector<24x128xi1>, vector<24x128xf32>
    %72 = tpu.concatenate %21, %71, %22 in 0 : vector<7x128xf32>, vector<24x128xf32>, vector<11x128xf32> -> vector<42x128xf32>
    %cst_23 = arith.constant 0.000000e+00 : f32
    %73 = vector.broadcast %cst_23 : f32 to vector<42x128xf32>
    %74 = arith.maximumf %72, %73 : vector<42x128xf32>
    %75 = vector.extract_strided_slice %74 {offsets = [0, 0], sizes = [24, 128], strides = [1, 1]} : vector<42x128xf32> to vector<24x128xf32>
    %76 = vector.extract_strided_slice %74 {offsets = [1, 0], sizes = [24, 128], strides = [1, 1]} : vector<42x128xf32> to vector<24x128xf32>
    %77 = vector.extract_strided_slice %74 {offsets = [2, 0], sizes = [24, 128], strides = [1, 1]} : vector<42x128xf32> to vector<24x128xf32>
    %78 = vector.extract_strided_slice %74 {offsets = [6, 0], sizes = [24, 128], strides = [1, 1]} : vector<42x128xf32> to vector<24x128xf32>
    %79 = vector.extract_strided_slice %74 {offsets = [7, 0], sizes = [24, 128], strides = [1, 1]} : vector<42x128xf32> to vector<24x128xf32>
    %80 = vector.extract_strided_slice %74 {offsets = [8, 0], sizes = [24, 128], strides = [1, 1]} : vector<42x128xf32> to vector<24x128xf32>
    %81 = vector.extract_strided_slice %74 {offsets = [12, 0], sizes = [24, 128], strides = [1, 1]} : vector<42x128xf32> to vector<24x128xf32>
    %82 = vector.extract_strided_slice %74 {offsets = [13, 0], sizes = [24, 128], strides = [1, 1]} : vector<42x128xf32> to vector<24x128xf32>
    %83 = vector.extract_strided_slice %74 {offsets = [14, 0], sizes = [24, 128], strides = [1, 1]} : vector<42x128xf32> to vector<24x128xf32>
    %84 = tpu.concatenate %75, %76, %77, %78, %79, %80, %81, %82, %83 in 1 : vector<24x128xf32>, vector<24x128xf32>, vector<24x128xf32>, vector<24x128xf32>, vector<24x128xf32>, vector<24x128xf32>, vector<24x128xf32>, vector<24x128xf32>, vector<24x128xf32> -> vector<24x1152xf32>
    %85 = arith.truncf %84 : vector<24x1152xf32> to vector<24x1152xbf16>
    %c1 = arith.constant 1 : index
    %c0_24 = arith.constant 0 : index
    %c0_25 = arith.constant 0 : index
    %86 = vector.load %arg4[%c1, %c0_24, %c0_25] : memref<2x1152x128xbf16, #tpu.memory_space<vmem>>, vector<1x1152x128xbf16>
    %87 = vector.shape_cast %86 : vector<1x1152x128xbf16> to vector<1152x128xbf16>
    %cst_26 = arith.constant dense<0.000000e+00> : vector<24x128xf32>
    %88 = tpu.matmul %85, %87, %cst_26 {dimension_numbers = #tpu.dot_dimension_numbers<[1], [0], [0], [1], [0, 0, 1, 1], [], []>} : vector<24x1152xbf16>, vector<1152x128xbf16>, vector<24x128xf32> -> vector<24x128xf32>
    %cst_27 = arith.constant 0.000000e+00 : f32
    %89 = vector.broadcast %cst_27 : f32 to vector<24x128xf32>
    %90 = arith.maximumf %88, %89 : vector<24x128xf32>
    %91 = arith.truncf %90 : vector<24x128xf32> to vector<24x128xbf16>
    %c1_28 = arith.constant 1 : index
    %c0_29 = arith.constant 0 : index
    %c0_30 = arith.constant 0 : index
    %92 = vector.load %arg5[%c1_28, %c0_29, %c0_30] : memref<2x128x128xbf16, #tpu.memory_space<vmem>>, vector<1x128x128xbf16>
    %93 = vector.shape_cast %92 : vector<1x128x128xbf16> to vector<128x128xbf16>
    %cst_31 = arith.constant dense<0.000000e+00> : vector<24x128xf32>
    %94 = tpu.matmul %91, %93, %cst_31 {dimension_numbers = #tpu.dot_dimension_numbers<[1], [0], [0], [1], [0, 0, 1, 1], [], []>} : vector<24x128xbf16>, vector<128x128xbf16>, vector<24x128xf32> -> vector<24x128xf32>
    %95 = vector.extract_strided_slice %72 {offsets = [7, 0], sizes = [24, 128], strides = [1, 1]} : vector<42x128xf32> to vector<24x128xf32>
    %96 = arith.addf %95, %94 : vector<24x128xf32>
    %cst_32 = arith.constant 0.000000e+00 : f32
    %97 = vector.shape_cast %20 : vector<24x1xi1> to vector<24x1xi1>
    %98 = vector.broadcast %97 : vector<24x1xi1> to vector<24x128xi1>
    %99 = vector.broadcast %cst_32 : f32 to vector<24x128xf32>
    %100 = arith.select %98, %96, %99 : vector<24x128xi1>, vector<24x128xf32>
    %101 = tpu.concatenate %21, %100, %22 in 0 : vector<7x128xf32>, vector<24x128xf32>, vector<11x128xf32> -> vector<42x128xf32>
    %102 = vector.extract_strided_slice %101 {offsets = [7, 0], sizes = [24, 128], strides = [1, 1]} : vector<42x128xf32> to vector<24x128xf32>
    %cst_33 = arith.constant 0.000000e+00 : f32
    %103 = vector.broadcast %cst_33 : f32 to vector<24x128xf32>
    %104 = arith.maximumf %102, %103 : vector<24x128xf32>
    %c0_34 = arith.constant 0 : index
    %c0_35 = arith.constant 0 : index
    %c0_36 = arith.constant 0 : index
    %105 = vector.load %arg6[%c0_34, %c0_35, %c0_36] : memref<1x24x128xf32, #tpu.memory_space<vmem>>, vector<1x24x128xf32>
    %106 = vector.shape_cast %105 : vector<1x24x128xf32> to vector<24x128xf32>
    %107 = vector.shape_cast %104 : vector<24x128xf32> to vector<1x24x128xf32>
    tpu.vector_store %arg6[%c0_34, %c0_35, %c0_36], %107 {strides = array<i32>} : memref<1x24x128xf32, #tpu.memory_space<vmem>>, vector<1x24x128xf32>,
    return
  }
  func.func @transform_0(%arg0: i32) -> (i32, i32, i32) {
    %c0_i32 = arith.constant 0 : i32
    %c0_i32_0 = arith.constant 0 : i32
    %c0_i32_1 = arith.constant 0 : i32
    return %arg0, %c0_i32, %c0_i32_0 : i32, i32, i32
  }
  func.func @transform_1(%arg0: i32) -> (i32, i32) {
    %c0_i32 = arith.constant 0 : i32
    %c0_i32_0 = arith.constant 0 : i32
    %c0_i32_1 = arith.constant 0 : i32
    return %c0_i32, %c0_i32_0 : i32, i32
  }
  func.func @transform_2(%arg0: i32) -> (i32, i32) {
    %c0_i32 = arith.constant 0 : i32
    %c0_i32_0 = arith.constant 0 : i32
    %c0_i32_1 = arith.constant 0 : i32
    return %c0_i32, %c0_i32_0 : i32, i32
  }
  func.func @transform_3(%arg0: i32) -> (i32, i32, i32) {
    %c0_i32 = arith.constant 0 : i32
    %c0_i32_0 = arith.constant 0 : i32
    %c0_i32_1 = arith.constant 0 : i32
    %c0_i32_2 = arith.constant 0 : i32
    return %c0_i32, %c0_i32_0, %c0_i32_1 : i32, i32, i32
  }
  func.func @transform_4(%arg0: i32) -> (i32, i32, i32) {
    %c0_i32 = arith.constant 0 : i32
    %c0_i32_0 = arith.constant 0 : i32
    %c0_i32_1 = arith.constant 0 : i32
    %c0_i32_2 = arith.constant 0 : i32
    return %c0_i32, %c0_i32_0, %c0_i32_1 : i32, i32, i32
  }
  func.func @transform_5(%arg0: i32) -> (i32, i32, i32) {
    %c0_i32 = arith.constant 0 : i32
    %c0_i32_0 = arith.constant 0 : i32
    %c0_i32_1 = arith.constant 0 : i32
    return %arg0, %c0_i32, %c0_i32_0 : i32, i32, i32
  }
}

</mosaic_0001>

<llo_original>
// kernel: encoder_forward.3
$region0: #{encoder_forward.3}
  #allocation0 [shape = 'u32[]', space=smem, size = 0x4, offset = 0x4, fixed_abs, tag = 'smem constant byte address 0x4 - core index']
  #allocation1 [shape = 'u32[144,128]{1,0:T(1,128)}', space=vmem, size = 0x12000, scoped, tag = 'internal scratch']
  %s0 = inlined_call_operand.vmem [shape: bf16[128,64], index: 0, kind: input, shape index: {}]
  %s1 = inlined_call_operand.vmem [shape: bf16[64,128], index: 1, kind: input, shape index: {}]
  %s2 = inlined_call_operand.vmem [shape: f32[1,128], index: 2, kind: input, shape index: {}]
  %s3 = inlined_call_operand.vmem [shape: f32[128,128], index: 3, kind: output, shape index: {}]
  %s4 = sld [smem:[#allocation0]]
  $region45: #{encoder_forward.3} parent=0
    _
  %s6 = ssub.s32 1, %s4
  %s7 = scalar_select 0, %s6, %s4
  loop: start=0, step=1, limit=4
  $region2: #{encoder_forward.3} parent=0 // loop_pre_header
    _
  $region3: #{encoder_forward.3} parent=0 // loop_header
    %s9 = sphi 0, %s13
    %p10 = scmp.ge.s32.totalorder %s9, 4
    %s16 = sphi 0, %s28
    %s17 = sphi 0, %s24
    %s18 = sphi 0, %s16
    %s19 = sphi 0, %s17
    %s20 = sphi 0, %s18
    %s21 = sphi 0, %s19
    %s31 = sphi 0, %s33
    %s34 = sphi 0, %s31
    %s35 = sphi 0, %s34
    %s51 = sphi 0, %s35
    %s57 = sphi 0, %s59
    %s60 = sphi 0, %s57
    %s61 = sphi 0, %s60
    %s77 = sphi 0, %s61
    %s83 = sphi 0, %s85
    %s86 = sphi 0, %s83
    %s87 = sphi 0, %s86
    %s103 = sphi 0, %s87
    %s111 = sphi 0, %s113
    %s114 = sphi 0, %s111
    %s115 = sphi 0, %s114
    %s131 = sphi 0, %s115
  $region4: #{encoder_forward.3} parent=0 // loop_header_branch
    %12 = sbr.rel (%p10) target = $region8
  $region5: #{encoder_forward.3} parent=0 // loop_body
    %s14 = ssub.s32 %s9, 1
    %s15 = ssub.s32 %s9, 2
    %s22 = sadd.s32 1, %s17
    %p23 = scmp.ge.s32.totalorder %s22, 1
    %s24 = scalar_select %p23, 0, %s22
    %s25 = sadd.s32 1, %s16
    %s26 = scalar_select %p23, %s25, %s16
    %p27 = scmp.ge.s32.totalorder %s26, 2
    %s28 = scalar_select %p27, 0, %s26
    %s29 = ssub.s32 %s16, %s28
    %p30 = scmp.eq.s32.totalorder %s29, 0
    %s32 = sadd.s32 %s31, 1
    %s33 = scalar_select %p30, %s31, %s32
    %p36 = pneg %p30
    %p37 = scmp.eq.s32.totalorder %s9, 1
    %p38 = por %p36, %p37
    %p39 = scmp.ne.s32.totalorder %s31, %s34
    %p40 = scmp.eq.s32.totalorder %s9, 0
    %p41 = por %p39, %p40
    %p42 = scmp.ne.s32.totalorder %s31, %s34
    %p43 = scmp.eq.s32.totalorder %s14, 1
    %p44 = por %p42, %p43
    %p45 = scmp.ne.s32.totalorder %s34, %s35
    %p46 = scmp.eq.s32.totalorder %s14, 0
    %p47 = por %p45, %p46
    %p48 = scmp.ne.s32.totalorder %s34, %s35
    %p49 = scmp.eq.s32.totalorder %s15, 1
    %p50 = por %p48, %p49
    %p52 = scmp.ne.s32.totalorder %s35, %s51
    %p53 = scmp.eq.s32.totalorder %s15, 0
    %p54 = por %p52, %p53
    %s55 = ssub.s32 %s17, %s24
    %p56 = scmp.eq.s32.totalorder %s55, 0
    %s58 = sadd.s32 %s57, 1
    %s59 = scalar_select %p56, %s57, %s58
    %p62 = pneg %p56
    %p63 = scmp.eq.s32.totalorder %s9, 1
    %p64 = por %p62, %p63
    %p65 = scmp.ne.s32.totalorder %s57, %s60
    %p66 = scmp.eq.s32.totalorder %s9, 0
    %p67 = por %p65, %p66
    %p68 = scmp.ne.s32.totalorder %s57, %s60
    %p69 = scmp.eq.s32.totalorder %s14, 1
    %p70 = por %p68, %p69
    %p71 = scmp.ne.s32.totalorder %s60, %s61
    %p72 = scmp.eq.s32.totalorder %s14, 0
    %p73 = por %p71, %p72
    %p74 = scmp.ne.s32.totalorder %s60, %s61
    %p75 = scmp.eq.s32.totalorder %s15, 1
    %p76 = por %p74, %p75
    %p78 = scmp.ne.s32.totalorder %s61, %s77
    %p79 = scmp.eq.s32.totalorder %s15, 0
    %p80 = por %p78, %p79
    %s81 = ssub.s32 %s17, %s24
    %p82 = scmp.eq.s32.totalorder %s81, 0
    %s84 = sadd.s32 %s83, 1
    %s85 = scalar_select %p82, %s83, %s84
    %p88 = pneg %p82
    %p89 = scmp.eq.s32.totalorder %s9, 1
    %p90 = por %p88, %p89
    %p91 = scmp.ne.s32.totalorder %s83, %s86
    %p92 = scmp.eq.s32.totalorder %s9, 0
    %p93 = por %p91, %p92
    %p94 = scmp.ne.s32.totalorder %s83, %s86
    %p95 = scmp.eq.s32.totalorder %s14, 1
    %p96 = por %p94, %p95
    %p97 = scmp.ne.s32.totalorder %s86, %s87
    %p98 = scmp.eq.s32.totalorder %s14, 0
    %p99 = por %p97, %p98
    %p100 = scmp.ne.s32.totalorder %s86, %s87
    %p101 = scmp.eq.s32.totalorder %s15, 1
    %p102 = por %p100, %p101
    %p104 = scmp.ne.s32.totalorder %s87, %s103
    %p105 = scmp.eq.s32.totalorder %s15, 0
    %p106 = por %p104, %p105
    %s107 = ssub.s32 %s16, %s28
    %s108 = ssub.s32 %s17, %s24
    %s109 = sor.u32 %s107, %s108
    %p110 = scmp.eq.s32.totalorder %s109, 0
    %s112 = sadd.s32 %s111, 1
    %s113 = scalar_select %p110, %s111, %s112
    %p116 = pneg %p110
    %p117 = scmp.eq.s32.totalorder %s9, 1
    %p118 = por %p116, %p117
    %p119 = scmp.ne.s32.totalorder %s111, %s114
    %p120 = scmp.eq.s32.totalorder %s9, 0
    %p121 = por %p119, %p120
    %p122 = scmp.ne.s32.totalorder %s111, %s114
    %p123 = scmp.eq.s32.totalorder %s14, 1
    %p124 = por %p122, %p123
    %p125 = scmp.ne.s32.totalorder %s114, %s115
    %p126 = scmp.eq.s32.totalorder %s14, 0
    %p127 = por %p125, %p126
    %p128 = scmp.ne.s32.totalorder %s114, %s115
    %p129 = scmp.eq.s32.totalorder %s15, 1
    %p130 = por %p128, %p129
    %p132 = scmp.ne.s32.totalorder %s115, %s131
    %p133 = scmp.eq.s32.totalorder %s15, 0
    %p134 = por %p132, %p133
    %p135 = scmp.le.s32.totalorder 1, %s9
    %p136 = scmp.lt.s32.totalorder %s9, 3
    %p137 = pnand %p135, %p136
    %p138 = pneg %p137
    // Predicated region
    $region9: #{encoder_forward.3} parent=5 // pred_check
      _
    $region10: #{encoder_forward.3} parent=5 // pred_check_branch
      %140 = sbr.rel (%p137) target = $region12
    $region11: #{encoder_forward.3} parent=5 // pred_region
      %s141 = ssub.s32 %s9, 1
      // Predicated region
      $region13: #{encoder_forward.3} parent=11 // pred_check
        %p142 = pneg %p73
      $region14: #{encoder_forward.3} parent=11 // pred_check_branch
        %144 = sbr.rel (%p142) target = $region16
      $region15: #{encoder_forward.3} parent=11 // pred_region
        %p145 = scmp.lt.s32.totalorder %s19, 0
        %s146 = scalar_select %p145, %s19, 0
        %s147 = smul.addr %s146, 4
        %s148 = scalar_lea.vmem %s1, %s147
      $region16: #{encoder_forward.3} parent=11 // pred_fallthru
        _
      // Predicated region
      $region17: #{encoder_forward.3} parent=11 // pred_check
        %p149 = pneg %p99
      $region18: #{encoder_forward.3} parent=11 // pred_check_branch
        %151 = sbr.rel (%p149) target = $region20
      $region19: #{encoder_forward.3} parent=11 // pred_region
        %p152 = scmp.lt.s32.totalorder %s19, 0
        %s153 = scalar_select %p152, %s19, 0
        %s154 = scalar_lea.vmem %s2, %s153
      $region20: #{encoder_forward.3} parent=11 // pred_fallthru
        _
    $region12: #{encoder_forward.3} parent=5 // pred_fallthru
      _
    %p155 = scmp.lt.s32.totalorder %s9, 2
    // Predicated region
    $region21: #{encoder_forward.3} parent=5 // pred_check
      %p156 = pneg %p155
    $region22: #{encoder_forward.3} parent=5 // pred_check_branch
      %158 = sbr.rel (%p156) target = $region24
    $region23: #{encoder_forward.3} parent=5 // pred_region
      // Predicated region
      $region25: #{encoder_forward.3} parent=23 // pred_check
        %p159 = pneg %p41
      $region26: #{encoder_forward.3} parent=23 // pred_check_branch
        %161 = sbr.rel (%p159) target = $region28
      $region27: #{encoder_forward.3} parent=23 // pred_region
        %s162 = smul.u32 8, %s16
        %p163 = scmp.lt.s32.totalorder %s162, 15
        %s164 = scalar_select %p163, %s162, 15
        %s165 = smul.addr %s164, 4
        %s166 = scalar_lea.vmem %s0, %s165
        %s167 = smul.u32 8, %s16
      $region28: #{encoder_forward.3} parent=23 // pred_fallthru
        _
    $region24: #{encoder_forward.3} parent=5 // pred_fallthru
      _
    %p168 = scmp.le.s32.totalorder 1, %s9
    %p169 = scmp.lt.s32.totalorder %s9, 3
    %p170 = pnand %p168, %p169
    %p171 = pneg %p170
    // Predicated region
    $region29: #{encoder_forward.3} parent=5 // pred_check
      _
    $region30: #{encoder_forward.3} parent=5 // pred_check_branch
      %173 = sbr.rel (%p170) target = $region32
    $region31: #{encoder_forward.3} parent=5 // pred_region
      %s174 = ssub.s32 %s9, 1
      %s175 = smul.u32 8, %s18
      %p176 = scmp.lt.s32.totalorder %s175, 15
      %s177 = scalar_select %p176, %s175, 15
      %s178 = smul.addr %s177, 4
      %s179 = scalar_lea.vmem %s0, %s178
      %p180 = pneg %p47
      %p181 = pneg %p44
      %p182 = scmp.lt.s32.totalorder %s19, 0
      %s183 = scalar_select %p182, %s19, 0
      %s184 = smul.addr %s183, 4
      %s185 = scalar_lea.vmem %s1, %s184
      %p186 = pneg %p73
      %p187 = pneg %p70
      %p188 = scmp.lt.s32.totalorder %s19, 0
      %s189 = scalar_select %p188, %s19, 0
      %s190 = scalar_lea.vmem %s2, %s189
      %p191 = pneg %p99
      %p192 = pneg %p96
      %p193 = pneg %p127
      %p194 = pneg %p124
      %s195 = smul.u32 8, %s18
      %p196 = scmp.lt.s32.totalorder %s195, 15
      %s197 = scalar_select %p196, %s195, 15
      %p198 = scmp.lt.s32.totalorder %s19, 0
      %s199 = scalar_select %p198, %s19, 0
      %s200 = sadd.s32 %s199, %s197
      %s201 = smul.addr %s200, 8
      %s202 = scalar_lea.vmem %s3, %s201
      %s203 = smul.u32 8, %s18
      %p204 = scmp.lt.s32.totalorder %s203, 15
      %s205 = scalar_select %p204, %s203, 15
      %s206 = smul.addr %s205, 4
      %s207 = scalar_lea.vmem %s0, %s206
      %s208 = smul.u32 8, %s18
      %p209 = scmp.lt.s32.totalorder %s19, 0
      %s210 = scalar_select %p209, %s19, 0
      %s211 = smul.addr %s210, 4
      %s212 = scalar_lea.vmem %s1, %s211
      %p213 = scmp.lt.s32.totalorder %s19, 0
      %s214 = scalar_select %p213, %s19, 0
      %s215 = scalar_lea.vmem %s2, %s214
      %s216 = smul.u32 8, %s18
      %p217 = scmp.lt.s32.totalorder %s216, 15
      %s218 = scalar_select %p217, %s216, 15
      %p219 = scmp.lt.s32.totalorder %s19, 0
      %s220 = scalar_select %p219, %s19, 0
      %s221 = sadd.s32 %s220, %s218
      %s222 = smul.addr %s221, 8
      %s223 = scalar_lea.vmem %s3, %s222
      %s224 = smul.u32 8, %s18
      %v226 = vld [vmem:[%s207] sm:$0xf]
      %v227 = vld [vmem:[%s207 + $0x4] sm:$0xf]
      %v228 = vld [vmem:[%s207 + $0x8] sm:$0xf]
      %v229 = vld [vmem:[%s207 + $0xc] sm:$0xf]
      %v230 = vld [vmem:[%s207 + $0x10] sm:$0xf]
      %v231 = vld [vmem:[%s207 + $0x14] sm:$0xf]
      %v232 = vld [vmem:[%s207 + $0x18] sm:$0xf]
      %v233 = vld [vmem:[%s207 + $0x1c] sm:$0xf]
      %v234 = vld [vmem:[%s212] sm:$0xf]
      %v235 = vld [vmem:[%s212 + $0x4] sm:$0xf]
      %v236 = vld [vmem:[%s212 + $0x8] sm:$0xf]
      %v237 = vld [vmem:[%s212 + $0xc] sm:$0xf]
      %v238 = vld [vmem:[%s212 + $0x10] sm:$0xf]
      %v239 = vld [vmem:[%s212 + $0x14] sm:$0xf]
      %v240 = vld [vmem:[%s212 + $0x18] sm:$0xf]
      %v241 = vld [vmem:[%s212 + $0x1c] sm:$0xf]
      %v242 = vld [vmem:[%s215] sm:$0x1]
      %v244 = vlaneseq
      %v245 = vshrl.u32 %v244, 7
      %v246 = vsub.s32 0, %v245
      %v247 = vrot.slane %v242, %v246
      %v257 = vunpack.c.l.b16 %v226
      %v258 = vunpack.c.l.b16 %v227
      %v259 = vunpack.c.l.b16 %v228
      %v260 = vunpack.c.l.b16 %v229
      %v261 = vunpack.c.l.b16 %v230
      %v262 = vunpack.c.l.b16 %v231
      %v263 = vunpack.c.l.b16 %v232
      %v264 = vunpack.c.l.b16 %v233
      %v265 = vpack.c.b16 %v258, %v257
      %v266 = vpack.c.b16 %v260, %v259
      %v267 = vpack.c.b16 %v262, %v261
      %v268 = vpack.c.b16 %v264, %v263
      %v277 = vunpack.c.l.b16 %v234
      %v278 = vunpack.c.l.b16 %v235
      %v279 = vunpack.c.l.b16 %v236
      %v280 = vunpack.c.l.b16 %v237
      %v281 = vunpack.c.l.b16 %v238
      %v282 = vunpack.c.l.b16 %v239
      %v283 = vunpack.c.l.b16 %v240
      %v284 = vunpack.c.l.b16 %v241
      %v285 = vpack.c.b16 %v278, %v277
      %v286 = vpack.c.b16 %v280, %v279
      %v287 = vpack.c.b16 %v282, %v281
      %v288 = vpack.c.b16 %v284, %v283
      %vm293 = vcmask 523264
      %v295 = vsel %vm293, %v265, 0
      %v298 = vsel %vm293, %v266, 0
      %v301 = vsel %vm293, %v267, 0
      %v304 = vsel %vm293, %v268, 0
      %306 = vmatprep.subr.bf16.mxu0 0
      %307 = vmatpush1.bf16.msra.mxu0 %v285
      %308 = vmatprep.subr.bf16.mxu0 0
      %309 = vmatpush1.bf16.msra.mxu0 %v286
      %310 = vmatprep.subr.bf16.mxu0 0
      %311 = vmatpush1.bf16.msra.mxu0 %v287
      %312 = vmatprep.subr.bf16.mxu0 0
      %313 = vmatpush1.bf16.msra.mxu0 %v288
      %314 = vmatprep.subr.bf16.mxu0 0
      %315 = vmatpush1.bf16.msra.mxu0 0
      %316 = vmatprep.subr.bf16.mxu0 0
      %317 = vmatpush1.bf16.msra.mxu0 0
      %318 = vmatprep.subr.bf16.mxu0 0
      %319 = vmatpush1.bf16.msra.mxu0 0
      %320 = vmatprep.subr.bf16.mxu0 0
      %321 = vmatpush1.bf16.msra.mxu0 0
      %322 = vmatprep.subr.bf16.mxu0 0
      %323 = vmatpush1.bf16.msra.mxu0 0
      %324 = vmatprep.subr.bf16.mxu0 0
      %325 = vmatpush1.bf16.msra.mxu0 0
      %326 = vmatprep.subr.bf16.mxu0 0
      %327 = vmatpush1.bf16.msra.mxu0 0
      %328 = vmatprep.subr.bf16.mxu0 0
      %329 = vmatpush1.bf16.msra.mxu0 0
      %330 = vmatprep.subr.bf16.mxu0 0
      %331 = vmatpush1.bf16.msra.mxu0 0
      %332 = vmatprep.subr.bf16.mxu0 0
      %333 = vmatpush1.bf16.msra.mxu0 0
      %334 = vmatprep.subr.bf16.mxu0 0
      %335 = vmatpush1.bf16.msra.mxu0 0
      %336 = vmatprep.subr.bf16.mxu0 0
      %337 = vmatpush1.bf16.msra.mxu0 0
      %338 = vmatprep.mubr.bf16.mxu0 0
      %339 = vmatmul.mubr.bf16.gmra.mrb[0].mxu0 %v295
      %v340 = vpop.f32.mrb[0].mxu0
      %v341 = vadd.f32 %v247, %v340
      %v342 = vpop.f32.mrb[0].mxu0
      %v343 = vpop.f32.mrb[0].mxu0
      %v344 = vadd.f32 %v247, %v343
      %v345 = vpop.f32.mrb[0].mxu0
      %346 = vmatprep.mubr.bf16.mxu0 0
      %347 = vmatmul.mubr.bf16.gmra.mrb[0].mxu0 %v298
      %v348 = vpop.f32.mrb[0].mxu0
      %v349 = vadd.f32 %v247, %v348
      %v350 = vpop.f32.mrb[0].mxu0
      %v351 = vpop.f32.mrb[0].mxu0
      %v352 = vadd.f32 %v247, %v351
      %v353 = vpop.f32.mrb[0].mxu0
      %354 = vmatprep.mubr.bf16.mxu0 0
      %355 = vmatmul.mubr.bf16.gmra.mrb[0].mxu0 %v301
      %v356 = vpop.f32.mrb[0].mxu0
      %v357 = vadd.f32 %v247, %v356
      %v358 = vpop.f32.mrb[0].mxu0
      %v359 = vpop.f32.mrb[0].mxu0
      %v360 = vadd.f32 %v247, %v359
      %v361 = vpop.f32.mrb[0].mxu0
      %362 = vmatprep.mubr.bf16.mxu0 0
      %363 = vmatmul.mubr.bf16.gmra.mrb[0].mxu0 %v304
      %v364 = vpop.f32.mrb[0].mxu0
      %v365 = vadd.f32 %v247, %v364
      %v366 = vpop.f32.mrb[0].mxu0
      %v367 = vpop.f32.mrb[0].mxu0
      %v368 = vadd.f32 %v247, %v367
      %v369 = vpop.f32.mrb[0].mxu0
      %370 = vdwg.mxu0
      %v371 = vmax.f32 %v341, 0.0
      %v372 = vmax.f32 %v344, 0.0
      %v373 = vmax.f32 %v349, 0.0
      %v374 = vmax.f32 %v352, 0.0
      %v375 = vmax.f32 %v357, 0.0
      %v376 = vmax.f32 %v360, 0.0
      %v377 = vmax.f32 %v365, 0.0
      %v378 = vmax.f32 %v368, 0.0
      %379 = vst [vmem:[%s223] sm:$0xff] %v371
      %380 = vst [vmem:[%s223 + $0x8] sm:$0xff] %v372
      %381 = vst [vmem:[%s223 + $0x10] sm:$0xff] %v373
      %382 = vst [vmem:[%s223 + $0x18] sm:$0xff] %v374
      %383 = vst [vmem:[%s223 + $0x20] sm:$0xff] %v375
      %384 = vst [vmem:[%s223 + $0x28] sm:$0xff] %v376
      %385 = vst [vmem:[%s223 + $0x30] sm:$0xff] %v377
      %386 = vst [vmem:[%s223 + $0x38] sm:$0xff] %v378
      %s387 = smul.u32 8, %s18
      %p388 = scmp.lt.s32.totalorder %s387, 15
      %s389 = scalar_select %p388, %s387, 15
      %p390 = scmp.lt.s32.totalorder %s19, 0
      %s391 = scalar_select %p390, %s19, 0
      %s392 = sadd.s32 %s391, %s389
      %s393 = smul.addr %s392, 8
      %s394 = scalar_lea.vmem %s3, %s393
      // Predicated region
      $region33: #{encoder_forward.3} parent=31 // pred_check
        %p395 = pneg %p124
      $region34: #{encoder_forward.3} parent=31 // pred_check_branch
        %397 = sbr.rel (%p395) target = $region36
      $region35: #{encoder_forward.3} parent=31 // pred_region
        %s398 = smul.u32 8, %s18
      $region36: #{encoder_forward.3} parent=31 // pred_fallthru
        _
    $region32: #{encoder_forward.3} parent=5 // pred_fallthru
      _
    %p399 = scmp.le.s32.totalorder 2, %s9
    // Predicated region
    $region37: #{encoder_forward.3} parent=5 // pred_check
      %p400 = pneg %p399
    $region38: #{encoder_forward.3} parent=5 // pred_check_branch
      %402 = sbr.rel (%p400) target = $region40
    $region39: #{encoder_forward.3} parent=5 // pred_region
      %s403 = ssub.s32 %s9, 2
      // Predicated region
      $region41: #{encoder_forward.3} parent=39 // pred_check
        %p404 = pneg %p130
      $region42: #{encoder_forward.3} parent=39 // pred_check_branch
        %406 = sbr.rel (%p404) target = $region44
      $region43: #{encoder_forward.3} parent=39 // pred_region
        %s407 = smul.u32 8, %s20
        %p408 = scmp.lt.s32.totalorder %s407, 15
        %s409 = scalar_select %p408, %s407, 15
        %p410 = scmp.lt.s32.totalorder %s21, 0
        %s411 = scalar_select %p410, %s21, 0
        %s412 = sadd.s32 %s411, %s409
        %s413 = smul.addr %s412, 8
        %s414 = scalar_lea.vmem %s3, %s413
      $region44: #{encoder_forward.3} parent=39 // pred_fallthru
        _
    $region40: #{encoder_forward.3} parent=5 // pred_fallthru
      _
  $region6: #{encoder_forward.3} parent=0 // loop_footer
    %s13 = sadd.s32 1, %s9
  $region7: #{encoder_forward.3} parent=0 // loop_footer_branch
    %8 = sbr.rel target = $region3
  $region8: #{encoder_forward.3} parent=0 // loop_exit
    _

// kernel: encoder_forward.4
$region0: #{encoder_forward.4}
  #allocation0 [shape = 'u32[]', space=smem, size = 0x4, offset = 0x4, fixed_abs, tag = 'smem constant byte address 0x4 - core index']
  #allocation1 [shape = 'u32[144,128]{1,0:T(1,128)}', space=vmem, size = 0x12000, scoped, tag = 'internal scratch']
  %s0 = inlined_call_operand.vmem [shape: bf16[32,256], index: 0, kind: input, shape index: {}]
  %s1 = inlined_call_operand.vmem [shape: bf16[256,128], index: 1, kind: input, shape index: {}]
  %s2 = inlined_call_operand.vmem [shape: f32[1,128], index: 2, kind: input, shape index: {}]
  %s3 = inlined_call_operand.vmem [shape: f32[32,128], index: 3, kind: output, shape index: {}]
  %s4 = sld [smem:[#allocation0]]
  $region45: #{encoder_forward.4} parent=0
    _
  %s6 = ssub.s32 1, %s4
  %s7 = scalar_select 0, %s6, %s4
  loop: start=0, step=1, limit=4
  $region2: #{encoder_forward.4} parent=0 // loop_pre_header
    _
  $region3: #{encoder_forward.4} parent=0 // loop_header
    %s9 = sphi 0, %s13
    %p10 = scmp.ge.s32.totalorder %s9, 4
    %s16 = sphi 0, %s28
    %s17 = sphi 0, %s24
    %s18 = sphi 0, %s16
    %s19 = sphi 0, %s17
    %s20 = sphi 0, %s18
    %s21 = sphi 0, %s19
    %s31 = sphi 0, %s33
    %s34 = sphi 0, %s31
    %s35 = sphi 0, %s34
    %s51 = sphi 0, %s35
    %s57 = sphi 0, %s59
    %s60 = sphi 0, %s57
    %s61 = sphi 0, %s60
    %s77 = sphi 0, %s61
    %s83 = sphi 0, %s85
    %s86 = sphi 0, %s83
    %s87 = sphi 0, %s86
    %s103 = sphi 0, %s87
    %s111 = sphi 0, %s113
    %s114 = sphi 0, %s111
    %s115 = sphi 0, %s114
    %s131 = sphi 0, %s115
  $region4: #{encoder_forward.4} parent=0 // loop_header_branch
    %12 = sbr.rel (%p10) target = $region8
  $region5: #{encoder_forward.4} parent=0 // loop_body
    %s14 = ssub.s32 %s9, 1
    %s15 = ssub.s32 %s9, 2
    %s22 = sadd.s32 1, %s17
    %p23 = scmp.ge.s32.totalorder %s22, 1
    %s24 = scalar_select %p23, 0, %s22
    %s25 = sadd.s32 1, %s16
    %s26 = scalar_select %p23, %s25, %s16
    %p27 = scmp.ge.s32.totalorder %s26, 2
    %s28 = scalar_select %p27, 0, %s26
    %s29 = ssub.s32 %s16, %s28
    %p30 = scmp.eq.s32.totalorder %s29, 0
    %s32 = sadd.s32 %s31, 1
    %s33 = scalar_select %p30, %s31, %s32
    %p36 = pneg %p30
    %p37 = scmp.eq.s32.totalorder %s9, 1
    %p38 = por %p36, %p37
    %p39 = scmp.ne.s32.totalorder %s31, %s34
    %p40 = scmp.eq.s32.totalorder %s9, 0
    %p41 = por %p39, %p40
    %p42 = scmp.ne.s32.totalorder %s31, %s34
    %p43 = scmp.eq.s32.totalorder %s14, 1
    %p44 = por %p42, %p43
    %p45 = scmp.ne.s32.totalorder %s34, %s35
    %p46 = scmp.eq.s32.totalorder %s14, 0
    %p47 = por %p45, %p46
    %p48 = scmp.ne.s32.totalorder %s34, %s35
    %p49 = scmp.eq.s32.totalorder %s15, 1
    %p50 = por %p48, %p49
    %p52 = scmp.ne.s32.totalorder %s35, %s51
    %p53 = scmp.eq.s32.totalorder %s15, 0
    %p54 = por %p52, %p53
    %s55 = ssub.s32 %s17, %s24
    %p56 = scmp.eq.s32.totalorder %s55, 0
    %s58 = sadd.s32 %s57, 1
    %s59 = scalar_select %p56, %s57, %s58
    %p62 = pneg %p56
    %p63 = scmp.eq.s32.totalorder %s9, 1
    %p64 = por %p62, %p63
    %p65 = scmp.ne.s32.totalorder %s57, %s60
    %p66 = scmp.eq.s32.totalorder %s9, 0
    %p67 = por %p65, %p66
    %p68 = scmp.ne.s32.totalorder %s57, %s60
    %p69 = scmp.eq.s32.totalorder %s14, 1
    %p70 = por %p68, %p69
    %p71 = scmp.ne.s32.totalorder %s60, %s61
    %p72 = scmp.eq.s32.totalorder %s14, 0
    %p73 = por %p71, %p72
    %p74 = scmp.ne.s32.totalorder %s60, %s61
    %p75 = scmp.eq.s32.totalorder %s15, 1
    %p76 = por %p74, %p75
    %p78 = scmp.ne.s32.totalorder %s61, %s77
    %p79 = scmp.eq.s32.totalorder %s15, 0
    %p80 = por %p78, %p79
    %s81 = ssub.s32 %s17, %s24
    %p82 = scmp.eq.s32.totalorder %s81, 0
    %s84 = sadd.s32 %s83, 1
    %s85 = scalar_select %p82, %s83, %s84
    %p88 = pneg %p82
    %p89 = scmp.eq.s32.totalorder %s9, 1
    %p90 = por %p88, %p89
    %p91 = scmp.ne.s32.totalorder %s83, %s86
    %p92 = scmp.eq.s32.totalorder %s9, 0
    %p93 = por %p91, %p92
    %p94 = scmp.ne.s32.totalorder %s83, %s86
    %p95 = scmp.eq.s32.totalorder %s14, 1
    %p96 = por %p94, %p95
    %p97 = scmp.ne.s32.totalorder %s86, %s87
    %p98 = scmp.eq.s32.totalorder %s14, 0
    %p99 = por %p97, %p98
    %p100 = scmp.ne.s32.totalorder %s86, %s87
    %p101 = scmp.eq.s32.totalorder %s15, 1
    %p102 = por %p100, %p101
    %p104 = scmp.ne.s32.totalorder %s87, %s103
    %p105 = scmp.eq.s32.totalorder %s15, 0
    %p106 = por %p104, %p105
    %s107 = ssub.s32 %s16, %s28
    %s108 = ssub.s32 %s17, %s24
    %s109 = sor.u32 %s107, %s108
    %p110 = scmp.eq.s32.totalorder %s109, 0
    %s112 = sadd.s32 %s111, 1
    %s113 = scalar_select %p110, %s111, %s112
    %p116 = pneg %p110
    %p117 = scmp.eq.s32.totalorder %s9, 1
    %p118 = por %p116, %p117
    %p119 = scmp.ne.s32.totalorder %s111, %s114
    %p120 = scmp.eq.s32.totalorder %s9, 0
    %p121 = por %p119, %p120
    %p122 = scmp.ne.s32.totalorder %s111, %s114
    %p123 = scmp.eq.s32.totalorder %s14, 1
    %p124 = por %p122, %p123
    %p125 = scmp.ne.s32.totalorder %s114, %s115
    %p126 = scmp.eq.s32.totalorder %s14, 0
    %p127 = por %p125, %p126
    %p128 = scmp.ne.s32.totalorder %s114, %s115
    %p129 = scmp.eq.s32.totalorder %s15, 1
    %p130 = por %p128, %p129
    %p132 = scmp.ne.s32.totalorder %s115, %s131
    %p133 = scmp.eq.s32.totalorder %s15, 0
    %p134 = por %p132, %p133
    %p135 = scmp.le.s32.totalorder 1, %s9
    %p136 = scmp.lt.s32.totalorder %s9, 3
    %p137 = pnand %p135, %p136
    %p138 = pneg %p137
    // Predicated region
    $region9: #{encoder_forward.4} parent=5 // pred_check
      _
    $region10: #{encoder_forward.4} parent=5 // pred_check_branch
      %140 = sbr.rel (%p137) target = $region12
    $region11: #{encoder_forward.4} parent=5 // pred_region
      %s141 = ssub.s32 %s9, 1
      // Predicated region
      $region13: #{encoder_forward.4} parent=11 // pred_check
        %p142 = pneg %p73
      $region14: #{encoder_forward.4} parent=11 // pred_check_branch
        %144 = sbr.rel (%p142) target = $region16
      $region15: #{encoder_forward.4} parent=11 // pred_region
        %p145 = scmp.lt.s32.totalorder %s19, 0
        %s146 = scalar_select %p145, %s19, 0
        %s147 = smul.addr %s146, 4
        %s148 = scalar_lea.vmem %s1, %s147
      $region16: #{encoder_forward.4} parent=11 // pred_fallthru
        _
      // Predicated region
      $region17: #{encoder_forward.4} parent=11 // pred_check
        %p149 = pneg %p99
      $region18: #{encoder_forward.4} parent=11 // pred_check_branch
        %151 = sbr.rel (%p149) target = $region20
      $region19: #{encoder_forward.4} parent=11 // pred_region
        %p152 = scmp.lt.s32.totalorder %s19, 0
        %s153 = scalar_select %p152, %s19, 0
        %s154 = scalar_lea.vmem %s2, %s153
      $region20: #{encoder_forward.4} parent=11 // pred_fallthru
        _
    $region12: #{encoder_forward.4} parent=5 // pred_fallthru
      _
    %p155 = scmp.lt.s32.totalorder %s9, 2
    // Predicated region
    $region21: #{encoder_forward.4} parent=5 // pred_check
      %p156 = pneg %p155
    $region22: #{encoder_forward.4} parent=5 // pred_check_branch
      %158 = sbr.rel (%p156) target = $region24
    $region23: #{encoder_forward.4} parent=5 // pred_region
      // Predicated region
      $region25: #{encoder_forward.4} parent=23 // pred_check
        %p159 = pneg %p41
      $region26: #{encoder_forward.4} parent=23 // pred_check_branch
        %161 = sbr.rel (%p159) target = $region28
      $region27: #{encoder_forward.4} parent=23 // pred_region
        %s162 = smul.u32 2, %s16
        %p163 = scmp.lt.s32.totalorder %s162, 3
        %s164 = scalar_select %p163, %s162, 3
        %s165 = smul.addr %s164, 2
        %s166 = smul.addr %s165, 4
        %s167 = scalar_lea.vmem %s0, %s166
        %s168 = smul.u32 2, %s16
      $region28: #{encoder_forward.4} parent=23 // pred_fallthru
        _
    $region24: #{encoder_forward.4} parent=5 // pred_fallthru
      _
    %p169 = scmp.le.s32.totalorder 1, %s9
    %p170 = scmp.lt.s32.totalorder %s9, 3
    %p171 = pnand %p169, %p170
    %p172 = pneg %p171
    // Predicated region
    $region29: #{encoder_forward.4} parent=5 // pred_check
      _
    $region30: #{encoder_forward.4} parent=5 // pred_check_branch
      %174 = sbr.rel (%p171) target = $region32
    $region31: #{encoder_forward.4} parent=5 // pred_region
      %s175 = ssub.s32 %s9, 1
      %s176 = smul.u32 2, %s18
      %p177 = scmp.lt.s32.totalorder %s176, 3
      %s178 = scalar_select %p177, %s176, 3
      %s179 = smul.addr %s178, 2
      %s180 = smul.addr %s179, 4
      %s181 = scalar_lea.vmem %s0, %s180
      %p182 = pneg %p47
      %p183 = pneg %p44
      %p184 = scmp.lt.s32.totalorder %s19, 0
      %s185 = scalar_select %p184, %s19, 0
      %s186 = smul.addr %s185, 4
      %s187 = scalar_lea.vmem %s1, %s186
      %p188 = pneg %p73
      %p189 = pneg %p70
      %p190 = scmp.lt.s32.totalorder %s19, 0
      %s191 = scalar_select %p190, %s19, 0
      %s192 = scalar_lea.vmem %s2, %s191
      %p193 = pneg %p99
      %p194 = pneg %p96
      %p195 = pneg %p127
      %p196 = pneg %p124
      %s197 = smul.u32 2, %s18
      %p198 = scmp.lt.s32.totalorder %s197, 3
      %s199 = scalar_select %p198, %s197, 3
      %p200 = scmp.lt.s32.totalorder %s19, 0
      %s201 = scalar_select %p200, %s19, 0
      %s202 = sadd.s32 %s201, %s199
      %s203 = smul.addr %s202, 8
      %s204 = scalar_lea.vmem %s3, %s203
      %s205 = smul.u32 2, %s18
      %p206 = scmp.lt.s32.totalorder %s205, 3
      %s207 = scalar_select %p206, %s205, 3
      %s208 = smul.addr %s207, 2
      %s209 = smul.addr %s208, 4
      %s210 = scalar_lea.vmem %s0, %s209
      %s211 = smul.u32 2, %s18
      %p212 = scmp.lt.s32.totalorder %s19, 0
      %s213 = scalar_select %p212, %s19, 0
      %s214 = smul.addr %s213, 4
      %s215 = scalar_lea.vmem %s1, %s214
      %p216 = scmp.lt.s32.totalorder %s19, 0
      %s217 = scalar_select %p216, %s19, 0
      %s218 = scalar_lea.vmem %s2, %s217
      %s219 = smul.u32 2, %s18
      %p220 = scmp.lt.s32.totalorder %s219, 3
      %s221 = scalar_select %p220, %s219, 3
      %p222 = scmp.lt.s32.totalorder %s19, 0
      %s223 = scalar_select %p222, %s19, 0
      %s224 = sadd.s32 %s223, %s221
      %s225 = smul.addr %s224, 8
      %s226 = scalar_lea.vmem %s3, %s225
      %s227 = smul.u32 2, %s18
      %v229 = vld [vmem:[%s210] sm:$0xff]
      %v230 = vld [vmem:[%s210 + $0x8] sm:$0xff]
      %v231 = vld [vmem:[%s215] sm:$0xf]
      %v232 = vld [vmem:[%s215 + $0x4] sm:$0xf]
      %v233 = vld [vmem:[%s215 + $0x8] sm:$0xf]
      %v234 = vld [vmem:[%s215 + $0xc] sm:$0xf]
      %v235 = vld [vmem:[%s215 + $0x10] sm:$0xf]
      %v236 = vld [vmem:[%s215 + $0x14] sm:$0xf]
      %v237 = vld [vmem:[%s215 + $0x18] sm:$0xf]
      %v238 = vld [vmem:[%s215 + $0x1c] sm:$0xf]
      %v239 = vld [vmem:[%s215 + $0x20] sm:$0xf]
      %v240 = vld [vmem:[%s215 + $0x24] sm:$0xf]
      %v241 = vld [vmem:[%s215 + $0x28] sm:$0xf]
      %v242 = vld [vmem:[%s215 + $0x2c] sm:$0xf]
      %v243 = vld [vmem:[%s215 + $0x30] sm:$0xf]
      %v244 = vld [vmem:[%s215 + $0x34] sm:$0xf]
      %v245 = vld [vmem:[%s215 + $0x38] sm:$0xf]
      %v246 = vld [vmem:[%s215 + $0x3c] sm:$0xf]
      %v247 = vld [vmem:[%s215 + $0x40] sm:$0xf]
      %v248 = vld [vmem:[%s215 + $0x44] sm:$0xf]
      %v249 = vld [vmem:[%s215 + $0x48] sm:$0xf]
      %v250 = vld [vmem:[%s215 + $0x4c] sm:$0xf]
      %v251 = vld [vmem:[%s215 + $0x50] sm:$0xf]
      %v252 = vld [vmem:[%s215 + $0x54] sm:$0xf]
      %v253 = vld [vmem:[%s215 + $0x58] sm:$0xf]
      %v254 = vld [vmem:[%s215 + $0x5c] sm:$0xf]
      %v255 = vld [vmem:[%s215 + $0x60] sm:$0xf]
      %v256 = vld [vmem:[%s215 + $0x64] sm:$0xf]
      %v257 = vld [vmem:[%s215 + $0x68] sm:$0xf]
      %v258 = vld [vmem:[%s215 + $0x6c] sm:$0xf]
      %v259 = vld [vmem:[%s215 + $0x70] sm:$0xf]
      %v260 = vld [vmem:[%s215 + $0x74] sm:$0xf]
      %v261 = vld [vmem:[%s215 + $0x78] sm:$0xf]
      %v262 = vld [vmem:[%s215 + $0x7c] sm:$0xf]
      %v263 = vld [vmem:[%s218] sm:$0x1]
      %v265 = vlaneseq
      %v266 = vshrl.u32 %v265, 7
      %v267 = vsub.s32 0, %v266
      %v268 = vrot.slane %v263, %v267
      %v272 = vunpack.c.l.b16 %v229
      %v273 = vunpack.c.h.b16 %v229
      %v274 = vunpack.c.l.b16 %v230
      %v275 = vunpack.c.h.b16 %v230
      %v276 = vpack.c.b16 %v274, %v272
      %v277 = vpack.c.b16 %v275, %v273
      %v312 = vunpack.c.l.b16 %v231
      %v313 = vunpack.c.l.b16 %v232
      %v314 = vunpack.c.l.b16 %v233
      %v315 = vunpack.c.l.b16 %v234
      %v316 = vunpack.c.l.b16 %v235
      %v317 = vunpack.c.l.b16 %v236
      %v318 = vunpack.c.l.b16 %v237
      %v319 = vunpack.c.l.b16 %v238
      %v320 = vunpack.c.l.b16 %v239
      %v321 = vunpack.c.l.b16 %v240
      %v322 = vunpack.c.l.b16 %v241
      %v323 = vunpack.c.l.b16 %v242
      %v324 = vunpack.c.l.b16 %v243
      %v325 = vunpack.c.l.b16 %v244
      %v326 = vunpack.c.l.b16 %v245
      %v327 = vunpack.c.l.b16 %v246
      %v328 = vunpack.c.l.b16 %v247
      %v329 = vunpack.c.l.b16 %v248
      %v330 = vunpack.c.l.b16 %v249
      %v331 = vunpack.c.l.b16 %v250
      %v332 = vunpack.c.l.b16 %v251
      %v333 = vunpack.c.l.b16 %v252
      %v334 = vunpack.c.l.b16 %v253
      %v335 = vunpack.c.l.b16 %v254
      %v336 = vunpack.c.l.b16 %v255
      %v337 = vunpack.c.l.b16 %v256
      %v338 = vunpack.c.l.b16 %v257
      %v339 = vunpack.c.l.b16 %v258
      %v340 = vunpack.c.l.b16 %v259
      %v341 = vunpack.c.l.b16 %v260
      %v342 = vunpack.c.l.b16 %v261
      %v343 = vunpack.c.l.b16 %v262
      %v344 = vpack.c.b16 %v313, %v312
      %v345 = vpack.c.b16 %v315, %v314
      %v346 = vpack.c.b16 %v317, %v316
      %v347 = vpack.c.b16 %v319, %v318
      %v348 = vpack.c.b16 %v321, %v320
      %v349 = vpack.c.b16 %v323, %v322
      %v350 = vpack.c.b16 %v325, %v324
      %v351 = vpack.c.b16 %v327, %v326
      %v352 = vpack.c.b16 %v329, %v328
      %v353 = vpack.c.b16 %v331, %v330
      %v354 = vpack.c.b16 %v333, %v332
      %v355 = vpack.c.b16 %v335, %v334
      %v356 = vpack.c.b16 %v337, %v336
      %v357 = vpack.c.b16 %v339, %v338
      %v358 = vpack.c.b16 %v341, %v340
      %v359 = vpack.c.b16 %v343, %v342
      %376 = vmatprep.subr.bf16.mxu0 0
      %377 = vmatpush1.bf16.msra.mxu0 %v344
      %378 = vmatprep.subr.bf16.mxu0 0
      %379 = vmatpush1.bf16.msra.mxu0 %v345
      %380 = vmatprep.subr.bf16.mxu0 0
      %381 = vmatpush1.bf16.msra.mxu0 %v346
      %382 = vmatprep.subr.bf16.mxu0 0
      %383 = vmatpush1.bf16.msra.mxu0 %v347
      %384 = vmatprep.subr.bf16.mxu0 0
      %385 = vmatpush1.bf16.msra.mxu0 %v348
      %386 = vmatprep.subr.bf16.mxu0 0
      %387 = vmatpush1.bf16.msra.mxu0 %v349
      %388 = vmatprep.subr.bf16.mxu0 0
      %389 = vmatpush1.bf16.msra.mxu0 %v350
      %390 = vmatprep.subr.bf16.mxu0 0
      %391 = vmatpush1.bf16.msra.mxu0 %v351
      %392 = vmatprep.subr.bf16.mxu0 0
      %393 = vmatpush1.bf16.msra.mxu0 %v352
      %394 = vmatprep.subr.bf16.mxu0 0
      %395 = vmatpush1.bf16.msra.mxu0 %v353
      %396 = vmatprep.subr.bf16.mxu0 0
      %397 = vmatpush1.bf16.msra.mxu0 %v354
      %398 = vmatprep.subr.bf16.mxu0 0
      %399 = vmatpush1.bf16.msra.mxu0 %v355
      %400 = vmatprep.subr.bf16.mxu0 0
      %401 = vmatpush1.bf16.msra.mxu0 %v356
      %402 = vmatprep.subr.bf16.mxu0 0
      %403 = vmatpush1.bf16.msra.mxu0 %v357
      %404 = vmatprep.subr.bf16.mxu0 0
      %405 = vmatpush1.bf16.msra.mxu0 %v358
      %406 = vmatprep.subr.bf16.mxu0 0
      %407 = vmatpush1.bf16.msra.mxu0 %v359
      %408 = vmatprep.mubr.bf16.mxu0 %v277
      %409 = vmatmul.mubr.bf16.gmra.mrb[0].mxu0 %v276
      %v410 = vpop.f32.mrb[0].mxu0
      %v411 = vadd.f32 %v268, %v410
      %v412 = vpop.f32.mrb[0].mxu0
      %v413 = vpop.f32.mrb[0].mxu0
      %v414 = vadd.f32 %v268, %v413
      %v415 = vpop.f32.mrb[0].mxu0
      %416 = vdwg.mxu0
      %v417 = vmax.f32 %v411, 0.0
      %v418 = vmax.f32 %v414, 0.0
      %419 = vst [vmem:[%s226] sm:$0xff] %v417
      %420 = vst [vmem:[%s226 + $0x8] sm:$0xff] %v418
      %s421 = smul.u32 2, %s18
      %p422 = scmp.lt.s32.totalorder %s421, 3
      %s423 = scalar_select %p422, %s421, 3
      %p424 = scmp.lt.s32.totalorder %s19, 0
      %s425 = scalar_select %p424, %s19, 0
      %s426 = sadd.s32 %s425, %s423
      %s427 = smul.addr %s426, 8
      %s428 = scalar_lea.vmem %s3, %s427
      // Predicated region
      $region33: #{encoder_forward.4} parent=31 // pred_check
        %p429 = pneg %p124
      $region34: #{encoder_forward.4} parent=31 // pred_check_branch
        %431 = sbr.rel (%p429) target = $region36
      $region35: #{encoder_forward.4} parent=31 // pred_region
        %s432 = smul.u32 2, %s18
      $region36: #{encoder_forward.4} parent=31 // pred_fallthru
        _
    $region32: #{encoder_forward.4} parent=5 // pred_fallthru
      _
    %p433 = scmp.le.s32.totalorder 2, %s9
    // Predicated region
    $region37: #{encoder_forward.4} parent=5 // pred_check
      %p434 = pneg %p433
    $region38: #{encoder_forward.4} parent=5 // pred_check_branch
      %436 = sbr.rel (%p434) target = $region40
    $region39: #{encoder_forward.4} parent=5 // pred_region
      %s437 = ssub.s32 %s9, 2
      // Predicated region
      $region41: #{encoder_forward.4} parent=39 // pred_check
        %p438 = pneg %p130
      $region42: #{encoder_forward.4} parent=39 // pred_check_branch
        %440 = sbr.rel (%p438) target = $region44
      $region43: #{encoder_forward.4} parent=39 // pred_region
        %s441 = smul.u32 2, %s20
        %p442 = scmp.lt.s32.totalorder %s441, 3
        %s443 = scalar_select %p442, %s441, 3
        %p444 = scmp.lt.s32.totalorder %s21, 0
        %s445 = scalar_select %p444, %s21, 0
        %s446 = sadd.s32 %s445, %s443
        %s447 = smul.addr %s446, 8
        %s448 = scalar_lea.vmem %s3, %s447
      $region44: #{encoder_forward.4} parent=39 // pred_fallthru
        _
    $region40: #{encoder_forward.4} parent=5 // pred_fallthru
      _
  $region6: #{encoder_forward.4} parent=0 // loop_footer
    %s13 = sadd.s32 1, %s9
  $region7: #{encoder_forward.4} parent=0 // loop_footer_branch
    %8 = sbr.rel target = $region3
  $region8: #{encoder_forward.4} parent=0 // loop_exit
    _

// kernel: encoder_forward.5
$region0: #{encoder_forward.5}
  #allocation0 [shape = 'u32[]', space=smem, size = 0x4, offset = 0x4, fixed_abs, tag = 'smem constant byte address 0x4 - core index']
  #allocation1 [shape = 'u32[144,128]{1,0:T(1,128)}', space=vmem, size = 0x12000, scoped, tag = 'internal scratch']
  %s0 = inlined_call_operand.vmem [shape: f32[2,42,128], index: 0, kind: input, shape index: {}]
  %s1 = inlined_call_operand.vmem [shape: bf16[1152,128], index: 1, kind: input, shape index: {}]
  %s2 = inlined_call_operand.vmem [shape: f32[1,128], index: 2, kind: input, shape index: {}]
  %s3 = inlined_call_operand.vmem [shape: bf16[2,1152,128], index: 3, kind: input, shape index: {}]
  %s4 = inlined_call_operand.vmem [shape: bf16[2,128,128], index: 4, kind: input, shape index: {}]
  %s5 = inlined_call_operand.vmem [shape: f32[2,24,128], index: 5, kind: output, shape index: {}]
  %s6 = sld [smem:[#allocation0]]
  $region53: #{encoder_forward.5} parent=0
    _
  %s8 = ssub.s32 1, %s6
  %s9 = scalar_select 0, %s8, %s6
  loop: start=0, step=1, limit=4
  $region2: #{encoder_forward.5} parent=0 // loop_pre_header
    _
  $region3: #{encoder_forward.5} parent=0 // loop_header
    %s11 = sphi 0, %s15
    %p12 = scmp.ge.s32.totalorder %s11, 4
    %s21 = sphi 0, %s23
    %s24 = sphi 0, %s21
    %s25 = sphi 0, %s24
    %s41 = sphi 0, %s25
    %s45 = sphi 0, %s45
    %s47 = sphi 0, %s45
    %s48 = sphi 0, %s47
    %s62 = sphi 0, %s48
    %s66 = sphi 0, %s66
    %s68 = sphi 0, %s66
    %s69 = sphi 0, %s68
    %s83 = sphi 0, %s69
    %s87 = sphi 0, %s87
    %s89 = sphi 0, %s87
    %s90 = sphi 0, %s89
    %s104 = sphi 0, %s90
    %s108 = sphi 0, %s108
    %s110 = sphi 0, %s108
    %s111 = sphi 0, %s110
    %s125 = sphi 0, %s111
    %s131 = sphi 0, %s133
    %s134 = sphi 0, %s131
    %s135 = sphi 0, %s134
    %s151 = sphi 0, %s135
  $region4: #{encoder_forward.5} parent=0 // loop_header_branch
    %14 = sbr.rel (%p12) target = $region8
  $region5: #{encoder_forward.5} parent=0 // loop_body
    %s16 = ssub.s32 %s11, 1
    %s17 = ssub.s32 %s11, 2
    %s18 = sadd.s32 %s11, 1
    %s19 = ssub.s32 %s11, %s18
    %p20 = scmp.eq.s32.totalorder %s19, 0
    %s22 = sadd.s32 %s21, 1
    %s23 = scalar_select %p20, %s21, %s22
    %p26 = pneg %p20
    %p27 = scmp.eq.s32.totalorder %s11, 1
    %p28 = por %p26, %p27
    %p29 = scmp.ne.s32.totalorder %s21, %s24
    %p30 = scmp.eq.s32.totalorder %s11, 0
    %p31 = por %p29, %p30
    %p32 = scmp.ne.s32.totalorder %s21, %s24
    %p33 = scmp.eq.s32.totalorder %s16, 1
    %p34 = por %p32, %p33
    %p35 = scmp.ne.s32.totalorder %s24, %s25
    %p36 = scmp.eq.s32.totalorder %s16, 0
    %p37 = por %p35, %p36
    %p38 = scmp.ne.s32.totalorder %s24, %s25
    %p39 = scmp.eq.s32.totalorder %s17, 1
    %p40 = por %p38, %p39
    %p42 = scmp.ne.s32.totalorder %s25, %s41
    %p43 = scmp.eq.s32.totalorder %s17, 0
    %p44 = por %p42, %p43
    %s46 = sadd.s32 %s45, 1
    %p49 = scmp.eq.s32.totalorder %s11, 1
    %p50 = scmp.ne.s32.totalorder %s45, %s47
    %p51 = scmp.eq.s32.totalorder %s11, 0
    %p52 = por %p50, %p51
    %p53 = scmp.ne.s32.totalorder %s45, %s47
    %p54 = scmp.eq.s32.totalorder %s16, 1
    %p55 = por %p53, %p54
    %p56 = scmp.ne.s32.totalorder %s47, %s48
    %p57 = scmp.eq.s32.totalorder %s16, 0
    %p58 = por %p56, %p57
    %p59 = scmp.ne.s32.totalorder %s47, %s48
    %p60 = scmp.eq.s32.totalorder %s17, 1
    %p61 = por %p59, %p60
    %p63 = scmp.ne.s32.totalorder %s48, %s62
    %p64 = scmp.eq.s32.totalorder %s17, 0
    %p65 = por %p63, %p64
    %s67 = sadd.s32 %s66, 1
    %p70 = scmp.eq.s32.totalorder %s11, 1
    %p71 = scmp.ne.s32.totalorder %s66, %s68
    %p72 = scmp.eq.s32.totalorder %s11, 0
    %p73 = por %p71, %p72
    %p74 = scmp.ne.s32.totalorder %s66, %s68
    %p75 = scmp.eq.s32.totalorder %s16, 1
    %p76 = por %p74, %p75
    %p77 = scmp.ne.s32.totalorder %s68, %s69
    %p78 = scmp.eq.s32.totalorder %s16, 0
    %p79 = por %p77, %p78
    %p80 = scmp.ne.s32.totalorder %s68, %s69
    %p81 = scmp.eq.s32.totalorder %s17, 1
    %p82 = por %p80, %p81
    %p84 = scmp.ne.s32.totalorder %s69, %s83
    %p85 = scmp.eq.s32.totalorder %s17, 0
    %p86 = por %p84, %p85
    %s88 = sadd.s32 %s87, 1
    %p91 = scmp.eq.s32.totalorder %s11, 1
    %p92 = scmp.ne.s32.totalorder %s87, %s89
    %p93 = scmp.eq.s32.totalorder %s11, 0
    %p94 = por %p92, %p93
    %p95 = scmp.ne.s32.totalorder %s87, %s89
    %p96 = scmp.eq.s32.totalorder %s16, 1
    %p97 = por %p95, %p96
    %p98 = scmp.ne.s32.totalorder %s89, %s90
    %p99 = scmp.eq.s32.totalorder %s16, 0
    %p100 = por %p98, %p99
    %p101 = scmp.ne.s32.totalorder %s89, %s90
    %p102 = scmp.eq.s32.totalorder %s17, 1
    %p103 = por %p101, %p102
    %p105 = scmp.ne.s32.totalorder %s90, %s104
    %p106 = scmp.eq.s32.totalorder %s17, 0
    %p107 = por %p105, %p106
    %s109 = sadd.s32 %s108, 1
    %p112 = scmp.eq.s32.totalorder %s11, 1
    %p113 = scmp.ne.s32.totalorder %s108, %s110
    %p114 = scmp.eq.s32.totalorder %s11, 0
    %p115 = por %p113, %p114
    %p116 = scmp.ne.s32.totalorder %s108, %s110
    %p117 = scmp.eq.s32.totalorder %s16, 1
    %p118 = por %p116, %p117
    %p119 = scmp.ne.s32.totalorder %s110, %s111
    %p120 = scmp.eq.s32.totalorder %s16, 0
    %p121 = por %p119, %p120
    %p122 = scmp.ne.s32.totalorder %s110, %s111
    %p123 = scmp.eq.s32.totalorder %s17, 1
    %p124 = por %p122, %p123
    %p126 = scmp.ne.s32.totalorder %s111, %s125
    %p127 = scmp.eq.s32.totalorder %s17, 0
    %p128 = por %p126, %p127
    %s129 = ssub.s32 %s11, %s18
    %p130 = scmp.eq.s32.totalorder %s129, 0
    %s132 = sadd.s32 %s131, 1
    %s133 = scalar_select %p130, %s131, %s132
    %p136 = pneg %p130
    %p137 = scmp.eq.s32.totalorder %s11, 1
    %p138 = por %p136, %p137
    %p139 = scmp.ne.s32.totalorder %s131, %s134
    %p140 = scmp.eq.s32.totalorder %s11, 0
    %p141 = por %p139, %p140
    %p142 = scmp.ne.s32.totalorder %s131, %s134
    %p143 = scmp.eq.s32.totalorder %s16, 1
    %p144 = por %p142, %p143
    %p145 = scmp.ne.s32.totalorder %s134, %s135
    %p146 = scmp.eq.s32.totalorder %s16, 0
    %p147 = por %p145, %p146
    %p148 = scmp.ne.s32.totalorder %s134, %s135
    %p149 = scmp.eq.s32.totalorder %s17, 1
    %p150 = por %p148, %p149
    %p152 = scmp.ne.s32.totalorder %s135, %s151
    %p153 = scmp.eq.s32.totalorder %s17, 0
    %p154 = por %p152, %p153
    %p155 = scmp.le.s32.totalorder 1, %s11
    %p156 = scmp.lt.s32.totalorder %s11, 3
    %p157 = pnand %p155, %p156
    %p158 = pneg %p157
    // Predicated region
    $region9: #{encoder_forward.5} parent=5 // pred_check
      _
    $region10: #{encoder_forward.5} parent=5 // pred_check_branch
      %160 = sbr.rel (%p157) target = $region12
    $region11: #{encoder_forward.5} parent=5 // pred_region
      %s161 = ssub.s32 %s11, 1
      // Predicated region
      $region13: #{encoder_forward.5} parent=11 // pred_check
        %p162 = pneg %p58
      $region14: #{encoder_forward.5} parent=11 // pred_check_branch
        %164 = sbr.rel (%p162) target = $region16
      $region15: #{encoder_forward.5} parent=11 // pred_region
        _
      $region16: #{encoder_forward.5} parent=11 // pred_fallthru
        _
      // Predicated region
      $region17: #{encoder_forward.5} parent=11 // pred_check
        %p165 = pneg %p79
      $region18: #{encoder_forward.5} parent=11 // pred_check_branch
        %167 = sbr.rel (%p165) target = $region20
      $region19: #{encoder_forward.5} parent=11 // pred_region
        _
      $region20: #{encoder_forward.5} parent=11 // pred_fallthru
        _
      // Predicated region
      $region21: #{encoder_forward.5} parent=11 // pred_check
        %p168 = pneg %p100
      $region22: #{encoder_forward.5} parent=11 // pred_check_branch
        %170 = sbr.rel (%p168) target = $region24
      $region23: #{encoder_forward.5} parent=11 // pred_region
        _
      $region24: #{encoder_forward.5} parent=11 // pred_fallthru
        _
      // Predicated region
      $region25: #{encoder_forward.5} parent=11 // pred_check
        %p171 = pneg %p121
      $region26: #{encoder_forward.5} parent=11 // pred_check_branch
        %173 = sbr.rel (%p171) target = $region28
      $region27: #{encoder_forward.5} parent=11 // pred_region
        _
      $region28: #{encoder_forward.5} parent=11 // pred_fallthru
        _
    $region12: #{encoder_forward.5} parent=5 // pred_fallthru
      _
    %p174 = scmp.lt.s32.totalorder %s11, 2
    // Predicated region
    $region29: #{encoder_forward.5} parent=5 // pred_check
      %p175 = pneg %p174
    $region30: #{encoder_forward.5} parent=5 // pred_check_branch
      %177 = sbr.rel (%p175) target = $region32
    $region31: #{encoder_forward.5} parent=5 // pred_region
      // Predicated region
      $region33: #{encoder_forward.5} parent=31 // pred_check
        %p178 = pneg %p31
      $region34: #{encoder_forward.5} parent=31 // pred_check_branch
        %180 = sbr.rel (%p178) target = $region36
      $region35: #{encoder_forward.5} parent=31 // pred_region
        %p181 = scmp.lt.s32.totalorder %s11, 1
        %s182 = scalar_select %p181, %s11, 1
        %s183 = smul.addr %s182, 6
        %s184 = smul.addr %s183, 8
        %s185 = scalar_lea.vmem %s0, %s184
      $region36: #{encoder_forward.5} parent=31 // pred_fallthru
        _
    $region32: #{encoder_forward.5} parent=5 // pred_fallthru
      _
    %p186 = scmp.le.s32.totalorder 1, %s11
    %p187 = scmp.lt.s32.totalorder %s11, 3
    %p188 = pnand %p186, %p187
    %p189 = pneg %p188
    // Predicated region
    $region37: #{encoder_forward.5} parent=5 // pred_check
      _
    $region38: #{encoder_forward.5} parent=5 // pred_check_branch
      %191 = sbr.rel (%p188) target = $region40
    $region39: #{encoder_forward.5} parent=5 // pred_region
      %s192 = ssub.s32 %s11, 1
      %p193 = scmp.lt.s32.totalorder %s16, 1
      %s194 = scalar_select %p193, %s16, 1
      %s195 = smul.addr %s194, 6
      %s196 = smul.addr %s195, 8
      %s197 = scalar_lea.vmem %s0, %s196
      %p198 = pneg %p37
      %p199 = pneg %p34
      %p200 = pneg %p58
      %p201 = pneg %p55
      %p202 = pneg %p79
      %p203 = pneg %p76
      %p204 = pneg %p100
      %p205 = pneg %p97
      %p206 = pneg %p121
      %p207 = pneg %p118
      %p208 = pneg %p147
      %p209 = pneg %p144
      %p210 = scmp.lt.s32.totalorder %s16, 1
      %s211 = scalar_select %p210, %s16, 1
      %s212 = smul.addr %s211, 3
      %s213 = smul.addr %s212, 8
      %s214 = scalar_lea.vmem %s5, %s213
      %p215 = scmp.lt.s32.totalorder %s16, 1
      %s216 = scalar_select %p215, %s16, 1
      %s217 = smul.addr %s216, 6
      %s218 = smul.addr %s217, 8
      %s219 = scalar_lea.vmem %s0, %s218
      %p220 = scmp.lt.s32.totalorder %s16, 1
      %s221 = scalar_select %p220, %s16, 1
      %s222 = smul.addr %s221, 3
      %s223 = smul.addr %s222, 8
      %s224 = scalar_lea.vmem %s5, %s223
      %v226 = vld [vmem:[%s219] sm:$0xff]
      %v227 = vld [vmem:[%s219 + $0x8] sm:$0xff]
      %v228 = vld [vmem:[%s219 + $0x10] sm:$0xff]
      %v229 = vld [vmem:[%s219 + $0x18] sm:$0xff]
      %v230 = vld [vmem:[%s219 + $0x20] sm:$0xff]
      %v231 = vlaneseq
      %v232 = vshrl.u32 %v231, 7
      %v233 = vadd.s32 %v232, 8
      %v234 = vadd.s32 %v232, 16
      %vm235 = vcmp.lt.s32.totalorder %v232, 0
      %v236 = vsub.s32 0, %v232
      %v237 = vsel %vm235, %v236, %v232
      %v238 = vmul.u32.u64.compose %v237, 2863311531
      %v239 = vextract.low.u32 %v238
      %v240 = vextract.high.u32 %v238
      %v241 = vshrl.u32 %v240, 2
      %v242 = vmul.u32 %v241, 6
      %v243 = vsub.s32 %v237, %v242
      %v244 = vsub.s32 0, %v243
      %v245 = vsel %vm235, %v244, %v243
      %vm246 = vcmp.lt.s32.totalorder %v233, 0
      %v247 = vsub.s32 0, %v233
      %v248 = vsel %vm246, %v247, %v233
      %v249 = vmul.u32.u64.compose %v248, 2863311531
      %v250 = vextract.low.u32 %v249
      %v251 = vextract.high.u32 %v249
      %v252 = vshrl.u32 %v251, 2
      %v253 = vmul.u32 %v252, 6
      %v254 = vsub.s32 %v248, %v253
      %v255 = vsub.s32 0, %v254
      %v256 = vsel %vm246, %v255, %v254
      %vm257 = vcmp.lt.s32.totalorder %v234, 0
      %v258 = vsub.s32 0, %v234
      %v259 = vsel %vm257, %v258, %v234
      %v260 = vmul.u32.u64.compose %v259, 2863311531
      %v261 = vextract.low.u32 %v260
      %v262 = vextract.high.u32 %v260
      %v263 = vshrl.u32 %v262, 2
      %v264 = vmul.u32 %v263, 6
      %v265 = vsub.s32 %v259, %v264
      %v266 = vsub.s32 0, %v265
      %v267 = vsel %vm257, %v266, %v265
      %vm268 = vcmp.ne.s32.totalorder %v245, 0
      %vm269 = vcmp.ne.s32.totalorder %v256, 0
      %vm270 = vcmp.ne.s32.totalorder %v267, 0
      %vm271 = vcmp.lt.s32.totalorder %v245, 0
      %vm272 = vcmp.lt.s32.totalorder %v256, 0
      %vm273 = vcmp.lt.s32.totalorder %v267, 0
      %vm274 = vmand %vm271, %vm268
      %vm275 = vmand %vm272, %vm269
      %vm276 = vmand %vm273, %vm270
      %v277 = vadd.s32 %v245, 6
      %v278 = vadd.s32 %v256, 6
      %v279 = vadd.s32 %v267, 6
      %v280 = vsel %vm274, %v277, %v245
      %v281 = vsel %vm275, %v278, %v256
      %v282 = vsel %vm276, %v279, %v267
      %vm283 = vcmp.lt.s32.totalorder %v280, 4
      %vm284 = vcmp.lt.s32.totalorder %v281, 4
      %vm285 = vcmp.lt.s32.totalorder %v282, 4
      %vm290 = vcmask 1046528
      %v291 = vrot.slane %v226, 1
      %v292 = vrot.slane %v227, 1
      %v293 = vsel %vm290, %v291, %v292
      %v294 = vrot.slane %v228, 1
      %v295 = vsel %vm290, %v292, %v294
      %v296 = vrot.slane %v229, 1
      %v297 = vsel %vm290, %v294, %v296
      %vm301 = vcmask 1045504
      %v302 = vrot.slane %v226, 2
      %v303 = vrot.slane %v227, 2
      %v304 = vsel %vm301, %v302, %v303
      %v305 = vrot.slane %v228, 2
      %v306 = vsel %vm301, %v303, %v305
      %v307 = vrot.slane %v229, 2
      %v308 = vsel %vm301, %v305, %v307
      %vm312 = vcmask 1041408
      %v313 = vrot.slane %v226, 6
      %v314 = vrot.slane %v227, 6
      %v315 = vsel %vm312, %v313, %v314
      %v316 = vrot.slane %v228, 6
      %v317 = vsel %vm312, %v314, %v316
      %v318 = vrot.slane %v229, 6
      %v319 = vsel %vm312, %v316, %v318
      %vm323 = vcmask 1040384
      %v324 = vrot.slane %v226, 7
      %v325 = vrot.slane %v227, 7
      %v326 = vsel %vm323, %v324, %v325
      %v327 = vrot.slane %v228, 7
      %v328 = vsel %vm323, %v325, %v327
      %v329 = vrot.slane %v229, 7
      %v330 = vsel %vm323, %v327, %v329
      %vm335 = vcmask 1043456
      %v336 = vrot.slane %v227, 4
      %v337 = vrot.slane %v228, 4
      %v338 = vsel %vm335, %v336, %v337
      %v339 = vrot.slane %v229, 4
      %v340 = vsel %vm335, %v337, %v339
      %v341 = vrot.slane %v230, 4
      %v342 = vsel %vm335, %v339, %v341
      %vm346 = vcmask 1042432
      %v347 = vrot.slane %v227, 5
      %v348 = vrot.slane %v228, 5
      %v349 = vsel %vm346, %v347, %v348
      %v350 = vrot.slane %v229, 5
      %v351 = vsel %vm346, %v348, %v350
      %v352 = vrot.slane %v230, 5
      %v353 = vsel %vm346, %v350, %v352
      %v357 = vrot.slane %v230, 6
      %v358 = vsel %vm312, %v318, %v357
      %v360 = vpack.c.bf16 %v227, %v226
      %v361 = vpack.c.bf16 %v295, %v293
      %v362 = vpack.c.bf16 %v306, %v304
      %v363 = vpack.c.bf16 %v317, %v315
      %v364 = vpack.c.bf16 %v328, %v326
      %v365 = vpack.c.bf16 %v228, %v227
      %v366 = vpack.c.bf16 %v340, %v338
      %v367 = vpack.c.bf16 %v351, %v349
      %v368 = vpack.c.bf16 %v319, %v317
      %v369 = vpack.c.bf16 %v228, %v228
      %v370 = vpack.c.bf16 %v297, %v297
      %v371 = vpack.c.bf16 %v308, %v308
      %v372 = vpack.c.bf16 %v319, %v319
      %v373 = vpack.c.bf16 %v330, %v330
      %v374 = vpack.c.bf16 %v229, %v229
      %v375 = vpack.c.bf16 %v342, %v342
      %v376 = vpack.c.bf16 %v353, %v353
      %v377 = vpack.c.bf16 %v358, %v358
      %v378 = vld [vmem:[%s1] sm:$0xf]
      %v379 = vld [vmem:[%s1 + $0x4] sm:$0xf]
      %v380 = vld [vmem:[%s1 + $0x8] sm:$0xf]
      %v381 = vld [vmem:[%s1 + $0xc] sm:$0xf]
      %v382 = vld [vmem:[%s1 + $0x10] sm:$0xf]
      %v383 = vld [vmem:[%s1 + $0x14] sm:$0xf]
      %v384 = vld [vmem:[%s1 + $0x18] sm:$0xf]
      %v385 = vld [vmem:[%s1 + $0x1c] sm:$0xf]
      %v386 = vld [vmem:[%s1 + $0x20] sm:$0xf]
      %v387 = vld [vmem:[%s1 + $0x24] sm:$0xf]
      %v388 = vld [vmem:[%s1 + $0x28] sm:$0xf]
      %v389 = vld [vmem:[%s1 + $0x2c] sm:$0xf]
      %v390 = vld [vmem:[%s1 + $0x30] sm:$0xf]
      %v391 = vld [vmem:[%s1 + $0x34] sm:$0xf]
      %v392 = vld [vmem:[%s1 + $0x38] sm:$0xf]
      %v393 = vld [vmem:[%s1 + $0x3c] sm:$0xf]
      %v394 = vld [vmem:[%s1 + $0x40] sm:$0xf]
      %v395 = vld [vmem:[%s1 + $0x44] sm:$0xf]
      %v396 = vld [vmem:[%s1 + $0x48] sm:$0xf]
      %v397 = vld [vmem:[%s1 + $0x4c] sm:$0xf]
      %v398 = vld [vmem:[%s1 + $0x50] sm:$0xf]
      %v399 = vld [vmem:[%s1 + $0x54] sm:$0xf]
      %v400 = vld [vmem:[%s1 + $0x58] sm:$0xf]
      %v401 = vld [vmem:[%s1 + $0x5c] sm:$0xf]
      %v402 = vld [vmem:[%s1 + $0x60] sm:$0xf]
      %v403 = vld [vmem:[%s1 + $0x64] sm:$0xf]
      %v404 = vld [vmem:[%s1 + $0x68] sm:$0xf]
      %v405 = vld [vmem:[%s1 + $0x6c] sm:$0xf]
      %v406 = vld [vmem:[%s1 + $0x70] sm:$0xf]
      %v407 = vld [vmem:[%s1 + $0x74] sm:$0xf]
      %v408 = vld [vmem:[%s1 + $0x78] sm:$0xf]
      %v409 = vld [vmem:[%s1 + $0x7c] sm:$0xf]
      %v410 = vld [vmem:[%s1 + $0x80] sm:$0xf]
      %v411 = vld [vmem:[%s1 + $0x84] sm:$0xf]
      %v412 = vld [vmem:[%s1 + $0x88] sm:$0xf]
      %v413 = vld [vmem:[%s1 + $0x8c] sm:$0xf]
      %v414 = vld [vmem:[%s1 + $0x90] sm:$0xf]
      %v415 = vld [vmem:[%s1 + $0x94] sm:$0xf]
      %v416 = vld [vmem:[%s1 + $0x98] sm:$0xf]
      %v417 = vld [vmem:[%s1 + $0x9c] sm:$0xf]
      %v418 = vld [vmem:[%s1 + $0xa0] sm:$0xf]
      %v419 = vld [vmem:[%s1 + $0xa4] sm:$0xf]
      %v420 = vld [vmem:[%s1 + $0xa8] sm:$0xf]
      %v421 = vld [vmem:[%s1 + $0xac] sm:$0xf]
      %v422 = vld [vmem:[%s1 + $0xb0] sm:$0xf]
      %v423 = vld [vmem:[%s1 + $0xb4] sm:$0xf]
      %v424 = vld [vmem:[%s1 + $0xb8] sm:$0xf]
      %v425 = vld [vmem:[%s1 + $0xbc] sm:$0xf]
      %v426 = vld [vmem:[%s1 + $0xc0] sm:$0xf]
      %v427 = vld [vmem:[%s1 + $0xc4] sm:$0xf]
      %v428 = vld [vmem:[%s1 + $0xc8] sm:$0xf]
      %v429 = vld [vmem:[%s1 + $0xcc] sm:$0xf]
      %v430 = vld [vmem:[%s1 + $0xd0] sm:$0xf]
      %v431 = vld [vmem:[%s1 + $0xd4] sm:$0xf]
      %v432 = vld [vmem:[%s1 + $0xd8] sm:$0xf]
      %v433 = vld [vmem:[%s1 + $0xdc] sm:$0xf]
      %v434 = vld [vmem:[%s1 + $0xe0] sm:$0xf]
      %v435 = vld [vmem:[%s1 + $0xe4] sm:$0xf]
      %v436 = vld [vmem:[%s1 + $0xe8] sm:$0xf]
      %v437 = vld [vmem:[%s1 + $0xec] sm:$0xf]
      %v438 = vld [vmem:[%s1 + $0xf0] sm:$0xf]
      %v439 = vld [vmem:[%s1 + $0xf4] sm:$0xf]
      %v440 = vld [vmem:[%s1 + $0xf8] sm:$0xf]
      %v441 = vld [vmem:[%s1 + $0xfc] sm:$0xf]
      %v442 = vld [vmem:[%s1 + $0x100] sm:$0xf]
      %v443 = vld [vmem:[%s1 + $0x104] sm:$0xf]
      %v444 = vld [vmem:[%s1 + $0x108] sm:$0xf]
      %v445 = vld [vmem:[%s1 + $0x10c] sm:$0xf]
      %v446 = vld [vmem:[%s1 + $0x110] sm:$0xf]
      %v447 = vld [vmem:[%s1 + $0x114] sm:$0xf]
      %v448 = vld [vmem:[%s1 + $0x118] sm:$0xf]
      %v449 = vld [vmem:[%s1 + $0x11c] sm:$0xf]
      %v450 = vld [vmem:[%s1 + $0x120] sm:$0xf]
      %v451 = vld [vmem:[%s1 + $0x124] sm:$0xf]
      %v452 = vld [vmem:[%s1 + $0x128] sm:$0xf]
      %v453 = vld [vmem:[%s1 + $0x12c] sm:$0xf]
      %v454 = vld [vmem:[%s1 + $0x130] sm:$0xf]
      %v455 = vld [vmem:[%s1 + $0x134] sm:$0xf]
      %v456 = vld [vmem:[%s1 + $0x138] sm:$0xf]
      %v457 = vld [vmem:[%s1 + $0x13c] sm:$0xf]
      %v458 = vld [vmem:[%s1 + $0x140] sm:$0xf]
      %v459 = vld [vmem:[%s1 + $0x144] sm:$0xf]
      %v460 = vld [vmem:[%s1 + $0x148] sm:$0xf]
      %v461 = vld [vmem:[%s1 + $0x14c] sm:$0xf]
      %v462 = vld [vmem:[%s1 + $0x150] sm:$0xf]
      %v463 = vld [vmem:[%s1 + $0x154] sm:$0xf]
      %v464 = vld [vmem:[%s1 + $0x158] sm:$0xf]
      %v465 = vld [vmem:[%s1 + $0x15c] sm:$0xf]
      %v466 = vld [vmem:[%s1 + $0x160] sm:$0xf]
      %v467 = vld [vmem:[%s1 + $0x164] sm:$0xf]
      %v468 = vld [vmem:[%s1 + $0x168] sm:$0xf]
      %v469 = vld [vmem:[%s1 + $0x16c] sm:$0xf]
      %v470 = vld [vmem:[%s1 + $0x170] sm:$0xf]
      %v471 = vld [vmem:[%s1 + $0x174] sm:$0xf]
      %v472 = vld [vmem:[%s1 + $0x178] sm:$0xf]
      %v473 = vld [vmem:[%s1 + $0x17c] sm:$0xf]
      %v474 = vld [vmem:[%s1 + $0x180] sm:$0xf]
      %v475 = vld [vmem:[%s1 + $0x184] sm:$0xf]
      %v476 = vld [vmem:[%s1 + $0x188] sm:$0xf]
      %v477 = vld [vmem:[%s1 + $0x18c] sm:$0xf]
      %v478 = vld [vmem:[%s1 + $0x190] sm:$0xf]
      %v479 = vld [vmem:[%s1 + $0x194] sm:$0xf]
      %v480 = vld [vmem:[%s1 + $0x198] sm:$0xf]
      %v481 = vld [vmem:[%s1 + $0x19c] sm:$0xf]
      %v482 = vld [vmem:[%s1 + $0x1a0] sm:$0xf]
      %v483 = vld [vmem:[%s1 + $0x1a4] sm:$0xf]
      %v484 = vld [vmem:[%s1 + $0x1a8] sm:$0xf]
      %v485 = vld [vmem:[%s1 + $0x1ac] sm:$0xf]
      %v486 = vld [vmem:[%s1 + $0x1b0] sm:$0xf]
      %v487 = vld [vmem:[%s1 + $0x1b4] sm:$0xf]
      %v488 = vld [vmem:[%s1 + $0x1b8] sm:$0xf]
      %v489 = vld [vmem:[%s1 + $0x1bc] sm:$0xf]
      %v490 = vld [vmem:[%s1 + $0x1c0] sm:$0xf]
      %v491 = vld [vmem:[%s1 + $0x1c4] sm:$0xf]
      %v492 = vld [vmem:[%s1 + $0x1c8] sm:$0xf]
      %v493 = vld [vmem:[%s1 + $0x1cc] sm:$0xf]
      %v494 = vld [vmem:[%s1 + $0x1d0] sm:$0xf]
      %v495 = vld [vmem:[%s1 + $0x1d4] sm:$0xf]
      %v496 = vld [vmem:[%s1 + $0x1d8] sm:$0xf]
      %v497 = vld [vmem:[%s1 + $0x1dc] sm:$0xf]
      %v498 = vld [vmem:[%s1 + $0x1e0] sm:$0xf]
      %v499 = vld [vmem:[%s1 + $0x1e4] sm:$0xf]
      %v500 = vld [vmem:[%s1 + $0x1e8] sm:$0xf]
      %v501 = vld [vmem:[%s1 + $0x1ec] sm:$0xf]
      %v502 = vld [vmem:[%s1 + $0x1f0] sm:$0xf]
      %v503 = vld [vmem:[%s1 + $0x1f4] sm:$0xf]
      %v504 = vld [vmem:[%s1 + $0x1f8] sm:$0xf]
      %v505 = vld [vmem:[%s1 + $0x1fc] sm:$0xf]
      %v506 = vld [vmem:[%s1 + $0x200] sm:$0xf]
      %v507 = vld [vmem:[%s1 + $0x204] sm:$0xf]
      %v508 = vld [vmem:[%s1 + $0x208] sm:$0xf]
      %v509 = vld [vmem:[%s1 + $0x20c] sm:$0xf]
      %v510 = vld [vmem:[%s1 + $0x210] sm:$0xf]
      %v511 = vld [vmem:[%s1 + $0x214] sm:$0xf]
      %v512 = vld [vmem:[%s1 + $0x218] sm:$0xf]
      %v513 = vld [vmem:[%s1 + $0x21c] sm:$0xf]
      %v514 = vld [vmem:[%s1 + $0x220] sm:$0xf]
      %v515 = vld [vmem:[%s1 + $0x224] sm:$0xf]
      %v516 = vld [vmem:[%s1 + $0x228] sm:$0xf]
      %v517 = vld [vmem:[%s1 + $0x22c] sm:$0xf]
      %v518 = vld [vmem:[%s1 + $0x230] sm:$0xf]
      %v519 = vld [vmem:[%s1 + $0x234] sm:$0xf]
      %v520 = vld [vmem:[%s1 + $0x238] sm:$0xf]
      %v521 = vld [vmem:[%s1 + $0x23c] sm:$0xf]
      %v522 = vld [vmem:[%s2] sm:$0x1]
      %v524 = vlaneseq
      %v525 = vshrl.u32 %v524, 7
      %v526 = vsub.s32 0, %v525
      %v527 = vrot.slane %v522, %v526
      %v673 = vunpack.c.l.b16 %v378
      %v674 = vunpack.c.l.b16 %v379
      %v675 = vunpack.c.l.b16 %v380
      %v676 = vunpack.c.l.b16 %v381
      %v677 = vunpack.c.l.b16 %v382
      %v678 = vunpack.c.l.b16 %v383
      %v679 = vunpack.c.l.b16 %v384
      %v680 = vunpack.c.l.b16 %v385
      %v681 = vunpack.c.l.b16 %v386
      %v682 = vunpack.c.l.b16 %v387
      %v683 = vunpack.c.l.b16 %v388
      %v684 = vunpack.c.l.b16 %v389
      %v685 = vunpack.c.l.b16 %v390
      %v686 = vunpack.c.l.b16 %v391
      %v687 = vunpack.c.l.b16 %v392
      %v688 = vunpack.c.l.b16 %v393
      %v689 = vunpack.c.l.b16 %v394
      %v690 = vunpack.c.l.b16 %v395
      %v691 = vunpack.c.l.b16 %v396
      %v692 = vunpack.c.l.b16 %v397
      %v693 = vunpack.c.l.b16 %v398
      %v694 = vunpack.c.l.b16 %v399
      %v695 = vunpack.c.l.b16 %v400
      %v696 = vunpack.c.l.b16 %v401
      %v697 = vunpack.c.l.b16 %v402
      %v698 = vunpack.c.l.b16 %v403
      %v699 = vunpack.c.l.b16 %v404
      %v700 = vunpack.c.l.b16 %v405
      %v701 = vunpack.c.l.b16 %v406
      %v702 = vunpack.c.l.b16 %v407
      %v703 = vunpack.c.l.b16 %v408
      %v704 = vunpack.c.l.b16 %v409
      %v705 = vunpack.c.l.b16 %v410
      %v706 = vunpack.c.l.b16 %v411
      %v707 = vunpack.c.l.b16 %v412
      %v708 = vunpack.c.l.b16 %v413
      %v709 = vunpack.c.l.b16 %v414
      %v710 = vunpack.c.l.b16 %v415
      %v711 = vunpack.c.l.b16 %v416
      %v712 = vunpack.c.l.b16 %v417
      %v713 = vunpack.c.l.b16 %v418
      %v714 = vunpack.c.l.b16 %v419
      %v715 = vunpack.c.l.b16 %v420
      %v716 = vunpack.c.l.b16 %v421
      %v717 = vunpack.c.l.b16 %v422
      %v718 = vunpack.c.l.b16 %v423
      %v719 = vunpack.c.l.b16 %v424
      %v720 = vunpack.c.l.b16 %v425
      %v721 = vunpack.c.l.b16 %v426
      %v722 = vunpack.c.l.b16 %v427
      %v723 = vunpack.c.l.b16 %v428
      %v724 = vunpack.c.l.b16 %v429
      %v725 = vunpack.c.l.b16 %v430
      %v726 = vunpack.c.l.b16 %v431
      %v727 = vunpack.c.l.b16 %v432
      %v728 = vunpack.c.l.b16 %v433
      %v729 = vunpack.c.l.b16 %v434
      %v730 = vunpack.c.l.b16 %v435
      %v731 = vunpack.c.l.b16 %v436
      %v732 = vunpack.c.l.b16 %v437
      %v733 = vunpack.c.l.b16 %v438
      %v734 = vunpack.c.l.b16 %v439
      %v735 = vunpack.c.l.b16 %v440
      %v736 = vunpack.c.l.b16 %v441
      %v737 = vunpack.c.l.b16 %v442
      %v738 = vunpack.c.l.b16 %v443
      %v739 = vunpack.c.l.b16 %v444
      %v740 = vunpack.c.l.b16 %v445
      %v741 = vunpack.c.l.b16 %v446
      %v742 = vunpack.c.l.b16 %v447
      %v743 = vunpack.c.l.b16 %v448
      %v744 = vunpack.c.l.b16 %v449
      %v745 = vunpack.c.l.b16 %v450
      %v746 = vunpack.c.l.b16 %v451
      %v747 = vunpack.c.l.b16 %v452
      %v748 = vunpack.c.l.b16 %v453
      %v749 = vunpack.c.l.b16 %v454
      %v750 = vunpack.c.l.b16 %v455
      %v751 = vunpack.c.l.b16 %v456
      %v752 = vunpack.c.l.b16 %v457
      %v753 = vunpack.c.l.b16 %v458
      %v754 = vunpack.c.l.b16 %v459
      %v755 = vunpack.c.l.b16 %v460
      %v756 = vunpack.c.l.b16 %v461
      %v757 = vunpack.c.l.b16 %v462
      %v758 = vunpack.c.l.b16 %v463
      %v759 = vunpack.c.l.b16 %v464
      %v760 = vunpack.c.l.b16 %v465
      %v761 = vunpack.c.l.b16 %v466
      %v762 = vunpack.c.l.b16 %v467
      %v763 = vunpack.c.l.b16 %v468
      %v764 = vunpack.c.l.b16 %v469
      %v765 = vunpack.c.l.b16 %v470
      %v766 = vunpack.c.l.b16 %v471
      %v767 = vunpack.c.l.b16 %v472
      %v768 = vunpack.c.l.b16 %v473
      %v769 = vunpack.c.l.b16 %v474
      %v770 = vunpack.c.l.b16 %v475
      %v771 = vunpack.c.l.b16 %v476
      %v772 = vunpack.c.l.b16 %v477
      %v773 = vunpack.c.l.b16 %v478
      %v774 = vunpack.c.l.b16 %v479
      %v775 = vunpack.c.l.b16 %v480
      %v776 = vunpack.c.l.b16 %v481
      %v777 = vunpack.c.l.b16 %v482
      %v778 = vunpack.c.l.b16 %v483
      %v779 = vunpack.c.l.b16 %v484
      %v780 = vunpack.c.l.b16 %v485
      %v781 = vunpack.c.l.b16 %v486
      %v782 = vunpack.c.l.b16 %v487
      %v783 = vunpack.c.l.b16 %v488
      %v784 = vunpack.c.l.b16 %v489
      %v785 = vunpack.c.l.b16 %v490
      %v786 = vunpack.c.l.b16 %v491
      %v787 = vunpack.c.l.b16 %v492
      %v788 = vunpack.c.l.b16 %v493
      %v789 = vunpack.c.l.b16 %v494
      %v790 = vunpack.c.l.b16 %v495
      %v791 = vunpack.c.l.b16 %v496
      %v792 = vunpack.c.l.b16 %v497
      %v793 = vunpack.c.l.b16 %v498
      %v794 = vunpack.c.l.b16 %v499
      %v795 = vunpack.c.l.b16 %v500
      %v796 = vunpack.c.l.b16 %v501
      %v797 = vunpack.c.l.b16 %v502
      %v798 = vunpack.c.l.b16 %v503
      %v799 = vunpack.c.l.b16 %v504
      %v800 = vunpack.c.l.b16 %v505
      %v801 = vunpack.c.l.b16 %v506
      %v802 = vunpack.c.l.b16 %v507
      %v803 = vunpack.c.l.b16 %v508
      %v804 = vunpack.c.l.b16 %v509
      %v805 = vunpack.c.l.b16 %v510
      %v806 = vunpack.c.l.b16 %v511
      %v807 = vunpack.c.l.b16 %v512
      %v808 = vunpack.c.l.b16 %v513
      %v809 = vunpack.c.l.b16 %v514
      %v810 = vunpack.c.l.b16 %v515
      %v811 = vunpack.c.l.b16 %v516
      %v812 = vunpack.c.l.b16 %v517
      %v813 = vunpack.c.l.b16 %v518
      %v814 = vunpack.c.l.b16 %v519
      %v815 = vunpack.c.l.b16 %v520
      %v816 = vunpack.c.l.b16 %v521
      %v817 = vpack.c.b16 %v674, %v673
      %v818 = vpack.c.b16 %v676, %v675
      %v819 = vpack.c.b16 %v678, %v677
      %v820 = vpack.c.b16 %v680, %v679
      %v821 = vpack.c.b16 %v682, %v681
      %v822 = vpack.c.b16 %v684, %v683
      %v823 = vpack.c.b16 %v686, %v685
      %v824 = vpack.c.b16 %v688, %v687
      %v825 = vpack.c.b16 %v690, %v689
      %v826 = vpack.c.b16 %v692, %v691
      %v827 = vpack.c.b16 %v694, %v693
      %v828 = vpack.c.b16 %v696, %v695
      %v829 = vpack.c.b16 %v698, %v697
      %v830 = vpack.c.b16 %v700, %v699
      %v831 = vpack.c.b16 %v702, %v701
      %v832 = vpack.c.b16 %v704, %v703
      %v833 = vpack.c.b16 %v706, %v705
      %v834 = vpack.c.b16 %v708, %v707
      %v835 = vpack.c.b16 %v710, %v709
      %v836 = vpack.c.b16 %v712, %v711
      %v837 = vpack.c.b16 %v714, %v713
      %v838 = vpack.c.b16 %v716, %v715
      %v839 = vpack.c.b16 %v718, %v717
      %v840 = vpack.c.b16 %v720, %v719
      %v841 = vpack.c.b16 %v722, %v721
      %v842 = vpack.c.b16 %v724, %v723
      %v843 = vpack.c.b16 %v726, %v725
      %v844 = vpack.c.b16 %v728, %v727
      %v845 = vpack.c.b16 %v730, %v729
      %v846 = vpack.c.b16 %v732, %v731
      %v847 = vpack.c.b16 %v734, %v733
      %v848 = vpack.c.b16 %v736, %v735
      %v849 = vpack.c.b16 %v738, %v737
      %v850 = vpack.c.b16 %v740, %v739
      %v851 = vpack.c.b16 %v742, %v741
      %v852 = vpack.c.b16 %v744, %v743
      %v853 = vpack.c.b16 %v746, %v745
      %v854 = vpack.c.b16 %v748, %v747
      %v855 = vpack.c.b16 %v750, %v749
      %v856 = vpack.c.b16 %v752, %v751
      %v857 = vpack.c.b16 %v754, %v753
      %v858 = vpack.c.b16 %v756, %v755
      %v859 = vpack.c.b16 %v758, %v757
      %v860 = vpack.c.b16 %v760, %v759
      %v861 = vpack.c.b16 %v762, %v761
      %v862 = vpack.c.b16 %v764, %v763
      %v863 = vpack.c.b16 %v766, %v765
      %v864 = vpack.c.b16 %v768, %v767
      %v865 = vpack.c.b16 %v770, %v769
      %v866 = vpack.c.b16 %v772, %v771
      %v867 = vpack.c.b16 %v774, %v773
      %v868 = vpack.c.b16 %v776, %v775
      %v869 = vpack.c.b16 %v778, %v777
      %v870 = vpack.c.b16 %v780, %v779
      %v871 = vpack.c.b16 %v782, %v781
      %v872 = vpack.c.b16 %v784, %v783
      %v873 = vpack.c.b16 %v786, %v785
      %v874 = vpack.c.b16 %v788, %v787
      %v875 = vpack.c.b16 %v790, %v789
      %v876 = vpack.c.b16 %v792, %v791
      %v877 = vpack.c.b16 %v794, %v793
      %v878 = vpack.c.b16 %v796, %v795
      %v879 = vpack.c.b16 %v798, %v797
      %v880 = vpack.c.b16 %v800, %v799
      %v881 = vpack.c.b16 %v802, %v801
      %v882 = vpack.c.b16 %v804, %v803
      %v883 = vpack.c.b16 %v806, %v805
      %v884 = vpack.c.b16 %v808, %v807
      %v885 = vpack.c.b16 %v810, %v809
      %v886 = vpack.c.b16 %v812, %v811
      %v887 = vpack.c.b16 %v814, %v813
      %v888 = vpack.c.b16 %v816, %v815
      %961 = vmatprep.subr.bf16.mxu0 0
      %962 = vmatpush1.bf16.msra.mxu0 %v817
      %963 = vmatprep.subr.bf16.mxu0 0
      %964 = vmatpush1.bf16.msra.mxu0 %v818
      %965 = vmatprep.subr.bf16.mxu0 0
      %966 = vmatpush1.bf16.msra.mxu0 %v819
      %967 = vmatprep.subr.bf16.mxu0 0
      %968 = vmatpush1.bf16.msra.mxu0 %v820
      %969 = vmatprep.subr.bf16.mxu0 0
      %970 = vmatpush1.bf16.msra.mxu0 %v821
      %971 = vmatprep.subr.bf16.mxu0 0
      %972 = vmatpush1.bf16.msra.mxu0 %v822
      %973 = vmatprep.subr.bf16.mxu0 0
      %974 = vmatpush1.bf16.msra.mxu0 %v823
      %975 = vmatprep.subr.bf16.mxu0 0
      %976 = vmatpush1.bf16.msra.mxu0 %v824
      %977 = vmatprep.subr.bf16.mxu0 0
      %978 = vmatpush1.bf16.msra.mxu0 %v825
      %979 = vmatprep.subr.bf16.mxu0 0
      %980 = vmatpush1.bf16.msra.mxu0 %v826
      %981 = vmatprep.subr.bf16.mxu0 0
      %982 = vmatpush1.bf16.msra.mxu0 %v827
      %983 = vmatprep.subr.bf16.mxu0 0
      %984 = vmatpush1.bf16.msra.mxu0 %v828
      %985 = vmatprep.subr.bf16.mxu0 0
      %986 = vmatpush1.bf16.msra.mxu0 %v829
      %987 = vmatprep.subr.bf16.mxu0 0
      %988 = vmatpush1.bf16.msra.mxu0 %v830
      %989 = vmatprep.subr.bf16.mxu0 0
      %990 = vmatpush1.bf16.msra.mxu0 %v831
      %991 = vmatprep.subr.bf16.mxu0 0
      %992 = vmatpush1.bf16.msra.mxu0 %v832
      %993 = vmatprep.mubr.bf16.mxu0 %v361
      %994 = vmatmul.mubr.bf16.gmra.mrb[0].mxu0 %v360
      %v995 = vpop.f32.mrb[0].mxu0
      %v996 = vadd.f32 %v527, %v995
      %v997 = vpop.f32.mrb[0].mxu0
      %v998 = vpop.f32.mrb[0].mxu0
      %v999 = vadd.f32 %v527, %v998
      %v1000 = vpop.f32.mrb[0].mxu0
      %1001 = vmatprep.mubr.bf16.mxu0 %v370
      %1002 = vmatmul.mubr.bf16.gmra.mrb[0].mxu0 %v369
      %v1003 = vpop.f32.mrb[0].mxu0
      %v1004 = vadd.f32 %v527, %v1003
      %v1005 = vpop.f32.mrb[0].mxu0
      %v1006 = vpop.f32.mrb[0].mxu0
      %v1007 = vpop.f32.mrb[0].mxu0
      %1008 = vdwg.mxu0
      %1009 = vmatprep.subr.bf16.mxu0 0
      %1010 = vmatpush1.bf16.msra.mxu0 %v833
      %1011 = vmatprep.subr.bf16.mxu0 0
      %1012 = vmatpush1.bf16.msra.mxu0 %v834
      %1013 = vmatprep.subr.bf16.mxu0 0
      %1014 = vmatpush1.bf16.msra.mxu0 %v835
      %1015 = vmatprep.subr.bf16.mxu0 0
      %1016 = vmatpush1.bf16.msra.mxu0 %v836
      %1017 = vmatprep.subr.bf16.mxu0 0
      %1018 = vmatpush1.bf16.msra.mxu0 %v837
      %1019 = vmatprep.subr.bf16.mxu0 0
      %1020 = vmatpush1.bf16.msra.mxu0 %v838
      %1021 = vmatprep.subr.bf16.mxu0 0
      %1022 = vmatpush1.bf16.msra.mxu0 %v839
      %1023 = vmatprep.subr.bf16.mxu0 0
      %1024 = vmatpush1.bf16.msra.mxu0 %v840
      %1025 = vmatprep.subr.bf16.mxu0 0
      %1026 = vmatpush1.bf16.msra.mxu0 %v841
      %1027 = vmatprep.subr.bf16.mxu0 0
      %1028 = vmatpush1.bf16.msra.mxu0 %v842
      %1029 = vmatprep.subr.bf16.mxu0 0
      %1030 = vmatpush1.bf16.msra.mxu0 %v843
      %1031 = vmatprep.subr.bf16.mxu0 0
      %1032 = vmatpush1.bf16.msra.mxu0 %v844
      %1033 = vmatprep.subr.bf16.mxu0 0
      %1034 = vmatpush1.bf16.msra.mxu0 %v845
      %1035 = vmatprep.subr.bf16.mxu0 0
      %1036 = vmatpush1.bf16.msra.mxu0 %v846
      %1037 = vmatprep.subr.bf16.mxu0 0
      %1038 = vmatpush1.bf16.msra.mxu0 %v847
      %1039 = vmatprep.subr.bf16.mxu0 0
      %1040 = vmatpush1.bf16.msra.mxu0 %v848
      %1041 = vmatprep.mubr.bf16.mxu0 %v363
      %1042 = vmatmul.mubr.bf16.gmra.mrb[0].mxu0 %v362
      %v1043 = vpop.f32.mrb[0].mxu0
      %v1044 = vadd.f32 %v996, %v1043
      %v1045 = vpop.f32.mrb[0].mxu0
      %v1046 = vpop.f32.mrb[0].mxu0
      %v1047 = vadd.f32 %v999, %v1046
      %v1048 = vpop.f32.mrb[0].mxu0
      %1049 = vmatprep.mubr.bf16.mxu0 %v372
      %1050 = vmatmul.mubr.bf16.gmra.mrb[0].mxu0 %v371
      %v1051 = vpop.f32.mrb[0].mxu0
      %v1052 = vadd.f32 %v1004, %v1051
      %v1053 = vpop.f32.mrb[0].mxu0
      %v1054 = vpop.f32.mrb[0].mxu0
      %v1055 = vpop.f32.mrb[0].mxu0
      %1056 = vdwg.mxu0
      %1057 = vmatprep.subr.bf16.mxu0 0
      %1058 = vmatpush1.bf16.msra.mxu0 %v849
      %1059 = vmatprep.subr.bf16.mxu0 0
      %1060 = vmatpush1.bf16.msra.mxu0 %v850
      %1061 = vmatprep.subr.bf16.mxu0 0
      %1062 = vmatpush1.bf16.msra.mxu0 %v851
      %1063 = vmatprep.subr.bf16.mxu0 0
      %1064 = vmatpush1.bf16.msra.mxu0 %v852
      %1065 = vmatprep.subr.bf16.mxu0 0
      %1066 = vmatpush1.bf16.msra.mxu0 %v853
      %1067 = vmatprep.subr.bf16.mxu0 0
      %1068 = vmatpush1.bf16.msra.mxu0 %v854
      %1069 = vmatprep.subr.bf16.mxu0 0
      %1070 = vmatpush1.bf16.msra.mxu0 %v855
      %1071 = vmatprep.subr.bf16.mxu0 0
      %1072 = vmatpush1.bf16.msra.mxu0 %v856
      %1073 = vmatprep.subr.bf16.mxu0 0
      %1074 = vmatpush1.bf16.msra.mxu0 %v857
      %1075 = vmatprep.subr.bf16.mxu0 0
      %1076 = vmatpush1.bf16.msra.mxu0 %v858
      %1077 = vmatprep.subr.bf16.mxu0 0
      %1078 = vmatpush1.bf16.msra.mxu0 %v859
      %1079 = vmatprep.subr.bf16.mxu0 0
      %1080 = vmatpush1.bf16.msra.mxu0 %v860
      %1081 = vmatprep.subr.bf16.mxu0 0
      %1082 = vmatpush1.bf16.msra.mxu0 %v861
      %1083 = vmatprep.subr.bf16.mxu0 0
      %1084 = vmatpush1.bf16.msra.mxu0 %v862
      %1085 = vmatprep.subr.bf16.mxu0 0
      %1086 = vmatpush1.bf16.msra.mxu0 %v863
      %1087 = vmatprep.subr.bf16.mxu0 0
      %1088 = vmatpush1.bf16.msra.mxu0 %v864
      %1089 = vmatprep.mubr.bf16.mxu0 %v365
      %1090 = vmatmul.mubr.bf16.gmra.mrb[0].mxu0 %v364
      %v1091 = vpop.f32.mrb[0].mxu0
      %v1092 = vadd.f32 %v1044, %v1091
      %v1093 = vpop.f32.mrb[0].mxu0
      %v1094 = vpop.f32.mrb[0].mxu0
      %v1095 = vadd.f32 %v1047, %v1094
      %v1096 = vpop.f32.mrb[0].mxu0
      %1097 = vmatprep.mubr.bf16.mxu0 %v374
      %1098 = vmatmul.mubr.bf16.gmra.mrb[0].mxu0 %v373
      %v1099 = vpop.f32.mrb[0].mxu0
      %v1100 = vadd.f32 %v1052, %v1099
      %v1101 = vpop.f32.mrb[0].mxu0
      %v1102 = vpop.f32.mrb[0].mxu0
      %v1103 = vpop.f32.mrb[0].mxu0
      %1104 = vdwg.mxu0
      %1105 = vmatprep.subr.bf16.mxu0 0
      %1106 = vmatpush1.bf16.msra.mxu0 %v865
      %1107 = vmatprep.subr.bf16.mxu0 0
      %1108 = vmatpush1.bf16.msra.mxu0 %v866
      %1109 = vmatprep.subr.bf16.mxu0 0
      %1110 = vmatpush1.bf16.msra.mxu0 %v867
      %1111 = vmatprep.subr.bf16.mxu0 0
      %1112 = vmatpush1.bf16.msra.mxu0 %v868
      %1113 = vmatprep.subr.bf16.mxu0 0
      %1114 = vmatpush1.bf16.msra.mxu0 %v869
      %1115 = vmatprep.subr.bf16.mxu0 0
      %1116 = vmatpush1.bf16.msra.mxu0 %v870
      %1117 = vmatprep.subr.bf16.mxu0 0
      %1118 = vmatpush1.bf16.msra.mxu0 %v871
      %1119 = vmatprep.subr.bf16.mxu0 0
      %1120 = vmatpush1.bf16.msra.mxu0 %v872
      %1121 = vmatprep.subr.bf16.mxu0 0
      %1122 = vmatpush1.bf16.msra.mxu0 %v873
      %1123 = vmatprep.subr.bf16.mxu0 0
      %1124 = vmatpush1.bf16.msra.mxu0 %v874
      %1125 = vmatprep.subr.bf16.mxu0 0
      %1126 = vmatpush1.bf16.msra.mxu0 %v875
      %1127 = vmatprep.subr.bf16.mxu0 0
      %1128 = vmatpush1.bf16.msra.mxu0 %v876
      %1129 = vmatprep.subr.bf16.mxu0 0
      %1130 = vmatpush1.bf16.msra.mxu0 %v877
      %1131 = vmatprep.subr.bf16.mxu0 0
      %1132 = vmatpush1.bf16.msra.mxu0 %v878
      %1133 = vmatprep.subr.bf16.mxu0 0
      %1134 = vmatpush1.bf16.msra.mxu0 %v879
      %1135 = vmatprep.subr.bf16.mxu0 0
      %1136 = vmatpush1.bf16.msra.mxu0 %v880
      %1137 = vmatprep.mubr.bf16.mxu0 %v367
      %1138 = vmatmul.mubr.bf16.gmra.mrb[0].mxu0 %v366
      %v1139 = vpop.f32.mrb[0].mxu0
      %v1140 = vadd.f32 %v1092, %v1139
      %v1141 = vpop.f32.mrb[0].mxu0
      %v1142 = vpop.f32.mrb[0].mxu0
      %v1143 = vadd.f32 %v1095, %v1142
      %v1144 = vpop.f32.mrb[0].mxu0
      %1145 = vmatprep.mubr.bf16.mxu0 %v376
      %1146 = vmatmul.mubr.bf16.gmra.mrb[0].mxu0 %v375
      %v1147 = vpop.f32.mrb[0].mxu0
      %v1148 = vadd.f32 %v1100, %v1147
      %v1149 = vpop.f32.mrb[0].mxu0
      %v1150 = vpop.f32.mrb[0].mxu0
      %v1151 = vpop.f32.mrb[0].mxu0
      %1152 = vdwg.mxu0
      %1153 = vmatprep.subr.bf16.mxu0 0
      %1154 = vmatpush1.bf16.msra.mxu0 %v881
      %1155 = vmatprep.subr.bf16.mxu0 0
      %1156 = vmatpush1.bf16.msra.mxu0 %v882
      %1157 = vmatprep.subr.bf16.mxu0 0
      %1158 = vmatpush1.bf16.msra.mxu0 %v883
      %1159 = vmatprep.subr.bf16.mxu0 0
      %1160 = vmatpush1.bf16.msra.mxu0 %v884
      %1161 = vmatprep.subr.bf16.mxu0 0
      %1162 = vmatpush1.bf16.msra.mxu0 %v885
      %1163 = vmatprep.subr.bf16.mxu0 0
      %1164 = vmatpush1.bf16.msra.mxu0 %v886
      %1165 = vmatprep.subr.bf16.mxu0 0
      %1166 = vmatpush1.bf16.msra.mxu0 %v887
      %1167 = vmatprep.subr.bf16.mxu0 0
      %1168 = vmatpush1.bf16.msra.mxu0 %v888
      %1169 = vmatprep.subr.bf16.mxu0 0
      %1170 = vmatpush1.bf16.msra.mxu0 0
      %1171 = vmatprep.subr.bf16.mxu0 0
      %1172 = vmatpush1.bf16.msra.mxu0 0
      %1173 = vmatprep.subr.bf16.mxu0 0
      %1174 = vmatpush1.bf16.msra.mxu0 0
      %1175 = vmatprep.subr.bf16.mxu0 0
      %1176 = vmatpush1.bf16.msra.mxu0 0
      %1177 = vmatprep.subr.bf16.mxu0 0
      %1178 = vmatpush1.bf16.msra.mxu0 0
      %1179 = vmatprep.subr.bf16.mxu0 0
      %1180 = vmatpush1.bf16.msra.mxu0 0
      %1181 = vmatprep.subr.bf16.mxu0 0
      %1182 = vmatpush1.bf16.msra.mxu0 0
      %1183 = vmatprep.subr.bf16.mxu0 0
      %1184 = vmatpush1.bf16.msra.mxu0 0
      %1185 = vmatprep.mubr.bf16.mxu0 0
      %1186 = vmatmul.mubr.bf16.gmra.mrb[0].mxu0 %v368
      %v1187 = vpop.f32.mrb[0].mxu0
      %v1188 = vadd.f32 %v1140, %v1187
      %v1189 = vpop.f32.mrb[0].mxu0
      %v1190 = vpop.f32.mrb[0].mxu0
      %v1191 = vadd.f32 %v1143, %v1190
      %v1192 = vpop.f32.mrb[0].mxu0
      %1193 = vmatprep.mubr.bf16.mxu0 0
      %1194 = vmatmul.mubr.bf16.gmra.mrb[0].mxu0 %v377
      %v1195 = vpop.f32.mrb[0].mxu0
      %v1196 = vadd.f32 %v1148, %v1195
      %v1197 = vpop.f32.mrb[0].mxu0
      %v1198 = vpop.f32.mrb[0].mxu0
      %v1199 = vpop.f32.mrb[0].mxu0
      %1200 = vdwg.mxu0
      %v1201 = vsel %vm283, 1, 0
      %v1202 = vsel %vm284, 1, 0
      %v1203 = vsel %vm285, 1, 0
      %vm1204 = vcmp.eq.s32.totalorder %v1201, 1
      %vm1205 = vcmp.eq.s32.totalorder %v1202, 1
      %vm1206 = vcmp.eq.s32.totalorder %v1203, 1
      %v1207 = vsel %vm1204, %v1188, 0.0
      %v1208 = vsel %vm1205, %v1191, 0.0
      %v1209 = vsel %vm1206, %v1196, 0.0
      %v1213 = vrot.slane %v1207, 1
      %v1214 = vrot.slane %v1208, 1
      %v1215 = vsel %vm290, %v1213, %v1214
      %v1216 = vrot.slane %v1209, 1
      %v1217 = vsel %vm290, %v1214, %v1216
      %v1222 = vsel %vm290, 0.0, %v1213
      %v1223 = vsel %vm290, %v1216, 0.0
      %v1224 = vmax.f32 %v1222, 0.0
      %v1225 = vmax.f32 %v1215, 0.0
      %v1226 = vmax.f32 %v1217, 0.0
      %v1227 = vmax.f32 %v1223, 0.0
      %v1232 = vrot.slane %v1224, 1
      %v1233 = vrot.slane %v1225, 1
      %v1234 = vsel %vm290, %v1232, %v1233
      %v1235 = vrot.slane %v1226, 1
      %v1236 = vsel %vm290, %v1233, %v1235
      %v1237 = vrot.slane %v1227, 1
      %v1238 = vsel %vm290, %v1235, %v1237
      %v1242 = vrot.slane %v1224, 2
      %v1243 = vrot.slane %v1225, 2
      %v1244 = vsel %vm301, %v1242, %v1243
      %v1245 = vrot.slane %v1226, 2
      %v1246 = vsel %vm301, %v1243, %v1245
      %v1247 = vrot.slane %v1227, 2
      %v1248 = vsel %vm301, %v1245, %v1247
      %v1252 = vrot.slane %v1224, 6
      %v1253 = vrot.slane %v1225, 6
      %v1254 = vsel %vm312, %v1252, %v1253
      %v1255 = vrot.slane %v1226, 6
      %v1256 = vsel %vm312, %v1253, %v1255
      %v1257 = vrot.slane %v1227, 6
      %v1258 = vsel %vm312, %v1255, %v1257
      %v1262 = vrot.slane %v1224, 7
      %v1263 = vrot.slane %v1225, 7
      %v1264 = vsel %vm323, %v1262, %v1263
      %v1265 = vrot.slane %v1226, 7
      %v1266 = vsel %vm323, %v1263, %v1265
      %v1267 = vrot.slane %v1227, 7
      %v1268 = vsel %vm323, %v1265, %v1267
      %v1273 = vrot.slane %v1225, 4
      %v1274 = vrot.slane %v1226, 4
      %v1275 = vsel %vm335, %v1273, %v1274
      %v1276 = vrot.slane %v1227, 4
      %v1277 = vsel %vm335, %v1274, %v1276
      %v1278 = vrot.slane 0.0, 4
      %v1279 = vsel %vm335, %v1276, %v1278
      %v1283 = vrot.slane %v1225, 5
      %v1284 = vrot.slane %v1226, 5
      %v1285 = vsel %vm346, %v1283, %v1284
      %v1286 = vrot.slane %v1227, 5
      %v1287 = vsel %vm346, %v1284, %v1286
      %v1288 = vrot.slane 0.0, 5
      %v1289 = vsel %vm346, %v1286, %v1288
      %v1293 = vrot.slane 0.0, 6
      %v1294 = vsel %vm312, %v1257, %v1293
      %v1296 = vpack.c.bf16 %v1225, %v1224
      %v1297 = vpack.c.bf16 %v1236, %v1234
      %v1298 = vpack.c.bf16 %v1246, %v1244
      %v1299 = vpack.c.bf16 %v1256, %v1254
      %v1300 = vpack.c.bf16 %v1266, %v1264
      %v1301 = vpack.c.bf16 %v1226, %v1225
      %v1302 = vpack.c.bf16 %v1277, %v1275
      %v1303 = vpack.c.bf16 %v1287, %v1285
      %v1304 = vpack.c.bf16 %v1258, %v1256
      %v1305 = vpack.c.bf16 %v1226, %v1226
      %v1306 = vpack.c.bf16 %v1238, %v1238
      %v1307 = vpack.c.bf16 %v1248, %v1248
      %v1308 = vpack.c.bf16 %v1258, %v1258
      %v1309 = vpack.c.bf16 %v1268, %v1268
      %v1310 = vpack.c.bf16 %v1227, %v1227
      %v1311 = vpack.c.bf16 %v1279, %v1279
      %v1312 = vpack.c.bf16 %v1289, %v1289
      %v1313 = vpack.c.bf16 %v1294, %v1294
      %v1314 = vld [vmem:[%s3] sm:$0xf]
      %v1315 = vld [vmem:[%s3 + $0x4] sm:$0xf]
      %v1316 = vld [vmem:[%s3 + $0x8] sm:$0xf]
      %v1317 = vld [vmem:[%s3 + $0xc] sm:$0xf]
      %v1318 = vld [vmem:[%s3 + $0x10] sm:$0xf]
      %v1319 = vld [vmem:[%s3 + $0x14] sm:$0xf]
      %v1320 = vld [vmem:[%s3 + $0x18] sm:$0xf]
      %v1321 = vld [vmem:[%s3 + $0x1c] sm:$0xf]
      %v1322 = vld [vmem:[%s3 + $0x20] sm:$0xf]
      %v1323 = vld [vmem:[%s3 + $0x24] sm:$0xf]
      %v1324 = vld [vmem:[%s3 + $0x28] sm:$0xf]
      %v1325 = vld [vmem:[%s3 + $0x2c] sm:$0xf]
      %v1326 = vld [vmem:[%s3 + $0x30] sm:$0xf]
      %v1327 = vld [vmem:[%s3 + $0x34] sm:$0xf]
      %v1328 = vld [vmem:[%s3 + $0x38] sm:$0xf]
      %v1329 = vld [vmem:[%s3 + $0x3c] sm:$0xf]
      %v1330 = vld [vmem:[%s3 + $0x40] sm:$0xf]
      %v1331 = vld [vmem:[%s3 + $0x44] sm:$0xf]
      %v1332 = vld [vmem:[%s3 + $0x48] sm:$0xf]
      %v1333 = vld [vmem:[%s3 + $0x4c] sm:$0xf]
      %v1334 = vld [vmem:[%s3 + $0x50] sm:$0xf]
      %v1335 = vld [vmem:[%s3 + $0x54] sm:$0xf]
      %v1336 = vld [vmem:[%s3 + $0x58] sm:$0xf]
      %v1337 = vld [vmem:[%s3 + $0x5c] sm:$0xf]
      %v1338 = vld [vmem:[%s3 + $0x60] sm:$0xf]
      %v1339 = vld [vmem:[%s3 + $0x64] sm:$0xf]
      %v1340 = vld [vmem:[%s3 + $0x68] sm:$0xf]
      %v1341 = vld [vmem:[%s3 + $0x6c] sm:$0xf]
      %v1342 = vld [vmem:[%s3 + $0x70] sm:$0xf]
      %v1343 = vld [vmem:[%s3 + $0x74] sm:$0xf]
      %v1344 = vld [vmem:[%s3 + $0x78] sm:$0xf]
      %v1345 = vld [vmem:[%s3 + $0x7c] sm:$0xf]
      %v1346 = vld [vmem:[%s3 + $0x80] sm:$0xf]
      %v1347 = vld [vmem:[%s3 + $0x84] sm:$0xf]
      %v1348 = vld [vmem:[%s3 + $0x88] sm:$0xf]
      %v1349 = vld [vmem:[%s3 + $0x8c] sm:$0xf]
      %v1350 = vld [vmem:[%s3 + $0x90] sm:$0xf]
      %v1351 = vld [vmem:[%s3 + $0x94] sm:$0xf]
      %v1352 = vld [vmem:[%s3 + $0x98] sm:$0xf]
      %v1353 = vld [vmem:[%s3 + $0x9c] sm:$0xf]
      %v1354 = vld [vmem:[%s3 + $0xa0] sm:$0xf]
      %v1355 = vld [vmem:[%s3 + $0xa4] sm:$0xf]
      %v1356 = vld [vmem:[%s3 + $0xa8] sm:$0xf]
      %v1357 = vld [vmem:[%s3 + $0xac] sm:$0xf]
      %v1358 = vld [vmem:[%s3 + $0xb0] sm:$0xf]
      %v1359 = vld [vmem:[%s3 + $0xb4] sm:$0xf]
      %v1360 = vld [vmem:[%s3 + $0xb8] sm:$0xf]
      %v1361 = vld [vmem:[%s3 + $0xbc] sm:$0xf]
      %v1362 = vld [vmem:[%s3 + $0xc0] sm:$0xf]
      %v1363 = vld [vmem:[%s3 + $0xc4] sm:$0xf]
      %v1364 = vld [vmem:[%s3 + $0xc8] sm:$0xf]
      %v1365 = vld [vmem:[%s3 + $0xcc] sm:$0xf]
      %v1366 = vld [vmem:[%s3 + $0xd0] sm:$0xf]
      %v1367 = vld [vmem:[%s3 + $0xd4] sm:$0xf]
      %v1368 = vld [vmem:[%s3 + $0xd8] sm:$0xf]
      %v1369 = vld [vmem:[%s3 + $0xdc] sm:$0xf]
      %v1370 = vld [vmem:[%s3 + $0xe0] sm:$0xf]
      %v1371 = vld [vmem:[%s3 + $0xe4] sm:$0xf]
      %v1372 = vld [vmem:[%s3 + $0xe8] sm:$0xf]
      %v1373 = vld [vmem:[%s3 + $0xec] sm:$0xf]
      %v1374 = vld [vmem:[%s3 + $0xf0] sm:$0xf]
      %v1375 = vld [vmem:[%s3 + $0xf4] sm:$0xf]
      %v1376 = vld [vmem:[%s3 + $0xf8] sm:$0xf]
      %v1377 = vld [vmem:[%s3 + $0xfc] sm:$0xf]
      %v1378 = vld [vmem:[%s3 + $0x100] sm:$0xf]
      %v1379 = vld [vmem:[%s3 + $0x104] sm:$0xf]
      %v1380 = vld [vmem:[%s3 + $0x108] sm:$0xf]
      %v1381 = vld [vmem:[%s3 + $0x10c] sm:$0xf]
      %v1382 = vld [vmem:[%s3 + $0x110] sm:$0xf]
      %v1383 = vld [vmem:[%s3 + $0x114] sm:$0xf]
      %v1384 = vld [vmem:[%s3 + $0x118] sm:$0xf]
      %v1385 = vld [vmem:[%s3 + $0x11c] sm:$0xf]
      %v1386 = vld [vmem:[%s3 + $0x120] sm:$0xf]
      %v1387 = vld [vmem:[%s3 + $0x124] sm:$0xf]
      %v1388 = vld [vmem:[%s3 + $0x128] sm:$0xf]
      %v1389 = vld [vmem:[%s3 + $0x12c] sm:$0xf]
      %v1390 = vld [vmem:[%s3 + $0x130] sm:$0xf]
      %v1391 = vld [vmem:[%s3 + $0x134] sm:$0xf]
      %v1392 = vld [vmem:[%s3 + $0x138] sm:$0xf]
      %v1393 = vld [vmem:[%s3 + $0x13c] sm:$0xf]
      %v1394 = vld [vmem:[%s3 + $0x140] sm:$0xf]
      %v1395 = vld [vmem:[%s3 + $0x144] sm:$0xf]
      %v1396 = vld [vmem:[%s3 + $0x148] sm:$0xf]
      %v1397 = vld [vmem:[%s3 + $0x14c] sm:$0xf]
      %v1398 = vld [vmem:[%s3 + $0x150] sm:$0xf]
      %v1399 = vld [vmem:[%s3 + $0x154] sm:$0xf]
      %v1400 = vld [vmem:[%s3 + $0x158] sm:$0xf]
      %v1401 = vld [vmem:[%s3 + $0x15c] sm:$0xf]
      %v1402 = vld [vmem:[%s3 + $0x160] sm:$0xf]
      %v1403 = vld [vmem:[%s3 + $0x164] sm:$0xf]
      %v1404 = vld [vmem:[%s3 + $0x168] sm:$0xf]
      %v1405 = vld [vmem:[%s3 + $0x16c] sm:$0xf]
      %v1406 = vld [vmem:[%s3 + $0x170] sm:$0xf]
      %v1407 = vld [vmem:[%s3 + $0x174] sm:$0xf]
      %v1408 = vld [vmem:[%s3 + $0x178] sm:$0xf]
      %v1409 = vld [vmem:[%s3 + $0x17c] sm:$0xf]
      %v1410 = vld [vmem:[%s3 + $0x180] sm:$0xf]
      %v1411 = vld [vmem:[%s3 + $0x184] sm:$0xf]
      %v1412 = vld [vmem:[%s3 + $0x188] sm:$0xf]
      %v1413 = vld [vmem:[%s3 + $0x18c] sm:$0xf]
      %v1414 = vld [vmem:[%s3 + $0x190] sm:$0xf]
      %v1415 = vld [vmem:[%s3 + $0x194] sm:$0xf]
      %v1416 = vld [vmem:[%s3 + $0x198] sm:$0xf]
      %v1417 = vld [vmem:[%s3 + $0x19c] sm:$0xf]
      %v1418 = vld [vmem:[%s3 + $0x1a0] sm:$0xf]
      %v1419 = vld [vmem:[%s3 + $0x1a4] sm:$0xf]
      %v1420 = vld [vmem:[%s3 + $0x1a8] sm:$0xf]
      %v1421 = vld [vmem:[%s3 + $0x1ac] sm:$0xf]
      %v1422 = vld [vmem:[%s3 + $0x1b0] sm:$0xf]
      %v1423 = vld [vmem:[%s3 + $0x1b4] sm:$0xf]
      %v1424 = vld [vmem:[%s3 + $0x1b8] sm:$0xf]
      %v1425 = vld [vmem:[%s3 + $0x1bc] sm:$0xf]
      %v1426 = vld [vmem:[%s3 + $0x1c0] sm:$0xf]
      %v1427 = vld [vmem:[%s3 + $0x1c4] sm:$0xf]
      %v1428 = vld [vmem:[%s3 + $0x1c8] sm:$0xf]
      %v1429 = vld [vmem:[%s3 + $0x1cc] sm:$0xf]
      %v1430 = vld [vmem:[%s3 + $0x1d0] sm:$0xf]
      %v1431 = vld [vmem:[%s3 + $0x1d4] sm:$0xf]
      %v1432 = vld [vmem:[%s3 + $0x1d8] sm:$0xf]
      %v1433 = vld [vmem:[%s3 + $0x1dc] sm:$0xf]
      %v1434 = vld [vmem:[%s3 + $0x1e0] sm:$0xf]
      %v1435 = vld [vmem:[%s3 + $0x1e4] sm:$0xf]
      %v1436 = vld [vmem:[%s3 + $0x1e8] sm:$0xf]
      %v1437 = vld [vmem:[%s3 + $0x1ec] sm:$0xf]
      %v1438 = vld [vmem:[%s3 + $0x1f0] sm:$0xf]
      %v1439 = vld [vmem:[%s3 + $0x1f4] sm:$0xf]
      %v1440 = vld [vmem:[%s3 + $0x1f8] sm:$0xf]
      %v1441 = vld [vmem:[%s3 + $0x1fc] sm:$0xf]
      %v1442 = vld [vmem:[%s3 + $0x200] sm:$0xf]
      %v1443 = vld [vmem:[%s3 + $0x204] sm:$0xf]
      %v1444 = vld [vmem:[%s3 + $0x208] sm:$0xf]
      %v1445 = vld [vmem:[%s3 + $0x20c] sm:$0xf]
      %v1446 = vld [vmem:[%s3 + $0x210] sm:$0xf]
      %v1447 = vld [vmem:[%s3 + $0x214] sm:$0xf]
      %v1448 = vld [vmem:[%s3 + $0x218] sm:$0xf]
      %v1449 = vld [vmem:[%s3 + $0x21c] sm:$0xf]
      %v1450 = vld [vmem:[%s3 + $0x220] sm:$0xf]
      %v1451 = vld [vmem:[%s3 + $0x224] sm:$0xf]
      %v1452 = vld [vmem:[%s3 + $0x228] sm:$0xf]
      %v1453 = vld [vmem:[%s3 + $0x22c] sm:$0xf]
      %v1454 = vld [vmem:[%s3 + $0x230] sm:$0xf]
      %v1455 = vld [vmem:[%s3 + $0x234] sm:$0xf]
      %v1456 = vld [vmem:[%s3 + $0x238] sm:$0xf]
      %v1457 = vld [vmem:[%s3 + $0x23c] sm:$0xf]
      %v1602 = vunpack.c.l.b16 %v1314
      %v1603 = vunpack.c.l.b16 %v1315
      %v1604 = vunpack.c.l.b16 %v1316
      %v1605 = vunpack.c.l.b16 %v1317
      %v1606 = vunpack.c.l.b16 %v1318
      %v1607 = vunpack.c.l.b16 %v1319
      %v1608 = vunpack.c.l.b16 %v1320
      %v1609 = vunpack.c.l.b16 %v1321
      %v1610 = vunpack.c.l.b16 %v1322
      %v1611 = vunpack.c.l.b16 %v1323
      %v1612 = vunpack.c.l.b16 %v1324
      %v1613 = vunpack.c.l.b16 %v1325
      %v1614 = vunpack.c.l.b16 %v1326
      %v1615 = vunpack.c.l.b16 %v1327
      %v1616 = vunpack.c.l.b16 %v1328
      %v1617 = vunpack.c.l.b16 %v1329
      %v1618 = vunpack.c.l.b16 %v1330
      %v1619 = vunpack.c.l.b16 %v1331
      %v1620 = vunpack.c.l.b16 %v1332
      %v1621 = vunpack.c.l.b16 %v1333
      %v1622 = vunpack.c.l.b16 %v1334
      %v1623 = vunpack.c.l.b16 %v1335
      %v1624 = vunpack.c.l.b16 %v1336
      %v1625 = vunpack.c.l.b16 %v1337
      %v1626 = vunpack.c.l.b16 %v1338
      %v1627 = vunpack.c.l.b16 %v1339
      %v1628 = vunpack.c.l.b16 %v1340
      %v1629 = vunpack.c.l.b16 %v1341
      %v1630 = vunpack.c.l.b16 %v1342
      %v1631 = vunpack.c.l.b16 %v1343
      %v1632 = vunpack.c.l.b16 %v1344
      %v1633 = vunpack.c.l.b16 %v1345
      %v1634 = vunpack.c.l.b16 %v1346
      %v1635 = vunpack.c.l.b16 %v1347
      %v1636 = vunpack.c.l.b16 %v1348
      %v1637 = vunpack.c.l.b16 %v1349
      %v1638 = vunpack.c.l.b16 %v1350
      %v1639 = vunpack.c.l.b16 %v1351
      %v1640 = vunpack.c.l.b16 %v1352
      %v1641 = vunpack.c.l.b16 %v1353
      %v1642 = vunpack.c.l.b16 %v1354
      %v1643 = vunpack.c.l.b16 %v1355
      %v1644 = vunpack.c.l.b16 %v1356
      %v1645 = vunpack.c.l.b16 %v1357
      %v1646 = vunpack.c.l.b16 %v1358
      %v1647 = vunpack.c.l.b16 %v1359
      %v1648 = vunpack.c.l.b16 %v1360
      %v1649 = vunpack.c.l.b16 %v1361
      %v1650 = vunpack.c.l.b16 %v1362
      %v1651 = vunpack.c.l.b16 %v1363
      %v1652 = vunpack.c.l.b16 %v1364
      %v1653 = vunpack.c.l.b16 %v1365
      %v1654 = vunpack.c.l.b16 %v1366
      %v1655 = vunpack.c.l.b16 %v1367
      %v1656 = vunpack.c.l.b16 %v1368
      %v1657 = vunpack.c.l.b16 %v1369
      %v1658 = vunpack.c.l.b16 %v1370
      %v1659 = vunpack.c.l.b16 %v1371
      %v1660 = vunpack.c.l.b16 %v1372
      %v1661 = vunpack.c.l.b16 %v1373
      %v1662 = vunpack.c.l.b16 %v1374
      %v1663 = vunpack.c.l.b16 %v1375
      %v1664 = vunpack.c.l.b16 %v1376
      %v1665 = vunpack.c.l.b16 %v1377
      %v1666 = vunpack.c.l.b16 %v1378
      %v1667 = vunpack.c.l.b16 %v1379
      %v1668 = vunpack.c.l.b16 %v1380
      %v1669 = vunpack.c.l.b16 %v1381
      %v1670 = vunpack.c.l.b16 %v1382
      %v1671 = vunpack.c.l.b16 %v1383
      %v1672 = vunpack.c.l.b16 %v1384
      %v1673 = vunpack.c.l.b16 %v1385
      %v1674 = vunpack.c.l.b16 %v1386
      %v1675 = vunpack.c.l.b16 %v1387
      %v1676 = vunpack.c.l.b16 %v1388
      %v1677 = vunpack.c.l.b16 %v1389
      %v1678 = vunpack.c.l.b16 %v1390
      %v1679 = vunpack.c.l.b16 %v1391
      %v1680 = vunpack.c.l.b16 %v1392
      %v1681 = vunpack.c.l.b16 %v1393
      %v1682 = vunpack.c.l.b16 %v1394
      %v1683 = vunpack.c.l.b16 %v1395
      %v1684 = vunpack.c.l.b16 %v1396
      %v1685 = vunpack.c.l.b16 %v1397
      %v1686 = vunpack.c.l.b16 %v1398
      %v1687 = vunpack.c.l.b16 %v1399
      %v1688 = vunpack.c.l.b16 %v1400
      %v1689 = vunpack.c.l.b16 %v1401
      %v1690 = vunpack.c.l.b16 %v1402
      %v1691 = vunpack.c.l.b16 %v1403
      %v1692 = vunpack.c.l.b16 %v1404
      %v1693 = vunpack.c.l.b16 %v1405
      %v1694 = vunpack.c.l.b16 %v1406
      %v1695 = vunpack.c.l.b16 %v1407
      %v1696 = vunpack.c.l.b16 %v1408
      %v1697 = vunpack.c.l.b16 %v1409
      %v1698 = vunpack.c.l.b16 %v1410
      %v1699 = vunpack.c.l.b16 %v1411
      %v1700 = vunpack.c.l.b16 %v1412
      %v1701 = vunpack.c.l.b16 %v1413
      %v1702 = vunpack.c.l.b16 %v1414
      %v1703 = vunpack.c.l.b16 %v1415
      %v1704 = vunpack.c.l.b16 %v1416
      %v1705 = vunpack.c.l.b16 %v1417
      %v1706 = vunpack.c.l.b16 %v1418
      %v1707 = vunpack.c.l.b16 %v1419
      %v1708 = vunpack.c.l.b16 %v1420
      %v1709 = vunpack.c.l.b16 %v1421
      %v1710 = vunpack.c.l.b16 %v1422
      %v1711 = vunpack.c.l.b16 %v1423
      %v1712 = vunpack.c.l.b16 %v1424
      %v1713 = vunpack.c.l.b16 %v1425
      %v1714 = vunpack.c.l.b16 %v1426
      %v1715 = vunpack.c.l.b16 %v1427
      %v1716 = vunpack.c.l.b16 %v1428
      %v1717 = vunpack.c.l.b16 %v1429
      %v1718 = vunpack.c.l.b16 %v1430
      %v1719 = vunpack.c.l.b16 %v1431
      %v1720 = vunpack.c.l.b16 %v1432
      %v1721 = vunpack.c.l.b16 %v1433
      %v1722 = vunpack.c.l.b16 %v1434
      %v1723 = vunpack.c.l.b16 %v1435
      %v1724 = vunpack.c.l.b16 %v1436
      %v1725 = vunpack.c.l.b16 %v1437
      %v1726 = vunpack.c.l.b16 %v1438
      %v1727 = vunpack.c.l.b16 %v1439
      %v1728 = vunpack.c.l.b16 %v1440
      %v1729 = vunpack.c.l.b16 %v1441
      %v1730 = vunpack.c.l.b16 %v1442
      %v1731 = vunpack.c.l.b16 %v1443
      %v1732 = vunpack.c.l.b16 %v1444
      %v1733 = vunpack.c.l.b16 %v1445
      %v1734 = vunpack.c.l.b16 %v1446
      %v1735 = vunpack.c.l.b16 %v1447
      %v1736 = vunpack.c.l.b16 %v1448
      %v1737 = vunpack.c.l.b16 %v1449
      %v1738 = vunpack.c.l.b16 %v1450
      %v1739 = vunpack.c.l.b16 %v1451
      %v1740 = vunpack.c.l.b16 %v1452
      %v1741 = vunpack.c.l.b16 %v1453
      %v1742 = vunpack.c.l.b16 %v1454
      %v1743 = vunpack.c.l.b16 %v1455
      %v1744 = vunpack.c.l.b16 %v1456
      %v1745 = vunpack.c.l.b16 %v1457
      %v1746 = vpack.c.b16 %v1603, %v1602
      %v1747 = vpack.c.b16 %v1605, %v1604
      %v1748 = vpack.c.b16 %v1607, %v1606
      %v1749 = vpack.c.b16 %v1609, %v1608
      %v1750 = vpack.c.b16 %v1611, %v1610
      %v1751 = vpack.c.b16 %v1613, %v1612
      %v1752 = vpack.c.b16 %v1615, %v1614
      %v1753 = vpack.c.b16 %v1617, %v1616
      %v1754 = vpack.c.b16 %v1619, %v1618
      %v1755 = vpack.c.b16 %v1621, %v1620
      %v1756 = vpack.c.b16 %v1623, %v1622
      %v1757 = vpack.c.b16 %v1625, %v1624
      %v1758 = vpack.c.b16 %v1627, %v1626
      %v1759 = vpack.c.b16 %v1629, %v1628
      %v1760 = vpack.c.b16 %v1631, %v1630
      %v1761 = vpack.c.b16 %v1633, %v1632
      %v1762 = vpack.c.b16 %v1635, %v1634
      %v1763 = vpack.c.b16 %v1637, %v1636
      %v1764 = vpack.c.b16 %v1639, %v1638
      %v1765 = vpack.c.b16 %v1641, %v1640
      %v1766 = vpack.c.b16 %v1643, %v1642
      %v1767 = vpack.c.b16 %v1645, %v1644
      %v1768 = vpack.c.b16 %v1647, %v1646
      %v1769 = vpack.c.b16 %v1649, %v1648
      %v1770 = vpack.c.b16 %v1651, %v1650
      %v1771 = vpack.c.b16 %v1653, %v1652
      %v1772 = vpack.c.b16 %v1655, %v1654
      %v1773 = vpack.c.b16 %v1657, %v1656
      %v1774 = vpack.c.b16 %v1659, %v1658
      %v1775 = vpack.c.b16 %v1661, %v1660
      %v1776 = vpack.c.b16 %v1663, %v1662
      %v1777 = vpack.c.b16 %v1665, %v1664
      %v1778 = vpack.c.b16 %v1667, %v1666
      %v1779 = vpack.c.b16 %v1669, %v1668
      %v1780 = vpack.c.b16 %v1671, %v1670
      %v1781 = vpack.c.b16 %v1673, %v1672
      %v1782 = vpack.c.b16 %v1675, %v1674
      %v1783 = vpack.c.b16 %v1677, %v1676
      %v1784 = vpack.c.b16 %v1679, %v1678
      %v1785 = vpack.c.b16 %v1681, %v1680
      %v1786 = vpack.c.b16 %v1683, %v1682
      %v1787 = vpack.c.b16 %v1685, %v1684
      %v1788 = vpack.c.b16 %v1687, %v1686
      %v1789 = vpack.c.b16 %v1689, %v1688
      %v1790 = vpack.c.b16 %v1691, %v1690
      %v1791 = vpack.c.b16 %v1693, %v1692
      %v1792 = vpack.c.b16 %v1695, %v1694
      %v1793 = vpack.c.b16 %v1697, %v1696
      %v1794 = vpack.c.b16 %v1699, %v1698
      %v1795 = vpack.c.b16 %v1701, %v1700
      %v1796 = vpack.c.b16 %v1703, %v1702
      %v1797 = vpack.c.b16 %v1705, %v1704
      %v1798 = vpack.c.b16 %v1707, %v1706
      %v1799 = vpack.c.b16 %v1709, %v1708
      %v1800 = vpack.c.b16 %v1711, %v1710
      %v1801 = vpack.c.b16 %v1713, %v1712
      %v1802 = vpack.c.b16 %v1715, %v1714
      %v1803 = vpack.c.b16 %v1717, %v1716
      %v1804 = vpack.c.b16 %v1719, %v1718
      %v1805 = vpack.c.b16 %v1721, %v1720
      %v1806 = vpack.c.b16 %v1723, %v1722
      %v1807 = vpack.c.b16 %v1725, %v1724
      %v1808 = vpack.c.b16 %v1727, %v1726
      %v1809 = vpack.c.b16 %v1729, %v1728
      %v1810 = vpack.c.b16 %v1731, %v1730
      %v1811 = vpack.c.b16 %v1733, %v1732
      %v1812 = vpack.c.b16 %v1735, %v1734
      %v1813 = vpack.c.b16 %v1737, %v1736
      %v1814 = vpack.c.b16 %v1739, %v1738
      %v1815 = vpack.c.b16 %v1741, %v1740
      %v1816 = vpack.c.b16 %v1743, %v1742
      %v1817 = vpack.c.b16 %v1745, %v1744
      %1890 = vmatprep.subr.bf16.mxu0 0
      %1891 = vmatpush1.bf16.msra.mxu0 %v1746
      %1892 = vmatprep.subr.bf16.mxu0 0
      %1893 = vmatpush1.bf16.msra.mxu0 %v1747
      %1894 = vmatprep.subr.bf16.mxu0 0
      %1895 = vmatpush1.bf16.msra.mxu0 %v1748
      %1896 = vmatprep.subr.bf16.mxu0 0
      %1897 = vmatpush1.bf16.msra.mxu0 %v1749
      %1898 = vmatprep.subr.bf16.mxu0 0
      %1899 = vmatpush1.bf16.msra.mxu0 %v1750
      %1900 = vmatprep.subr.bf16.mxu0 0
      %1901 = vmatpush1.bf16.msra.mxu0 %v1751
      %1902 = vmatprep.subr.bf16.mxu0 0
      %1903 = vmatpush1.bf16.msra.mxu0 %v1752
      %1904 = vmatprep.subr.bf16.mxu0 0
      %1905 = vmatpush1.bf16.msra.mxu0 %v1753
      %1906 = vmatprep.subr.bf16.mxu0 0
      %1907 = vmatpush1.bf16.msra.mxu0 %v1754
      %1908 = vmatprep.subr.bf16.mxu0 0
      %1909 = vmatpush1.bf16.msra.mxu0 %v1755
      %1910 = vmatprep.subr.bf16.mxu0 0
      %1911 = vmatpush1.bf16.msra.mxu0 %v1756
      %1912 = vmatprep.subr.bf16.mxu0 0
      %1913 = vmatpush1.bf16.msra.mxu0 %v1757
      %1914 = vmatprep.subr.bf16.mxu0 0
      %1915 = vmatpush1.bf16.msra.mxu0 %v1758
      %1916 = vmatprep.subr.bf16.mxu0 0
      %1917 = vmatpush1.bf16.msra.mxu0 %v1759
      %1918 = vmatprep.subr.bf16.mxu0 0
      %1919 = vmatpush1.bf16.msra.mxu0 %v1760
      %1920 = vmatprep.subr.bf16.mxu0 0
      %1921 = vmatpush1.bf16.msra.mxu0 %v1761
      %1922 = vmatprep.mubr.bf16.mxu0 %v1297
      %1923 = vmatmul.mubr.bf16.gmra.mrb[0].mxu0 %v1296
      %v1924 = vpop.f32.mrb[0].mxu0
      %v1925 = vadd.f32 0.0, %v1924
      %v1926 = vpop.f32.mrb[0].mxu0
      %v1927 = vpop.f32.mrb[0].mxu0
      %v1928 = vadd.f32 0.0, %v1927
      %v1929 = vpop.f32.mrb[0].mxu0
      %1930 = vmatprep.mubr.bf16.mxu0 %v1306
      %1931 = vmatmul.mubr.bf16.gmra.mrb[0].mxu0 %v1305
      %v1932 = vpop.f32.mrb[0].mxu0
      %v1933 = vadd.f32 0.0, %v1932
      %v1934 = vpop.f32.mrb[0].mxu0
      %v1935 = vpop.f32.mrb[0].mxu0
      %v1936 = vpop.f32.mrb[0].mxu0
      %1937 = vdwg.mxu0
      %1938 = vmatprep.subr.bf16.mxu0 0
      %1939 = vmatpush1.bf16.msra.mxu0 %v1762
      %1940 = vmatprep.subr.bf16.mxu0 0
      %1941 = vmatpush1.bf16.msra.mxu0 %v1763
      %1942 = vmatprep.subr.bf16.mxu0 0
      %1943 = vmatpush1.bf16.msra.mxu0 %v1764
      %1944 = vmatprep.subr.bf16.mxu0 0
      %1945 = vmatpush1.bf16.msra.mxu0 %v1765
      %1946 = vmatprep.subr.bf16.mxu0 0
      %1947 = vmatpush1.bf16.msra.mxu0 %v1766
      %1948 = vmatprep.subr.bf16.mxu0 0
      %1949 = vmatpush1.bf16.msra.mxu0 %v1767
      %1950 = vmatprep.subr.bf16.mxu0 0
      %1951 = vmatpush1.bf16.msra.mxu0 %v1768
      %1952 = vmatprep.subr.bf16.mxu0 0
      %1953 = vmatpush1.bf16.msra.mxu0 %v1769
      %1954 = vmatprep.subr.bf16.mxu0 0
      %1955 = vmatpush1.bf16.msra.mxu0 %v1770
      %1956 = vmatprep.subr.bf16.mxu0 0
      %1957 = vmatpush1.bf16.msra.mxu0 %v1771
      %1958 = vmatprep.subr.bf16.mxu0 0
      %1959 = vmatpush1.bf16.msra.mxu0 %v1772
      %1960 = vmatprep.subr.bf16.mxu0 0
      %1961 = vmatpush1.bf16.msra.mxu0 %v1773
      %1962 = vmatprep.subr.bf16.mxu0 0
      %1963 = vmatpush1.bf16.msra.mxu0 %v1774
      %1964 = vmatprep.subr.bf16.mxu0 0
      %1965 = vmatpush1.bf16.msra.mxu0 %v1775
      %1966 = vmatprep.subr.bf16.mxu0 0
      %1967 = vmatpush1.bf16.msra.mxu0 %v1776
      %1968 = vmatprep.subr.bf16.mxu0 0
      %1969 = vmatpush1.bf16.msra.mxu0 %v1777
      %1970 = vmatprep.mubr.bf16.mxu0 %v1299
      %1971 = vmatmul.mubr.bf16.gmra.mrb[0].mxu0 %v1298
      %v1972 = vpop.f32.mrb[0].mxu0
      %v1973 = vadd.f32 %v1925, %v1972
      %v1974 = vpop.f32.mrb[0].mxu0
      %v1975 = vpop.f32.mrb[0].mxu0
      %v1976 = vadd.f32 %v1928, %v1975
      %v1977 = vpop.f32.mrb[0].mxu0
      %1978 = vmatprep.mubr.bf16.mxu0 %v1308
      %1979 = vmatmul.mubr.bf16.gmra.mrb[0].mxu0 %v1307
      %v1980 = vpop.f32.mrb[0].mxu0
      %v1981 = vadd.f32 %v1933, %v1980
      %v1982 = vpop.f32.mrb[0].mxu0
      %v1983 = vpop.f32.mrb[0].mxu0
      %v1984 = vpop.f32.mrb[0].mxu0
      %1985 = vdwg.mxu0
      %1986 = vmatprep.subr.bf16.mxu0 0
      %1987 = vmatpush1.bf16.msra.mxu0 %v1778
      %1988 = vmatprep.subr.bf16.mxu0 0
      %1989 = vmatpush1.bf16.msra.mxu0 %v1779
      %1990 = vmatprep.subr.bf16.mxu0 0
      %1991 = vmatpush1.bf16.msra.mxu0 %v1780
      %1992 = vmatprep.subr.bf16.mxu0 0
      %1993 = vmatpush1.bf16.msra.mxu0 %v1781
      %1994 = vmatprep.subr.bf16.mxu0 0
      %1995 = vmatpush1.bf16.msra.mxu0 %v1782
      %1996 = vmatprep.subr.bf16.mxu0 0
      %1997 = vmatpush1.bf16.msra.mxu0 %v1783
      %1998 = vmatprep.subr.bf16.mxu0 0
      %1999 = vmatpush1.bf16.msra.mxu0 %v1784
      %2000 = vmatprep.subr.bf16.mxu0 0
      %2001 = vmatpush1.bf16.msra.mxu0 %v1785
      %2002 = vmatprep.subr.bf16.mxu0 0
      %2003 = vmatpush1.bf16.msra.mxu0 %v1786
      %2004 = vmatprep.subr.bf16.mxu0 0
      %2005 = vmatpush1.bf16.msra.mxu0 %v1787
      %2006 = vmatprep.subr.bf16.mxu0 0
      %2007 = vmatpush1.bf16.msra.mxu0 %v1788
      %2008 = vmatprep.subr.bf16.mxu0 0
      %2009 = vmatpush1.bf16.msra.mxu0 %v1789
      %2010 = vmatprep.subr.bf16.mxu0 0
      %2011 = vmatpush1.bf16.msra.mxu0 %v1790
      %2012 = vmatprep.subr.bf16.mxu0 0
      %2013 = vmatpush1.bf16.msra.mxu0 %v1791
      %2014 = vmatprep.subr.bf16.mxu0 0
      %2015 = vmatpush1.bf16.msra.mxu0 %v1792
      %2016 = vmatprep.subr.bf16.mxu0 0
      %2017 = vmatpush1.bf16.msra.mxu0 %v1793
      %2018 = vmatprep.mubr.bf16.mxu0 %v1301
      %2019 = vmatmul.mubr.bf16.gmra.mrb[0].mxu0 %v1300
      %v2020 = vpop.f32.mrb[0].mxu0
      %v2021 = vadd.f32 %v1973, %v2020
      %v2022 = vpop.f32.mrb[0].mxu0
      %v2023 = vpop.f32.mrb[0].mxu0
      %v2024 = vadd.f32 %v1976, %v2023
      %v2025 = vpop.f32.mrb[0].mxu0
      %2026 = vmatprep.mubr.bf16.mxu0 %v1310
      %2027 = vmatmul.mubr.bf16.gmra.mrb[0].mxu0 %v1309
      %v2028 = vpop.f32.mrb[0].mxu0
      %v2029 = vadd.f32 %v1981, %v2028
      %v2030 = vpop.f32.mrb[0].mxu0
      %v2031 = vpop.f32.mrb[0].mxu0
      %v2032 = vpop.f32.mrb[0].mxu0
      %2033 = vdwg.mxu0
      %2034 = vmatprep.subr.bf16.mxu0 0
      %2035 = vmatpush1.bf16.msra.mxu0 %v1794
      %2036 = vmatprep.subr.bf16.mxu0 0
      %2037 = vmatpush1.bf16.msra.mxu0 %v1795
      %2038 = vmatprep.subr.bf16.mxu0 0
      %2039 = vmatpush1.bf16.msra.mxu0 %v1796
      %2040 = vmatprep.subr.bf16.mxu0 0
      %2041 = vmatpush1.bf16.msra.mxu0 %v1797
      %2042 = vmatprep.subr.bf16.mxu0 0
      %2043 = vmatpush1.bf16.msra.mxu0 %v1798
      %2044 = vmatprep.subr.bf16.mxu0 0
      %2045 = vmatpush1.bf16.msra.mxu0 %v1799
      %2046 = vmatprep.subr.bf16.mxu0 0
      %2047 = vmatpush1.bf16.msra.mxu0 %v1800
      %2048 = vmatprep.subr.bf16.mxu0 0
      %2049 = vmatpush1.bf16.msra.mxu0 %v1801
      %2050 = vmatprep.subr.bf16.mxu0 0
      %2051 = vmatpush1.bf16.msra.mxu0 %v1802
      %2052 = vmatprep.subr.bf16.mxu0 0
      %2053 = vmatpush1.bf16.msra.mxu0 %v1803
      %2054 = vmatprep.subr.bf16.mxu0 0
      %2055 = vmatpush1.bf16.msra.mxu0 %v1804
      %2056 = vmatprep.subr.bf16.mxu0 0
      %2057 = vmatpush1.bf16.msra.mxu0 %v1805
      %2058 = vmatprep.subr.bf16.mxu0 0
      %2059 = vmatpush1.bf16.msra.mxu0 %v1806
      %2060 = vmatprep.subr.bf16.mxu0 0
      %2061 = vmatpush1.bf16.msra.mxu0 %v1807
      %2062 = vmatprep.subr.bf16.mxu0 0
      %2063 = vmatpush1.bf16.msra.mxu0 %v1808
      %2064 = vmatprep.subr.bf16.mxu0 0
      %2065 = vmatpush1.bf16.msra.mxu0 %v1809
      %2066 = vmatprep.mubr.bf16.mxu0 %v1303
      %2067 = vmatmul.mubr.bf16.gmra.mrb[0].mxu0 %v1302
      %v2068 = vpop.f32.mrb[0].mxu0
      %v2069 = vadd.f32 %v2021, %v2068
      %v2070 = vpop.f32.mrb[0].mxu0
      %v2071 = vpop.f32.mrb[0].mxu0
      %v2072 = vadd.f32 %v2024, %v2071
      %v2073 = vpop.f32.mrb[0].mxu0
      %2074 = vmatprep.mubr.bf16.mxu0 %v1312
      %2075 = vmatmul.mubr.bf16.gmra.mrb[0].mxu0 %v1311
      %v2076 = vpop.f32.mrb[0].mxu0
      %v2077 = vadd.f32 %v2029, %v2076
      %v2078 = vpop.f32.mrb[0].mxu0
      %v2079 = vpop.f32.mrb[0].mxu0
      %v2080 = vpop.f32.mrb[0].mxu0
      %2081 = vdwg.mxu0
      %2082 = vmatprep.subr.bf16.mxu0 0
      %2083 = vmatpush1.bf16.msra.mxu0 %v1810
      %2084 = vmatprep.subr.bf16.mxu0 0
      %2085 = vmatpush1.bf16.msra.mxu0 %v1811
      %2086 = vmatprep.subr.bf16.mxu0 0
      %2087 = vmatpush1.bf16.msra.mxu0 %v1812
      %2088 = vmatprep.subr.bf16.mxu0 0
      %2089 = vmatpush1.bf16.msra.mxu0 %v1813
      %2090 = vmatprep.subr.bf16.mxu0 0
      %2091 = vmatpush1.bf16.msra.mxu0 %v1814
      %2092 = vmatprep.subr.bf16.mxu0 0
      %2093 = vmatpush1.bf16.msra.mxu0 %v1815
      %2094 = vmatprep.subr.bf16.mxu0 0
      %2095 = vmatpush1.bf16.msra.mxu0 %v1816
      %2096 = vmatprep.subr.bf16.mxu0 0
      %2097 = vmatpush1.bf16.msra.mxu0 %v1817
      %2098 = vmatprep.subr.bf16.mxu0 0
      %2099 = vmatpush1.bf16.msra.mxu0 0
      %2100 = vmatprep.subr.bf16.mxu0 0
      %2101 = vmatpush1.bf16.msra.mxu0 0
      %2102 = vmatprep.subr.bf16.mxu0 0
      %2103 = vmatpush1.bf16.msra.mxu0 0
      %2104 = vmatprep.subr.bf16.mxu0 0
      %2105 = vmatpush1.bf16.msra.mxu0 0
      %2106 = vmatprep.subr.bf16.mxu0 0
      %2107 = vmatpush1.bf16.msra.mxu0 0
      %2108 = vmatprep.subr.bf16.mxu0 0
      %2109 = vmatpush1.bf16.msra.mxu0 0
      %2110 = vmatprep.subr.bf16.mxu0 0
      %2111 = vmatpush1.bf16.msra.mxu0 0
      %2112 = vmatprep.subr.bf16.mxu0 0
      %2113 = vmatpush1.bf16.msra.mxu0 0
      %2114 = vmatprep.mubr.bf16.mxu0 0
      %2115 = vmatmul.mubr.bf16.gmra.mrb[0].mxu0 %v1304
      %v2116 = vpop.f32.mrb[0].mxu0
      %v2117 = vadd.f32 %v2069, %v2116
      %v2118 = vpop.f32.mrb[0].mxu0
      %v2119 = vpop.f32.mrb[0].mxu0
      %v2120 = vadd.f32 %v2072, %v2119
      %v2121 = vpop.f32.mrb[0].mxu0
      %2122 = vmatprep.mubr.bf16.mxu0 0
      %2123 = vmatmul.mubr.bf16.gmra.mrb[0].mxu0 %v1313
      %v2124 = vpop.f32.mrb[0].mxu0
      %v2125 = vadd.f32 %v2077, %v2124
      %v2126 = vpop.f32.mrb[0].mxu0
      %v2127 = vpop.f32.mrb[0].mxu0
      %v2128 = vpop.f32.mrb[0].mxu0
      %2129 = vdwg.mxu0
      %v2130 = vmax.f32 %v2117, 0.0
      %v2131 = vmax.f32 %v2120, 0.0
      %v2132 = vmax.f32 %v2125, 0.0
      %v2133 = vpack.c.bf16 %v2131, %v2130
      %v2134 = vpack.c.bf16 %v2132, %v2132
      %v2135 = vld [vmem:[%s4] sm:$0xf]
      %v2136 = vld [vmem:[%s4 + $0x4] sm:$0xf]
      %v2137 = vld [vmem:[%s4 + $0x8] sm:$0xf]
      %v2138 = vld [vmem:[%s4 + $0xc] sm:$0xf]
      %v2139 = vld [vmem:[%s4 + $0x10] sm:$0xf]
      %v2140 = vld [vmem:[%s4 + $0x14] sm:$0xf]
      %v2141 = vld [vmem:[%s4 + $0x18] sm:$0xf]
      %v2142 = vld [vmem:[%s4 + $0x1c] sm:$0xf]
      %v2143 = vld [vmem:[%s4 + $0x20] sm:$0xf]
      %v2144 = vld [vmem:[%s4 + $0x24] sm:$0xf]
      %v2145 = vld [vmem:[%s4 + $0x28] sm:$0xf]
      %v2146 = vld [vmem:[%s4 + $0x2c] sm:$0xf]
      %v2147 = vld [vmem:[%s4 + $0x30] sm:$0xf]
      %v2148 = vld [vmem:[%s4 + $0x34] sm:$0xf]
      %v2149 = vld [vmem:[%s4 + $0x38] sm:$0xf]
      %v2150 = vld [vmem:[%s4 + $0x3c] sm:$0xf]
      %v2167 = vunpack.c.l.b16 %v2135
      %v2168 = vunpack.c.l.b16 %v2136
      %v2169 = vunpack.c.l.b16 %v2137
      %v2170 = vunpack.c.l.b16 %v2138
      %v2171 = vunpack.c.l.b16 %v2139
      %v2172 = vunpack.c.l.b16 %v2140
      %v2173 = vunpack.c.l.b16 %v2141
      %v2174 = vunpack.c.l.b16 %v2142
      %v2175 = vunpack.c.l.b16 %v2143
      %v2176 = vunpack.c.l.b16 %v2144
      %v2177 = vunpack.c.l.b16 %v2145
      %v2178 = vunpack.c.l.b16 %v2146
      %v2179 = vunpack.c.l.b16 %v2147
      %v2180 = vunpack.c.l.b16 %v2148
      %v2181 = vunpack.c.l.b16 %v2149
      %v2182 = vunpack.c.l.b16 %v2150
      %v2183 = vpack.c.b16 %v2168, %v2167
      %v2184 = vpack.c.b16 %v2170, %v2169
      %v2185 = vpack.c.b16 %v2172, %v2171
      %v2186 = vpack.c.b16 %v2174, %v2173
      %v2187 = vpack.c.b16 %v2176, %v2175
      %v2188 = vpack.c.b16 %v2178, %v2177
      %v2189 = vpack.c.b16 %v2180, %v2179
      %v2190 = vpack.c.b16 %v2182, %v2181
      %2199 = vmatprep.subr.bf16.mxu0 0
      %2200 = vmatpush1.bf16.msra.mxu0 %v2183
      %2201 = vmatprep.subr.bf16.mxu0 0
      %2202 = vmatpush1.bf16.msra.mxu0 %v2184
      %2203 = vmatprep.subr.bf16.mxu0 0
      %2204 = vmatpush1.bf16.msra.mxu0 %v2185
      %2205 = vmatprep.subr.bf16.mxu0 0
      %2206 = vmatpush1.bf16.msra.mxu0 %v2186
      %2207 = vmatprep.subr.bf16.mxu0 0
      %2208 = vmatpush1.bf16.msra.mxu0 %v2187
      %2209 = vmatprep.subr.bf16.mxu0 0
      %2210 = vmatpush1.bf16.msra.mxu0 %v2188
      %2211 = vmatprep.subr.bf16.mxu0 0
      %2212 = vmatpush1.bf16.msra.mxu0 %v2189
      %2213 = vmatprep.subr.bf16.mxu0 0
      %2214 = vmatpush1.bf16.msra.mxu0 %v2190
      %2215 = vmatprep.subr.bf16.mxu0 0
      %2216 = vmatpush1.bf16.msra.mxu0 0
      %2217 = vmatprep.subr.bf16.mxu0 0
      %2218 = vmatpush1.bf16.msra.mxu0 0
      %2219 = vmatprep.subr.bf16.mxu0 0
      %2220 = vmatpush1.bf16.msra.mxu0 0
      %2221 = vmatprep.subr.bf16.mxu0 0
      %2222 = vmatpush1.bf16.msra.mxu0 0
      %2223 = vmatprep.subr.bf16.mxu0 0
      %2224 = vmatpush1.bf16.msra.mxu0 0
      %2225 = vmatprep.subr.bf16.mxu0 0
      %2226 = vmatpush1.bf16.msra.mxu0 0
      %2227 = vmatprep.subr.bf16.mxu0 0
      %2228 = vmatpush1.bf16.msra.mxu0 0
      %2229 = vmatprep.subr.bf16.mxu0 0
      %2230 = vmatpush1.bf16.msra.mxu0 0
      %2231 = vmatprep.mubr.bf16.mxu0 0
      %2232 = vmatmul.mubr.bf16.gmra.mrb[0].mxu0 %v2133
      %v2233 = vpop.f32.mrb[0].mxu0
      %v2234 = vadd.f32 0.0, %v2233
      %v2235 = vpop.f32.mrb[0].mxu0
      %v2236 = vpop.f32.mrb[0].mxu0
      %v2237 = vadd.f32 0.0, %v2236
      %v2238 = vpop.f32.mrb[0].mxu0
      %2239 = vmatprep.mubr.bf16.mxu0 0
      %2240 = vmatmul.mubr.bf16.gmra.mrb[0].mxu0 %v2134
      %v2241 = vpop.f32.mrb[0].mxu0
      %v2242 = vadd.f32 0.0, %v2241
      %v2243 = vpop.f32.mrb[0].mxu0
      %v2244 = vpop.f32.mrb[0].mxu0
      %v2245 = vpop.f32.mrb[0].mxu0
      %2246 = vdwg.mxu0
      %v2250 = vrot.slane %v2234, 1
      %v2251 = vrot.slane %v2237, 1
      %v2252 = vsel %vm290, %v2250, %v2251
      %v2253 = vrot.slane %v2242, 1
      %v2254 = vsel %vm290, %v2251, %v2253
      %v2259 = vadd.f32 %v1222, %v2250
      %v2260 = vadd.f32 %v1215, %v2252
      %v2261 = vadd.f32 %v1217, %v2254
      %v2262 = vadd.f32 %v1223, %v2253
      %v2267 = vrot.slane %v2259, 7
      %v2268 = vrot.slane %v2260, 7
      %v2269 = vsel %vm323, %v2267, %v2268
      %v2270 = vrot.slane %v2261, 7
      %v2271 = vsel %vm323, %v2268, %v2270
      %v2272 = vrot.slane %v2262, 7
      %v2273 = vsel %vm323, %v2270, %v2272
      %v2277 = vsel %vm1204, %v2269, 0.0
      %v2278 = vsel %vm1205, %v2271, 0.0
      %v2279 = vsel %vm1206, %v2273, 0.0
      %v2283 = vrot.slane %v2277, 1
      %v2284 = vrot.slane %v2278, 1
      %v2285 = vsel %vm290, %v2283, %v2284
      %v2286 = vrot.slane %v2279, 1
      %v2287 = vsel %vm290, %v2284, %v2286
      %v2292 = vsel %vm290, 0.0, %v2283
      %v2293 = vsel %vm290, %v2286, 0.0
      %v2294 = vmax.f32 %v2292, 0.0
      %v2295 = vmax.f32 %v2285, 0.0
      %v2296 = vmax.f32 %v2287, 0.0
      %v2297 = vmax.f32 %v2293, 0.0
      %v2302 = vrot.slane %v2294, 1
      %v2303 = vrot.slane %v2295, 1
      %v2304 = vsel %vm290, %v2302, %v2303
      %v2305 = vrot.slane %v2296, 1
      %v2306 = vsel %vm290, %v2303, %v2305
      %v2307 = vrot.slane %v2297, 1
      %v2308 = vsel %vm290, %v2305, %v2307
      %v2312 = vrot.slane %v2294, 2
      %v2313 = vrot.slane %v2295, 2
      %v2314 = vsel %vm301, %v2312, %v2313
      %v2315 = vrot.slane %v2296, 2
      %v2316 = vsel %vm301, %v2313, %v2315
      %v2317 = vrot.slane %v2297, 2
      %v2318 = vsel %vm301, %v2315, %v2317
      %v2322 = vrot.slane %v2294, 6
      %v2323 = vrot.slane %v2295, 6
      %v2324 = vsel %vm312, %v2322, %v2323
      %v2325 = vrot.slane %v2296, 6
      %v2326 = vsel %vm312, %v2323, %v2325
      %v2327 = vrot.slane %v2297, 6
      %v2328 = vsel %vm312, %v2325, %v2327
      %v2332 = vrot.slane %v2294, 7
      %v2333 = vrot.slane %v2295, 7
      %v2334 = vsel %vm323, %v2332, %v2333
      %v2335 = vrot.slane %v2296, 7
      %v2336 = vsel %vm323, %v2333, %v2335
      %v2337 = vrot.slane %v2297, 7
      %v2338 = vsel %vm323, %v2335, %v2337
      %v2342 = vrot.slane %v2295, 4
      %v2343 = vrot.slane %v2296, 4
      %v2344 = vsel %vm335, %v2342, %v2343
      %v2345 = vrot.slane %v2297, 4
      %v2346 = vsel %vm335, %v2343, %v2345
      %v2347 = vsel %vm335, %v2345, %v1278
      %v2351 = vrot.slane %v2295, 5
      %v2352 = vrot.slane %v2296, 5
      %v2353 = vsel %vm346, %v2351, %v2352
      %v2354 = vrot.slane %v2297, 5
      %v2355 = vsel %vm346, %v2352, %v2354
      %v2356 = vsel %vm346, %v2354, %v1288
      %v2360 = vsel %vm312, %v2327, %v1293
      %v2362 = vpack.c.bf16 %v2295, %v2294
      %v2363 = vpack.c.bf16 %v2306, %v2304
      %v2364 = vpack.c.bf16 %v2316, %v2314
      %v2365 = vpack.c.bf16 %v2326, %v2324
      %v2366 = vpack.c.bf16 %v2336, %v2334
      %v2367 = vpack.c.bf16 %v2296, %v2295
      %v2368 = vpack.c.bf16 %v2346, %v2344
      %v2369 = vpack.c.bf16 %v2355, %v2353
      %v2370 = vpack.c.bf16 %v2328, %v2326
      %v2371 = vpack.c.bf16 %v2296, %v2296
      %v2372 = vpack.c.bf16 %v2308, %v2308
      %v2373 = vpack.c.bf16 %v2318, %v2318
      %v2374 = vpack.c.bf16 %v2328, %v2328
      %v2375 = vpack.c.bf16 %v2338, %v2338
      %v2376 = vpack.c.bf16 %v2297, %v2297
      %v2377 = vpack.c.bf16 %v2347, %v2347
      %v2378 = vpack.c.bf16 %v2356, %v2356
      %v2379 = vpack.c.bf16 %v2360, %v2360
      %s2380 = scalar_lea.vmem %s3, 576
      %v2381 = vld [vmem:[%s2380] sm:$0xf]
      %v2382 = vld [vmem:[%s2380 + $0x4] sm:$0xf]
      %v2383 = vld [vmem:[%s2380 + $0x8] sm:$0xf]
      %v2384 = vld [vmem:[%s2380 + $0xc] sm:$0xf]
      %v2385 = vld [vmem:[%s2380 + $0x10] sm:$0xf]
      %v2386 = vld [vmem:[%s2380 + $0x14] sm:$0xf]
      %v2387 = vld [vmem:[%s2380 + $0x18] sm:$0xf]
      %v2388 = vld [vmem:[%s2380 + $0x1c] sm:$0xf]
      %v2389 = vld [vmem:[%s2380 + $0x20] sm:$0xf]
      %v2390 = vld [vmem:[%s2380 + $0x24] sm:$0xf]
      %v2391 = vld [vmem:[%s2380 + $0x28] sm:$0xf]
      %v2392 = vld [vmem:[%s2380 + $0x2c] sm:$0xf]
      %v2393 = vld [vmem:[%s2380 + $0x30] sm:$0xf]
      %v2394 = vld [vmem:[%s2380 + $0x34] sm:$0xf]
      %v2395 = vld [vmem:[%s2380 + $0x38] sm:$0xf]
      %v2396 = vld [vmem:[%s2380 + $0x3c] sm:$0xf]
      %v2397 = vld [vmem:[%s2380 + $0x40] sm:$0xf]
      %v2398 = vld [vmem:[%s2380 + $0x44] sm:$0xf]
      %v2399 = vld [vmem:[%s2380 + $0x48] sm:$0xf]
      %v2400 = vld [vmem:[%s2380 + $0x4c] sm:$0xf]
      %v2401 = vld [vmem:[%s2380 + $0x50] sm:$0xf]
      %v2402 = vld [vmem:[%s2380 + $0x54] sm:$0xf]
      %v2403 = vld [vmem:[%s2380 + $0x58] sm:$0xf]
      %v2404 = vld [vmem:[%s2380 + $0x5c] sm:$0xf]
      %v2405 = vld [vmem:[%s2380 + $0x60] sm:$0xf]
      %v2406 = vld [vmem:[%s2380 + $0x64] sm:$0xf]
      %v2407 = vld [vmem:[%s2380 + $0x68] sm:$0xf]
      %v2408 = vld [vmem:[%s2380 + $0x6c] sm:$0xf]
      %v2409 = vld [vmem:[%s2380 + $0x70] sm:$0xf]
      %v2410 = vld [vmem:[%s2380 + $0x74] sm:$0xf]
      %v2411 = vld [vmem:[%s2380 + $0x78] sm:$0xf]
      %v2412 = vld [vmem:[%s2380 + $0x7c] sm:$0xf]
      %v2413 = vld [vmem:[%s2380 + $0x80] sm:$0xf]
      %v2414 = vld [vmem:[%s2380 + $0x84] sm:$0xf]
      %v2415 = vld [vmem:[%s2380 + $0x88] sm:$0xf]
      %v2416 = vld [vmem:[%s2380 + $0x8c] sm:$0xf]
      %v2417 = vld [vmem:[%s2380 + $0x90] sm:$0xf]
      %v2418 = vld [vmem:[%s2380 + $0x94] sm:$0xf]
      %v2419 = vld [vmem:[%s2380 + $0x98] sm:$0xf]
      %v2420 = vld [vmem:[%s2380 + $0x9c] sm:$0xf]
      %v2421 = vld [vmem:[%s2380 + $0xa0] sm:$0xf]
      %v2422 = vld [vmem:[%s2380 + $0xa4] sm:$0xf]
      %v2423 = vld [vmem:[%s2380 + $0xa8] sm:$0xf]
      %v2424 = vld [vmem:[%s2380 + $0xac] sm:$0xf]
      %v2425 = vld [vmem:[%s2380 + $0xb0] sm:$0xf]
      %v2426 = vld [vmem:[%s2380 + $0xb4] sm:$0xf]
      %v2427 = vld [vmem:[%s2380 + $0xb8] sm:$0xf]
      %v2428 = vld [vmem:[%s2380 + $0xbc] sm:$0xf]
      %v2429 = vld [vmem:[%s2380 + $0xc0] sm:$0xf]
      %v2430 = vld [vmem:[%s2380 + $0xc4] sm:$0xf]
      %v2431 = vld [vmem:[%s2380 + $0xc8] sm:$0xf]
      %v2432 = vld [vmem:[%s2380 + $0xcc] sm:$0xf]
      %v2433 = vld [vmem:[%s2380 + $0xd0] sm:$0xf]
      %v2434 = vld [vmem:[%s2380 + $0xd4] sm:$0xf]
      %v2435 = vld [vmem:[%s2380 + $0xd8] sm:$0xf]
      %v2436 = vld [vmem:[%s2380 + $0xdc] sm:$0xf]
      %v2437 = vld [vmem:[%s2380 + $0xe0] sm:$0xf]
      %v2438 = vld [vmem:[%s2380 + $0xe4] sm:$0xf]
      %v2439 = vld [vmem:[%s2380 + $0xe8] sm:$0xf]
      %v2440 = vld [vmem:[%s2380 + $0xec] sm:$0xf]
      %v2441 = vld [vmem:[%s2380 + $0xf0] sm:$0xf]
      %v2442 = vld [vmem:[%s2380 + $0xf4] sm:$0xf]
      %v2443 = vld [vmem:[%s2380 + $0xf8] sm:$0xf]
      %v2444 = vld [vmem:[%s2380 + $0xfc] sm:$0xf]
      %v2445 = vld [vmem:[%s2380 + $0x100] sm:$0xf]
      %v2446 = vld [vmem:[%s2380 + $0x104] sm:$0xf]
      %v2447 = vld [vmem:[%s2380 + $0x108] sm:$0xf]
      %v2448 = vld [vmem:[%s2380 + $0x10c] sm:$0xf]
      %v2449 = vld [vmem:[%s2380 + $0x110] sm:$0xf]
      %v2450 = vld [vmem:[%s2380 + $0x114] sm:$0xf]
      %v2451 = vld [vmem:[%s2380 + $0x118] sm:$0xf]
      %v2452 = vld [vmem:[%s2380 + $0x11c] sm:$0xf]
      %v2453 = vld [vmem:[%s2380 + $0x120] sm:$0xf]
      %v2454 = vld [vmem:[%s2380 + $0x124] sm:$0xf]
      %v2455 = vld [vmem:[%s2380 + $0x128] sm:$0xf]
      %v2456 = vld [vmem:[%s2380 + $0x12c] sm:$0xf]
      %v2457 = vld [vmem:[%s2380 + $0x130] sm:$0xf]
      %v2458 = vld [vmem:[%s2380 + $0x134] sm:$0xf]
      %v2459 = vld [vmem:[%s2380 + $0x138] sm:$0xf]
      %v2460 = vld [vmem:[%s2380 + $0x13c] sm:$0xf]
      %v2461 = vld [vmem:[%s2380 + $0x140] sm:$0xf]
      %v2462 = vld [vmem:[%s2380 + $0x144] sm:$0xf]
      %v2463 = vld [vmem:[%s2380 + $0x148] sm:$0xf]
      %v2464 = vld [vmem:[%s2380 + $0x14c] sm:$0xf]
      %v2465 = vld [vmem:[%s2380 + $0x150] sm:$0xf]
      %v2466 = vld [vmem:[%s2380 + $0x154] sm:$0xf]
      %v2467 = vld [vmem:[%s2380 + $0x158] sm:$0xf]
      %v2468 = vld [vmem:[%s2380 + $0x15c] sm:$0xf]
      %v2469 = vld [vmem:[%s2380 + $0x160] sm:$0xf]
      %v2470 = vld [vmem:[%s2380 + $0x164] sm:$0xf]
      %v2471 = vld [vmem:[%s2380 + $0x168] sm:$0xf]
      %v2472 = vld [vmem:[%s2380 + $0x16c] sm:$0xf]
      %v2473 = vld [vmem:[%s2380 + $0x170] sm:$0xf]
      %v2474 = vld [vmem:[%s2380 + $0x174] sm:$0xf]
      %v2475 = vld [vmem:[%s2380 + $0x178] sm:$0xf]
      %v2476 = vld [vmem:[%s2380 + $0x17c] sm:$0xf]
      %v2477 = vld [vmem:[%s2380 + $0x180] sm:$0xf]
      %v2478 = vld [vmem:[%s2380 + $0x184] sm:$0xf]
      %v2479 = vld [vmem:[%s2380 + $0x188] sm:$0xf]
      %v2480 = vld [vmem:[%s2380 + $0x18c] sm:$0xf]
      %v2481 = vld [vmem:[%s2380 + $0x190] sm:$0xf]
      %v2482 = vld [vmem:[%s2380 + $0x194] sm:$0xf]
      %v2483 = vld [vmem:[%s2380 + $0x198] sm:$0xf]
      %v2484 = vld [vmem:[%s2380 + $0x19c] sm:$0xf]
      %v2485 = vld [vmem:[%s2380 + $0x1a0] sm:$0xf]
      %v2486 = vld [vmem:[%s2380 + $0x1a4] sm:$0xf]
      %v2487 = vld [vmem:[%s2380 + $0x1a8] sm:$0xf]
      %v2488 = vld [vmem:[%s2380 + $0x1ac] sm:$0xf]
      %v2489 = vld [vmem:[%s2380 + $0x1b0] sm:$0xf]
      %v2490 = vld [vmem:[%s2380 + $0x1b4] sm:$0xf]
      %v2491 = vld [vmem:[%s2380 + $0x1b8] sm:$0xf]
      %v2492 = vld [vmem:[%s2380 + $0x1bc] sm:$0xf]
      %v2493 = vld [vmem:[%s2380 + $0x1c0] sm:$0xf]
      %v2494 = vld [vmem:[%s2380 + $0x1c4] sm:$0xf]
      %v2495 = vld [vmem:[%s2380 + $0x1c8] sm:$0xf]
      %v2496 = vld [vmem:[%s2380 + $0x1cc] sm:$0xf]
      %v2497 = vld [vmem:[%s2380 + $0x1d0] sm:$0xf]
      %v2498 = vld [vmem:[%s2380 + $0x1d4] sm:$0xf]
      %v2499 = vld [vmem:[%s2380 + $0x1d8] sm:$0xf]
      %v2500 = vld [vmem:[%s2380 + $0x1dc] sm:$0xf]
      %v2501 = vld [vmem:[%s2380 + $0x1e0] sm:$0xf]
      %v2502 = vld [vmem:[%s2380 + $0x1e4] sm:$0xf]
      %v2503 = vld [vmem:[%s2380 + $0x1e8] sm:$0xf]
      %v2504 = vld [vmem:[%s2380 + $0x1ec] sm:$0xf]
      %v2505 = vld [vmem:[%s2380 + $0x1f0] sm:$0xf]
      %v2506 = vld [vmem:[%s2380 + $0x1f4] sm:$0xf]
      %v2507 = vld [vmem:[%s2380 + $0x1f8] sm:$0xf]
      %v2508 = vld [vmem:[%s2380 + $0x1fc] sm:$0xf]
      %v2509 = vld [vmem:[%s2380 + $0x200] sm:$0xf]
      %v2510 = vld [vmem:[%s2380 + $0x204] sm:$0xf]
      %v2511 = vld [vmem:[%s2380 + $0x208] sm:$0xf]
      %v2512 = vld [vmem:[%s2380 + $0x20c] sm:$0xf]
      %v2513 = vld [vmem:[%s2380 + $0x210] sm:$0xf]
      %v2514 = vld [vmem:[%s2380 + $0x214] sm:$0xf]
      %v2515 = vld [vmem:[%s2380 + $0x218] sm:$0xf]
      %v2516 = vld [vmem:[%s2380 + $0x21c] sm:$0xf]
      %v2517 = vld [vmem:[%s2380 + $0x220] sm:$0xf]
      %v2518 = vld [vmem:[%s2380 + $0x224] sm:$0xf]
      %v2519 = vld [vmem:[%s2380 + $0x228] sm:$0xf]
      %v2520 = vld [vmem:[%s2380 + $0x22c] sm:$0xf]
      %v2521 = vld [vmem:[%s2380 + $0x230] sm:$0xf]
      %v2522 = vld [vmem:[%s2380 + $0x234] sm:$0xf]
      %v2523 = vld [vmem:[%s2380 + $0x238] sm:$0xf]
      %v2524 = vld [vmem:[%s2380 + $0x23c] sm:$0xf]
      %v2669 = vunpack.c.l.b16 %v2381
      %v2670 = vunpack.c.l.b16 %v2382
      %v2671 = vunpack.c.l.b16 %v2383
      %v2672 = vunpack.c.l.b16 %v2384
      %v2673 = vunpack.c.l.b16 %v2385
      %v2674 = vunpack.c.l.b16 %v2386
      %v2675 = vunpack.c.l.b16 %v2387
      %v2676 = vunpack.c.l.b16 %v2388
      %v2677 = vunpack.c.l.b16 %v2389
      %v2678 = vunpack.c.l.b16 %v2390
      %v2679 = vunpack.c.l.b16 %v2391
      %v2680 = vunpack.c.l.b16 %v2392
      %v2681 = vunpack.c.l.b16 %v2393
      %v2682 = vunpack.c.l.b16 %v2394
      %v2683 = vunpack.c.l.b16 %v2395
      %v2684 = vunpack.c.l.b16 %v2396
      %v2685 = vunpack.c.l.b16 %v2397
      %v2686 = vunpack.c.l.b16 %v2398
      %v2687 = vunpack.c.l.b16 %v2399
      %v2688 = vunpack.c.l.b16 %v2400
      %v2689 = vunpack.c.l.b16 %v2401
      %v2690 = vunpack.c.l.b16 %v2402
      %v2691 = vunpack.c.l.b16 %v2403
      %v2692 = vunpack.c.l.b16 %v2404
      %v2693 = vunpack.c.l.b16 %v2405
      %v2694 = vunpack.c.l.b16 %v2406
      %v2695 = vunpack.c.l.b16 %v2407
      %v2696 = vunpack.c.l.b16 %v2408
      %v2697 = vunpack.c.l.b16 %v2409
      %v2698 = vunpack.c.l.b16 %v2410
      %v2699 = vunpack.c.l.b16 %v2411
      %v2700 = vunpack.c.l.b16 %v2412
      %v2701 = vunpack.c.l.b16 %v2413
      %v2702 = vunpack.c.l.b16 %v2414
      %v2703 = vunpack.c.l.b16 %v2415
      %v2704 = vunpack.c.l.b16 %v2416
      %v2705 = vunpack.c.l.b16 %v2417
      %v2706 = vunpack.c.l.b16 %v2418
      %v2707 = vunpack.c.l.b16 %v2419
      %v2708 = vunpack.c.l.b16 %v2420
      %v2709 = vunpack.c.l.b16 %v2421
      %v2710 = vunpack.c.l.b16 %v2422
      %v2711 = vunpack.c.l.b16 %v2423
      %v2712 = vunpack.c.l.b16 %v2424
      %v2713 = vunpack.c.l.b16 %v2425
      %v2714 = vunpack.c.l.b16 %v2426
      %v2715 = vunpack.c.l.b16 %v2427
      %v2716 = vunpack.c.l.b16 %v2428
      %v2717 = vunpack.c.l.b16 %v2429
      %v2718 = vunpack.c.l.b16 %v2430
      %v2719 = vunpack.c.l.b16 %v2431
      %v2720 = vunpack.c.l.b16 %v2432
      %v2721 = vunpack.c.l.b16 %v2433
      %v2722 = vunpack.c.l.b16 %v2434
      %v2723 = vunpack.c.l.b16 %v2435
      %v2724 = vunpack.c.l.b16 %v2436
      %v2725 = vunpack.c.l.b16 %v2437
      %v2726 = vunpack.c.l.b16 %v2438
      %v2727 = vunpack.c.l.b16 %v2439
      %v2728 = vunpack.c.l.b16 %v2440
      %v2729 = vunpack.c.l.b16 %v2441
      %v2730 = vunpack.c.l.b16 %v2442
      %v2731 = vunpack.c.l.b16 %v2443
      %v2732 = vunpack.c.l.b16 %v2444
      %v2733 = vunpack.c.l.b16 %v2445
      %v2734 = vunpack.c.l.b16 %v2446
      %v2735 = vunpack.c.l.b16 %v2447
      %v2736 = vunpack.c.l.b16 %v2448
      %v2737 = vunpack.c.l.b16 %v2449
      %v2738 = vunpack.c.l.b16 %v2450
      %v2739 = vunpack.c.l.b16 %v2451
      %v2740 = vunpack.c.l.b16 %v2452
      %v2741 = vunpack.c.l.b16 %v2453
      %v2742 = vunpack.c.l.b16 %v2454
      %v2743 = vunpack.c.l.b16 %v2455
      %v2744 = vunpack.c.l.b16 %v2456
      %v2745 = vunpack.c.l.b16 %v2457
      %v2746 = vunpack.c.l.b16 %v2458
      %v2747 = vunpack.c.l.b16 %v2459
      %v2748 = vunpack.c.l.b16 %v2460
      %v2749 = vunpack.c.l.b16 %v2461
      %v2750 = vunpack.c.l.b16 %v2462
      %v2751 = vunpack.c.l.b16 %v2463
      %v2752 = vunpack.c.l.b16 %v2464
      %v2753 = vunpack.c.l.b16 %v2465
      %v2754 = vunpack.c.l.b16 %v2466
      %v2755 = vunpack.c.l.b16 %v2467
      %v2756 = vunpack.c.l.b16 %v2468
      %v2757 = vunpack.c.l.b16 %v2469
      %v2758 = vunpack.c.l.b16 %v2470
      %v2759 = vunpack.c.l.b16 %v2471
      %v2760 = vunpack.c.l.b16 %v2472
      %v2761 = vunpack.c.l.b16 %v2473
      %v2762 = vunpack.c.l.b16 %v2474
      %v2763 = vunpack.c.l.b16 %v2475
      %v2764 = vunpack.c.l.b16 %v2476
      %v2765 = vunpack.c.l.b16 %v2477
      %v2766 = vunpack.c.l.b16 %v2478
      %v2767 = vunpack.c.l.b16 %v2479
      %v2768 = vunpack.c.l.b16 %v2480
      %v2769 = vunpack.c.l.b16 %v2481
      %v2770 = vunpack.c.l.b16 %v2482
      %v2771 = vunpack.c.l.b16 %v2483
      %v2772 = vunpack.c.l.b16 %v2484
      %v2773 = vunpack.c.l.b16 %v2485
      %v2774 = vunpack.c.l.b16 %v2486
      %v2775 = vunpack.c.l.b16 %v2487
      %v2776 = vunpack.c.l.b16 %v2488
      %v2777 = vunpack.c.l.b16 %v2489
      %v2778 = vunpack.c.l.b16 %v2490
      %v2779 = vunpack.c.l.b16 %v2491
      %v2780 = vunpack.c.l.b16 %v2492
      %v2781 = vunpack.c.l.b16 %v2493
      %v2782 = vunpack.c.l.b16 %v2494
      %v2783 = vunpack.c.l.b16 %v2495
      %v2784 = vunpack.c.l.b16 %v2496
      %v2785 = vunpack.c.l.b16 %v2497
      %v2786 = vunpack.c.l.b16 %v2498
      %v2787 = vunpack.c.l.b16 %v2499
      %v2788 = vunpack.c.l.b16 %v2500
      %v2789 = vunpack.c.l.b16 %v2501
      %v2790 = vunpack.c.l.b16 %v2502
      %v2791 = vunpack.c.l.b16 %v2503
      %v2792 = vunpack.c.l.b16 %v2504
      %v2793 = vunpack.c.l.b16 %v2505
      %v2794 = vunpack.c.l.b16 %v2506
      %v2795 = vunpack.c.l.b16 %v2507
      %v2796 = vunpack.c.l.b16 %v2508
      %v2797 = vunpack.c.l.b16 %v2509
      %v2798 = vunpack.c.l.b16 %v2510
      %v2799 = vunpack.c.l.b16 %v2511
      %v2800 = vunpack.c.l.b16 %v2512
      %v2801 = vunpack.c.l.b16 %v2513
      %v2802 = vunpack.c.l.b16 %v2514
      %v2803 = vunpack.c.l.b16 %v2515
      %v2804 = vunpack.c.l.b16 %v2516
      %v2805 = vunpack.c.l.b16 %v2517
      %v2806 = vunpack.c.l.b16 %v2518
      %v2807 = vunpack.c.l.b16 %v2519
      %v2808 = vunpack.c.l.b16 %v2520
      %v2809 = vunpack.c.l.b16 %v2521
      %v2810 = vunpack.c.l.b16 %v2522
      %v2811 = vunpack.c.l.b16 %v2523
      %v2812 = vunpack.c.l.b16 %v2524
      %v2813 = vpack.c.b16 %v2670, %v2669
      %v2814 = vpack.c.b16 %v2672, %v2671
      %v2815 = vpack.c.b16 %v2674, %v2673
      %v2816 = vpack.c.b16 %v2676, %v2675
      %v2817 = vpack.c.b16 %v2678, %v2677
      %v2818 = vpack.c.b16 %v2680, %v2679
      %v2819 = vpack.c.b16 %v2682, %v2681
      %v2820 = vpack.c.b16 %v2684, %v2683
      %v2821 = vpack.c.b16 %v2686, %v2685
      %v2822 = vpack.c.b16 %v2688, %v2687
      %v2823 = vpack.c.b16 %v2690, %v2689
      %v2824 = vpack.c.b16 %v2692, %v2691
      %v2825 = vpack.c.b16 %v2694, %v2693
      %v2826 = vpack.c.b16 %v2696, %v2695
      %v2827 = vpack.c.b16 %v2698, %v2697
      %v2828 = vpack.c.b16 %v2700, %v2699
      %v2829 = vpack.c.b16 %v2702, %v2701
      %v2830 = vpack.c.b16 %v2704, %v2703
      %v2831 = vpack.c.b16 %v2706, %v2705
      %v2832 = vpack.c.b16 %v2708, %v2707
      %v2833 = vpack.c.b16 %v2710, %v2709
      %v2834 = vpack.c.b16 %v2712, %v2711
      %v2835 = vpack.c.b16 %v2714, %v2713
      %v2836 = vpack.c.b16 %v2716, %v2715
      %v2837 = vpack.c.b16 %v2718, %v2717
      %v2838 = vpack.c.b16 %v2720, %v2719
      %v2839 = vpack.c.b16 %v2722, %v2721
      %v2840 = vpack.c.b16 %v2724, %v2723
      %v2841 = vpack.c.b16 %v2726, %v2725
      %v2842 = vpack.c.b16 %v2728, %v2727
      %v2843 = vpack.c.b16 %v2730, %v2729
      %v2844 = vpack.c.b16 %v2732, %v2731
      %v2845 = vpack.c.b16 %v2734, %v2733
      %v2846 = vpack.c.b16 %v2736, %v2735
      %v2847 = vpack.c.b16 %v2738, %v2737
      %v2848 = vpack.c.b16 %v2740, %v2739
      %v2849 = vpack.c.b16 %v2742, %v2741
      %v2850 = vpack.c.b16 %v2744, %v2743
      %v2851 = vpack.c.b16 %v2746, %v2745
      %v2852 = vpack.c.b16 %v2748, %v2747
      %v2853 = vpack.c.b16 %v2750, %v2749
      %v2854 = vpack.c.b16 %v2752, %v2751
      %v2855 = vpack.c.b16 %v2754, %v2753
      %v2856 = vpack.c.b16 %v2756, %v2755
      %v2857 = vpack.c.b16 %v2758, %v2757
      %v2858 = vpack.c.b16 %v2760, %v2759
      %v2859 = vpack.c.b16 %v2762, %v2761
      %v2860 = vpack.c.b16 %v2764, %v2763
      %v2861 = vpack.c.b16 %v2766, %v2765
      %v2862 = vpack.c.b16 %v2768, %v2767
      %v2863 = vpack.c.b16 %v2770, %v2769
      %v2864 = vpack.c.b16 %v2772, %v2771
      %v2865 = vpack.c.b16 %v2774, %v2773
      %v2866 = vpack.c.b16 %v2776, %v2775
      %v2867 = vpack.c.b16 %v2778, %v2777
      %v2868 = vpack.c.b16 %v2780, %v2779
      %v2869 = vpack.c.b16 %v2782, %v2781
      %v2870 = vpack.c.b16 %v2784, %v2783
      %v2871 = vpack.c.b16 %v2786, %v2785
      %v2872 = vpack.c.b16 %v2788, %v2787
      %v2873 = vpack.c.b16 %v2790, %v2789
      %v2874 = vpack.c.b16 %v2792, %v2791
      %v2875 = vpack.c.b16 %v2794, %v2793
      %v2876 = vpack.c.b16 %v2796, %v2795
      %v2877 = vpack.c.b16 %v2798, %v2797
      %v2878 = vpack.c.b16 %v2800, %v2799
      %v2879 = vpack.c.b16 %v2802, %v2801
      %v2880 = vpack.c.b16 %v2804, %v2803
      %v2881 = vpack.c.b16 %v2806, %v2805
      %v2882 = vpack.c.b16 %v2808, %v2807
      %v2883 = vpack.c.b16 %v2810, %v2809
      %v2884 = vpack.c.b16 %v2812, %v2811
      %2957 = vmatprep.subr.bf16.mxu0 0
      %2958 = vmatpush1.bf16.msra.mxu0 %v2813
      %2959 = vmatprep.subr.bf16.mxu0 0
      %2960 = vmatpush1.bf16.msra.mxu0 %v2814
      %2961 = vmatprep.subr.bf16.mxu0 0
      %2962 = vmatpush1.bf16.msra.mxu0 %v2815
      %2963 = vmatprep.subr.bf16.mxu0 0
      %2964 = vmatpush1.bf16.msra.mxu0 %v2816
      %2965 = vmatprep.subr.bf16.mxu0 0
      %2966 = vmatpush1.bf16.msra.mxu0 %v2817
      %2967 = vmatprep.subr.bf16.mxu0 0
      %2968 = vmatpush1.bf16.msra.mxu0 %v2818
      %2969 = vmatprep.subr.bf16.mxu0 0
      %2970 = vmatpush1.bf16.msra.mxu0 %v2819
      %2971 = vmatprep.subr.bf16.mxu0 0
      %2972 = vmatpush1.bf16.msra.mxu0 %v2820
      %2973 = vmatprep.subr.bf16.mxu0 0
      %2974 = vmatpush1.bf16.msra.mxu0 %v2821
      %2975 = vmatprep.subr.bf16.mxu0 0
      %2976 = vmatpush1.bf16.msra.mxu0 %v2822
      %2977 = vmatprep.subr.bf16.mxu0 0
      %2978 = vmatpush1.bf16.msra.mxu0 %v2823
      %2979 = vmatprep.subr.bf16.mxu0 0
      %2980 = vmatpush1.bf16.msra.mxu0 %v2824
      %2981 = vmatprep.subr.bf16.mxu0 0
      %2982 = vmatpush1.bf16.msra.mxu0 %v2825
      %2983 = vmatprep.subr.bf16.mxu0 0
      %2984 = vmatpush1.bf16.msra.mxu0 %v2826
      %2985 = vmatprep.subr.bf16.mxu0 0
      %2986 = vmatpush1.bf16.msra.mxu0 %v2827
      %2987 = vmatprep.subr.bf16.mxu0 0
      %2988 = vmatpush1.bf16.msra.mxu0 %v2828
      %2989 = vmatprep.mubr.bf16.mxu0 %v2363
      %2990 = vmatmul.mubr.bf16.gmra.mrb[0].mxu0 %v2362
      %v2991 = vpop.f32.mrb[0].mxu0
      %v2992 = vadd.f32 0.0, %v2991
      %v2993 = vpop.f32.mrb[0].mxu0
      %v2994 = vpop.f32.mrb[0].mxu0
      %v2995 = vadd.f32 0.0, %v2994
      %v2996 = vpop.f32.mrb[0].mxu0
      %2997 = vmatprep.mubr.bf16.mxu0 %v2372
      %2998 = vmatmul.mubr.bf16.gmra.mrb[0].mxu0 %v2371
      %v2999 = vpop.f32.mrb[0].mxu0
      %v3000 = vadd.f32 0.0, %v2999
      %v3001 = vpop.f32.mrb[0].mxu0
      %v3002 = vpop.f32.mrb[0].mxu0
      %v3003 = vpop.f32.mrb[0].mxu0
      %3004 = vdwg.mxu0
      %3005 = vmatprep.subr.bf16.mxu0 0
      %3006 = vmatpush1.bf16.msra.mxu0 %v2829
      %3007 = vmatprep.subr.bf16.mxu0 0
      %3008 = vmatpush1.bf16.msra.mxu0 %v2830
      %3009 = vmatprep.subr.bf16.mxu0 0
      %3010 = vmatpush1.bf16.msra.mxu0 %v2831
      %3011 = vmatprep.subr.bf16.mxu0 0
      %3012 = vmatpush1.bf16.msra.mxu0 %v2832
      %3013 = vmatprep.subr.bf16.mxu0 0
      %3014 = vmatpush1.bf16.msra.mxu0 %v2833
      %3015 = vmatprep.subr.bf16.mxu0 0
      %3016 = vmatpush1.bf16.msra.mxu0 %v2834
      %3017 = vmatprep.subr.bf16.mxu0 0
      %3018 = vmatpush1.bf16.msra.mxu0 %v2835
      %3019 = vmatprep.subr.bf16.mxu0 0
      %3020 = vmatpush1.bf16.msra.mxu0 %v2836
      %3021 = vmatprep.subr.bf16.mxu0 0
      %3022 = vmatpush1.bf16.msra.mxu0 %v2837
      %3023 = vmatprep.subr.bf16.mxu0 0
      %3024 = vmatpush1.bf16.msra.mxu0 %v2838
      %3025 = vmatprep.subr.bf16.mxu0 0
      %3026 = vmatpush1.bf16.msra.mxu0 %v2839
      %3027 = vmatprep.subr.bf16.mxu0 0
      %3028 = vmatpush1.bf16.msra.mxu0 %v2840
      %3029 = vmatprep.subr.bf16.mxu0 0
      %3030 = vmatpush1.bf16.msra.mxu0 %v2841
      %3031 = vmatprep.subr.bf16.mxu0 0
      %3032 = vmatpush1.bf16.msra.mxu0 %v2842
      %3033 = vmatprep.subr.bf16.mxu0 0
      %3034 = vmatpush1.bf16.msra.mxu0 %v2843
      %3035 = vmatprep.subr.bf16.mxu0 0
      %3036 = vmatpush1.bf16.msra.mxu0 %v2844
      %3037 = vmatprep.mubr.bf16.mxu0 %v2365
      %3038 = vmatmul.mubr.bf16.gmra.mrb[0].mxu0 %v2364
      %v3039 = vpop.f32.mrb[0].mxu0
      %v3040 = vadd.f32 %v2992, %v3039
      %v3041 = vpop.f32.mrb[0].mxu0
      %v3042 = vpop.f32.mrb[0].mxu0
      %v3043 = vadd.f32 %v2995, %v3042
      %v3044 = vpop.f32.mrb[0].mxu0
      %3045 = vmatprep.mubr.bf16.mxu0 %v2374
      %3046 = vmatmul.mubr.bf16.gmra.mrb[0].mxu0 %v2373
      %v3047 = vpop.f32.mrb[0].mxu0
      %v3048 = vadd.f32 %v3000, %v3047
      %v3049 = vpop.f32.mrb[0].mxu0
      %v3050 = vpop.f32.mrb[0].mxu0
      %v3051 = vpop.f32.mrb[0].mxu0
      %3052 = vdwg.mxu0
      %3053 = vmatprep.subr.bf16.mxu0 0
      %3054 = vmatpush1.bf16.msra.mxu0 %v2845
      %3055 = vmatprep.subr.bf16.mxu0 0
      %3056 = vmatpush1.bf16.msra.mxu0 %v2846
      %3057 = vmatprep.subr.bf16.mxu0 0
      %3058 = vmatpush1.bf16.msra.mxu0 %v2847
      %3059 = vmatprep.subr.bf16.mxu0 0
      %3060 = vmatpush1.bf16.msra.mxu0 %v2848
      %3061 = vmatprep.subr.bf16.mxu0 0
      %3062 = vmatpush1.bf16.msra.mxu0 %v2849
      %3063 = vmatprep.subr.bf16.mxu0 0
      %3064 = vmatpush1.bf16.msra.mxu0 %v2850
      %3065 = vmatprep.subr.bf16.mxu0 0
      %3066 = vmatpush1.bf16.msra.mxu0 %v2851
      %3067 = vmatprep.subr.bf16.mxu0 0
      %3068 = vmatpush1.bf16.msra.mxu0 %v2852
      %3069 = vmatprep.subr.bf16.mxu0 0
      %3070 = vmatpush1.bf16.msra.mxu0 %v2853
      %3071 = vmatprep.subr.bf16.mxu0 0
      %3072 = vmatpush1.bf16.msra.mxu0 %v2854
      %3073 = vmatprep.subr.bf16.mxu0 0
      %3074 = vmatpush1.bf16.msra.mxu0 %v2855
      %3075 = vmatprep.subr.bf16.mxu0 0
      %3076 = vmatpush1.bf16.msra.mxu0 %v2856
      %3077 = vmatprep.subr.bf16.mxu0 0
      %3078 = vmatpush1.bf16.msra.mxu0 %v2857
      %3079 = vmatprep.subr.bf16.mxu0 0
      %3080 = vmatpush1.bf16.msra.mxu0 %v2858
      %3081 = vmatprep.subr.bf16.mxu0 0
      %3082 = vmatpush1.bf16.msra.mxu0 %v2859
      %3083 = vmatprep.subr.bf16.mxu0 0
      %3084 = vmatpush1.bf16.msra.mxu0 %v2860
      %3085 = vmatprep.mubr.bf16.mxu0 %v2367
      %3086 = vmatmul.mubr.bf16.gmra.mrb[0].mxu0 %v2366
      %v3087 = vpop.f32.mrb[0].mxu0
      %v3088 = vadd.f32 %v3040, %v3087
      %v3089 = vpop.f32.mrb[0].mxu0
      %v3090 = vpop.f32.mrb[0].mxu0
      %v3091 = vadd.f32 %v3043, %v3090
      %v3092 = vpop.f32.mrb[0].mxu0
      %3093 = vmatprep.mubr.bf16.mxu0 %v2376
      %3094 = vmatmul.mubr.bf16.gmra.mrb[0].mxu0 %v2375
      %v3095 = vpop.f32.mrb[0].mxu0
      %v3096 = vadd.f32 %v3048, %v3095
      %v3097 = vpop.f32.mrb[0].mxu0
      %v3098 = vpop.f32.mrb[0].mxu0
      %v3099 = vpop.f32.mrb[0].mxu0
      %3100 = vdwg.mxu0
      %3101 = vmatprep.subr.bf16.mxu0 0
      %3102 = vmatpush1.bf16.msra.mxu0 %v2861
      %3103 = vmatprep.subr.bf16.mxu0 0
      %3104 = vmatpush1.bf16.msra.mxu0 %v2862
      %3105 = vmatprep.subr.bf16.mxu0 0
      %3106 = vmatpush1.bf16.msra.mxu0 %v2863
      %3107 = vmatprep.subr.bf16.mxu0 0
      %3108 = vmatpush1.bf16.msra.mxu0 %v2864
      %3109 = vmatprep.subr.bf16.mxu0 0
      %3110 = vmatpush1.bf16.msra.mxu0 %v2865
      %3111 = vmatprep.subr.bf16.mxu0 0
      %3112 = vmatpush1.bf16.msra.mxu0 %v2866
      %3113 = vmatprep.subr.bf16.mxu0 0
      %3114 = vmatpush1.bf16.msra.mxu0 %v2867
      %3115 = vmatprep.subr.bf16.mxu0 0
      %3116 = vmatpush1.bf16.msra.mxu0 %v2868
      %3117 = vmatprep.subr.bf16.mxu0 0
      %3118 = vmatpush1.bf16.msra.mxu0 %v2869
      %3119 = vmatprep.subr.bf16.mxu0 0
      %3120 = vmatpush1.bf16.msra.mxu0 %v2870
      %3121 = vmatprep.subr.bf16.mxu0 0
      %3122 = vmatpush1.bf16.msra.mxu0 %v2871
      %3123 = vmatprep.subr.bf16.mxu0 0
      %3124 = vmatpush1.bf16.msra.mxu0 %v2872
      %3125 = vmatprep.subr.bf16.mxu0 0
      %3126 = vmatpush1.bf16.msra.mxu0 %v2873
      %3127 = vmatprep.subr.bf16.mxu0 0
      %3128 = vmatpush1.bf16.msra.mxu0 %v2874
      %3129 = vmatprep.subr.bf16.mxu0 0
      %3130 = vmatpush1.bf16.msra.mxu0 %v2875
      %3131 = vmatprep.subr.bf16.mxu0 0
      %3132 = vmatpush1.bf16.msra.mxu0 %v2876
      %3133 = vmatprep.mubr.bf16.mxu0 %v2369
      %3134 = vmatmul.mubr.bf16.gmra.mrb[0].mxu0 %v2368
      %v3135 = vpop.f32.mrb[0].mxu0
      %v3136 = vadd.f32 %v3088, %v3135
      %v3137 = vpop.f32.mrb[0].mxu0
      %v3138 = vpop.f32.mrb[0].mxu0
      %v3139 = vadd.f32 %v3091, %v3138
      %v3140 = vpop.f32.mrb[0].mxu0
      %3141 = vmatprep.mubr.bf16.mxu0 %v2378
      %3142 = vmatmul.mubr.bf16.gmra.mrb[0].mxu0 %v2377
      %v3143 = vpop.f32.mrb[0].mxu0
      %v3144 = vadd.f32 %v3096, %v3143
      %v3145 = vpop.f32.mrb[0].mxu0
      %v3146 = vpop.f32.mrb[0].mxu0
      %v3147 = vpop.f32.mrb[0].mxu0
      %3148 = vdwg.mxu0
      %3149 = vmatprep.subr.bf16.mxu0 0
      %3150 = vmatpush1.bf16.msra.mxu0 %v2877
      %3151 = vmatprep.subr.bf16.mxu0 0
      %3152 = vmatpush1.bf16.msra.mxu0 %v2878
      %3153 = vmatprep.subr.bf16.mxu0 0
      %3154 = vmatpush1.bf16.msra.mxu0 %v2879
      %3155 = vmatprep.subr.bf16.mxu0 0
      %3156 = vmatpush1.bf16.msra.mxu0 %v2880
      %3157 = vmatprep.subr.bf16.mxu0 0
      %3158 = vmatpush1.bf16.msra.mxu0 %v2881
      %3159 = vmatprep.subr.bf16.mxu0 0
      %3160 = vmatpush1.bf16.msra.mxu0 %v2882
      %3161 = vmatprep.subr.bf16.mxu0 0
      %3162 = vmatpush1.bf16.msra.mxu0 %v2883
      %3163 = vmatprep.subr.bf16.mxu0 0
      %3164 = vmatpush1.bf16.msra.mxu0 %v2884
      %3165 = vmatprep.subr.bf16.mxu0 0
      %3166 = vmatpush1.bf16.msra.mxu0 0
      %3167 = vmatprep.subr.bf16.mxu0 0
      %3168 = vmatpush1.bf16.msra.mxu0 0
      %3169 = vmatprep.subr.bf16.mxu0 0
      %3170 = vmatpush1.bf16.msra.mxu0 0
      %3171 = vmatprep.subr.bf16.mxu0 0
      %3172 = vmatpush1.bf16.msra.mxu0 0
      %3173 = vmatprep.subr.bf16.mxu0 0
      %3174 = vmatpush1.bf16.msra.mxu0 0
      %3175 = vmatprep.subr.bf16.mxu0 0
      %3176 = vmatpush1.bf16.msra.mxu0 0
      %3177 = vmatprep.subr.bf16.mxu0 0
      %3178 = vmatpush1.bf16.msra.mxu0 0
      %3179 = vmatprep.subr.bf16.mxu0 0
      %3180 = vmatpush1.bf16.msra.mxu0 0
      %3181 = vmatprep.mubr.bf16.mxu0 0
      %3182 = vmatmul.mubr.bf16.gmra.mrb[0].mxu0 %v2370
      %v3183 = vpop.f32.mrb[0].mxu0
      %v3184 = vadd.f32 %v3136, %v3183
      %v3185 = vpop.f32.mrb[0].mxu0
      %v3186 = vpop.f32.mrb[0].mxu0
      %v3187 = vadd.f32 %v3139, %v3186
      %v3188 = vpop.f32.mrb[0].mxu0
      %3189 = vmatprep.mubr.bf16.mxu0 0
      %3190 = vmatmul.mubr.bf16.gmra.mrb[0].mxu0 %v2379
      %v3191 = vpop.f32.mrb[0].mxu0
      %v3192 = vadd.f32 %v3144, %v3191
      %v3193 = vpop.f32.mrb[0].mxu0
      %v3194 = vpop.f32.mrb[0].mxu0
      %v3195 = vpop.f32.mrb[0].mxu0
      %3196 = vdwg.mxu0
      %v3197 = vmax.f32 %v3184, 0.0
      %v3198 = vmax.f32 %v3187, 0.0
      %v3199 = vmax.f32 %v3192, 0.0
      %v3200 = vpack.c.bf16 %v3198, %v3197
      %v3201 = vpack.c.bf16 %v3199, %v3199
      %s3202 = scalar_lea.vmem %s4, 64
      %v3203 = vld [vmem:[%s3202] sm:$0xf]
      %v3204 = vld [vmem:[%s3202 + $0x4] sm:$0xf]
      %v3205 = vld [vmem:[%s3202 + $0x8] sm:$0xf]
      %v3206 = vld [vmem:[%s3202 + $0xc] sm:$0xf]
      %v3207 = vld [vmem:[%s3202 + $0x10] sm:$0xf]
      %v3208 = vld [vmem:[%s3202 + $0x14] sm:$0xf]
      %v3209 = vld [vmem:[%s3202 + $0x18] sm:$0xf]
      %v3210 = vld [vmem:[%s3202 + $0x1c] sm:$0xf]
      %v3211 = vld [vmem:[%s3202 + $0x20] sm:$0xf]
      %v3212 = vld [vmem:[%s3202 + $0x24] sm:$0xf]
      %v3213 = vld [vmem:[%s3202 + $0x28] sm:$0xf]
      %v3214 = vld [vmem:[%s3202 + $0x2c] sm:$0xf]
      %v3215 = vld [vmem:[%s3202 + $0x30] sm:$0xf]
      %v3216 = vld [vmem:[%s3202 + $0x34] sm:$0xf]
      %v3217 = vld [vmem:[%s3202 + $0x38] sm:$0xf]
      %v3218 = vld [vmem:[%s3202 + $0x3c] sm:$0xf]
      %v3235 = vunpack.c.l.b16 %v3203
      %v3236 = vunpack.c.l.b16 %v3204
      %v3237 = vunpack.c.l.b16 %v3205
      %v3238 = vunpack.c.l.b16 %v3206
      %v3239 = vunpack.c.l.b16 %v3207
      %v3240 = vunpack.c.l.b16 %v3208
      %v3241 = vunpack.c.l.b16 %v3209
      %v3242 = vunpack.c.l.b16 %v3210
      %v3243 = vunpack.c.l.b16 %v3211
      %v3244 = vunpack.c.l.b16 %v3212
      %v3245 = vunpack.c.l.b16 %v3213
      %v3246 = vunpack.c.l.b16 %v3214
      %v3247 = vunpack.c.l.b16 %v3215
      %v3248 = vunpack.c.l.b16 %v3216
      %v3249 = vunpack.c.l.b16 %v3217
      %v3250 = vunpack.c.l.b16 %v3218
      %v3251 = vpack.c.b16 %v3236, %v3235
      %v3252 = vpack.c.b16 %v3238, %v3237
      %v3253 = vpack.c.b16 %v3240, %v3239
      %v3254 = vpack.c.b16 %v3242, %v3241
      %v3255 = vpack.c.b16 %v3244, %v3243
      %v3256 = vpack.c.b16 %v3246, %v3245
      %v3257 = vpack.c.b16 %v3248, %v3247
      %v3258 = vpack.c.b16 %v3250, %v3249
      %3267 = vmatprep.subr.bf16.mxu0 0
      %3268 = vmatpush1.bf16.msra.mxu0 %v3251
      %3269 = vmatprep.subr.bf16.mxu0 0
      %3270 = vmatpush1.bf16.msra.mxu0 %v3252
      %3271 = vmatprep.subr.bf16.mxu0 0
      %3272 = vmatpush1.bf16.msra.mxu0 %v3253
      %3273 = vmatprep.subr.bf16.mxu0 0
      %3274 = vmatpush1.bf16.msra.mxu0 %v3254
      %3275 = vmatprep.subr.bf16.mxu0 0
      %3276 = vmatpush1.bf16.msra.mxu0 %v3255
      %3277 = vmatprep.subr.bf16.mxu0 0
      %3278 = vmatpush1.bf16.msra.mxu0 %v3256
      %3279 = vmatprep.subr.bf16.mxu0 0
      %3280 = vmatpush1.bf16.msra.mxu0 %v3257
      %3281 = vmatprep.subr.bf16.mxu0 0
      %3282 = vmatpush1.bf16.msra.mxu0 %v3258
      %3283 = vmatprep.subr.bf16.mxu0 0
      %3284 = vmatpush1.bf16.msra.mxu0 0
      %3285 = vmatprep.subr.bf16.mxu0 0
      %3286 = vmatpush1.bf16.msra.mxu0 0
      %3287 = vmatprep.subr.bf16.mxu0 0
      %3288 = vmatpush1.bf16.msra.mxu0 0
      %3289 = vmatprep.subr.bf16.mxu0 0
      %3290 = vmatpush1.bf16.msra.mxu0 0
      %3291 = vmatprep.subr.bf16.mxu0 0
      %3292 = vmatpush1.bf16.msra.mxu0 0
      %3293 = vmatprep.subr.bf16.mxu0 0
      %3294 = vmatpush1.bf16.msra.mxu0 0
      %3295 = vmatprep.subr.bf16.mxu0 0
      %3296 = vmatpush1.bf16.msra.mxu0 0
      %3297 = vmatprep.subr.bf16.mxu0 0
      %3298 = vmatpush1.bf16.msra.mxu0 0
      %3299 = vmatprep.mubr.bf16.mxu0 0
      %3300 = vmatmul.mubr.bf16.gmra.mrb[0].mxu0 %v3200
      %v3301 = vpop.f32.mrb[0].mxu0
      %v3302 = vadd.f32 0.0, %v3301
      %v3303 = vpop.f32.mrb[0].mxu0
      %v3304 = vpop.f32.mrb[0].mxu0
      %v3305 = vadd.f32 0.0, %v3304
      %v3306 = vpop.f32.mrb[0].mxu0
      %3307 = vmatprep.mubr.bf16.mxu0 0
      %3308 = vmatmul.mubr.bf16.gmra.mrb[0].mxu0 %v3201
      %v3309 = vpop.f32.mrb[0].mxu0
      %v3310 = vadd.f32 0.0, %v3309
      %v3311 = vpop.f32.mrb[0].mxu0
      %v3312 = vpop.f32.mrb[0].mxu0
      %v3313 = vpop.f32.mrb[0].mxu0
      %3314 = vdwg.mxu0
      %v3318 = vrot.slane %v3302, 1
      %v3319 = vrot.slane %v3305, 1
      %v3320 = vsel %vm290, %v3318, %v3319
      %v3321 = vrot.slane %v3310, 1
      %v3322 = vsel %vm290, %v3319, %v3321
      %v3327 = vadd.f32 %v2292, %v3318
      %v3328 = vadd.f32 %v2285, %v3320
      %v3329 = vadd.f32 %v2287, %v3322
      %v3330 = vadd.f32 %v2293, %v3321
      %v3335 = vrot.slane %v3327, 7
      %v3336 = vrot.slane %v3328, 7
      %v3337 = vsel %vm323, %v3335, %v3336
      %v3338 = vrot.slane %v3329, 7
      %v3339 = vsel %vm323, %v3336, %v3338
      %v3340 = vrot.slane %v3330, 7
      %v3341 = vsel %vm323, %v3338, %v3340
      %v3345 = vsel %vm1204, %v3337, 0.0
      %v3346 = vsel %vm1205, %v3339, 0.0
      %v3347 = vsel %vm1206, %v3341, 0.0
      %v3351 = vrot.slane %v3345, 1
      %v3352 = vrot.slane %v3346, 1
      %v3353 = vsel %vm290, %v3351, %v3352
      %v3354 = vrot.slane %v3347, 1
      %v3355 = vsel %vm290, %v3352, %v3354
      %v3360 = vsel %vm290, 0.0, %v3351
      %v3361 = vsel %vm290, %v3354, 0.0
      %v3362 = vmax.f32 %v3360, 0.0
      %v3363 = vmax.f32 %v3353, 0.0
      %v3364 = vmax.f32 %v3355, 0.0
      %v3365 = vmax.f32 %v3361, 0.0
      %3366 = vst [vmem:[%s224 - $0x7] sm:$0x80] %v3362
      %3367 = vst [vmem:[%s224 + $0x1] sm:$0xff] %v3363
      %3368 = vst [vmem:[%s224 + $0x9] sm:$0xff] %v3364
      %3369 = vst [vmem:[%s224 + $0x11] sm:$0x7f] %v3365
      %p3370 = scmp.lt.s32.totalorder %s16, 1
      %s3371 = scalar_select %p3370, %s16, 1
      %s3372 = smul.addr %s3371, 3
      %s3373 = smul.addr %s3372, 8
      %s3374 = scalar_lea.vmem %s5, %s3373
      // Predicated region
      $region41: #{encoder_forward.5} parent=39 // pred_check
        %p3375 = pneg %p144
      $region42: #{encoder_forward.5} parent=39 // pred_check_branch
        %3377 = sbr.rel (%p3375) target = $region44
      $region43: #{encoder_forward.5} parent=39 // pred_region
        _
      $region44: #{encoder_forward.5} parent=39 // pred_fallthru
        _
    $region40: #{encoder_forward.5} parent=5 // pred_fallthru
      _
    %p3378 = scmp.le.s32.totalorder 2, %s11
    // Predicated region
    $region45: #{encoder_forward.5} parent=5 // pred_check
      %p3379 = pneg %p3378
    $region46: #{encoder_forward.5} parent=5 // pred_check_branch
      %3381 = sbr.rel (%p3379) target = $region48
    $region47: #{encoder_forward.5} parent=5 // pred_region
      %s3382 = ssub.s32 %s11, 2
      // Predicated region
      $region49: #{encoder_forward.5} parent=47 // pred_check
        %p3383 = pneg %p150
      $region50: #{encoder_forward.5} parent=47 // pred_check_branch
        %3385 = sbr.rel (%p3383) target = $region52
      $region51: #{encoder_forward.5} parent=47 // pred_region
        %p3386 = scmp.lt.s32.totalorder %s17, 1
        %s3387 = scalar_select %p3386, %s17, 1
        %s3388 = smul.addr %s3387, 3
        %s3389 = smul.addr %s3388, 8
        %s3390 = scalar_lea.vmem %s5, %s3389
      $region52: #{encoder_forward.5} parent=47 // pred_fallthru
        _
    $region48: #{encoder_forward.5} parent=5 // pred_fallthru
      _
  $region6: #{encoder_forward.5} parent=0 // loop_footer
    %s15 = sadd.s32 1, %s11
  $region7: #{encoder_forward.5} parent=0 // loop_footer_branch
    %10 = sbr.rel target = $region3
  $region8: #{encoder_forward.5} parent=0 // loop_exit
    _

</llo_original>
